<compile_context>
chip_gen: v5e
topology: v5e:2x2
jax: 0.10.0
libtpu: 0.0.40
codegen_flags: <defaults>
</compile_context>

<pallas_src>
import numpy as np
import jax
import jax.numpy as jnp
from jax.experimental import pallas as pl
from jax.experimental.pallas import tpu as pltpu

IMG = 224
PATCH = 16
GRID = IMG // PATCH            # 14 patches per side (hard-coded 14 in block_to_patch)
N_PATCH = GRID * GRID          # 196
P_DIM = PATCH * PATCH * 3      # 768
HIDDEN = 256                   # synthetic inpainter hidden width


# ----------------------------- glue: (un)patchify ---------------------------

def _patchify_tokens(x):
    # (B, 3, H, W) -> (B*196, 768), MAE pixel order (h, w, p, q, c).
    b = x.shape[0]
    x = x.reshape(b, 3, GRID, PATCH, GRID, PATCH)
    x = jnp.transpose(x, (0, 2, 4, 3, 5, 1))
    return x.reshape(b * N_PATCH, P_DIM)


def _unpatchify_tokens(p, b):
    # inverse of _patchify_tokens -> (B, 3, H, W)
    x = p.reshape(b, GRID, GRID, PATCH, PATCH, 3)
    x = jnp.transpose(x, (0, 5, 1, 3, 2, 4))
    return x.reshape(b, 3, IMG, IMG)


# ------------------------------ Pallas kernel -------------------------------

def _residual_kernel(x_ref, we_ref, wd_ref, o_ref):
    # x_ref: (TILE_M, 768) f32 token rows; we_ref/wd_ref: bf16 weights.
    x = x_ref[...]                                          # f32
    h = jnp.dot(x.astype(jnp.bfloat16), we_ref[...],
                preferred_element_type=jnp.float32)         # MXU: bf16 in, f32 acc
    h = jnp.tanh(h)                                         # EUP, f32
    recon = jnp.dot(h.astype(jnp.bfloat16), wd_ref[...],
                    preferred_element_type=jnp.float32)     # MXU: bf16 in, f32 acc
    o_ref[...] = recon - x                                  # residual in f32 vs original x


def _choose_tile_m(m_total):
    # 256-row tiles keep every v6e/v7x MXU pass full; if that would leave only
    # one grid step, split into two 8-aligned tiles so both v7x TensorCores
    # get a "parallel" grid step.
    if m_total > 256:
        return 256
    half = -(-m_total // 2)              # ceil(m/2)
    return max(8, -(-half // 8) * 8)     # round up to multiple of 8


# ------------------------------- module -------------------------------------

class ResidualGeneratorPallas:
    def __init__(self, key):
        k_e, k_d = jax.random.split(key)
        # Deterministic synthetic "inpainter" weights (no checkpoint load).
        # Stored as bf16: they are MXU operands only — accumulation stays f32.
        self.w_embed = (jax.random.normal(k_e, (P_DIM, HIDDEN), jnp.float32)
                        * 0.02).astype(jnp.bfloat16)
        self.w_dec = (jax.random.normal(k_d, (HIDDEN, P_DIM), jnp.float32)
                      * 0.02).astype(jnp.bfloat16)
        self.magic = jnp.array([0, 1, 2, 14, 15, 16, 28, 29, 30], dtype=jnp.int32)
        # Same as torch: full_patches = block_to_patch(arange(16)[None, :])
        self.full_patches = self._block_to_patch_jnp(
            jnp.arange(16, dtype=jnp.int32)[None, :])        # (1, 144)

    # --- block_to_patch ------------------------------------------------------
    # 144 int32 of index math per image: a Pallas launch costs more than the
    # arithmetic, so this is plain jnp (per perf review).
    def _block_to_patch_jnp(self, idx):
        idx = idx.astype(jnp.int32)
        b = idx.shape[0]
        w = 3 * (idx // 4) + 1
        h = 3 * (idx % 4) + 1
        base = w * 14 + h                                    # (B, blk)
        out = base[:, :, None] + self.magic[None, None, :]   # (B, blk, 9)
        return out.reshape(b, -1)

    def block_to_patch(self, idx, test=False):
        if test:
            bs = idx.shape[0]
            return jnp.tile(self.full_patches, (bs, 1))
        return self._block_to_patch_jnp(idx)

    # --- synthetic MAE residual ----------------------------------------------
    def _residual(self, rgb_01):
        b = rgb_01.shape[0]
        tokens = _patchify_tokens(rgb_01.astype(jnp.float32))   # (B*196, 768)
        m_total = b * N_PATCH
        tile_m = _choose_tile_m(m_total)
        grid = (pl.cdiv(m_total, tile_m),)   # partial last tile is masked by Pallas
        out = pl.pallas_call(
            _residual_kernel,
            out_shape=jax.ShapeDtypeStruct((m_total, P_DIM), jnp.float32),
            grid=grid,
            in_specs=[
                pl.BlockSpec((tile_m, P_DIM), lambda i: (i, 0)),
                pl.BlockSpec((P_DIM, HIDDEN), lambda i: (0, 0)),
                pl.BlockSpec((HIDDEN, P_DIM), lambda i: (0, 0)),
            ],
            out_specs=pl.BlockSpec((tile_m, P_DIM), lambda i: (i, 0)),
            compiler_params=pltpu.CompilerParams(
                dimension_semantics=("parallel",),
                # Let XLA fuse the patchify transpose into the kernel input
                # instead of materializing a separate HBM buffer.
                allow_input_fusion=[True, False, False],
            ),
        )(tokens, self.w_embed, self.w_dec)
        return _unpatchify_tokens(out, b)

    # --- forward --------------------------------------------------------------
    def forward(self, rgb_01, test=False):
        bsz = rgb_01.shape[0]
        if test:
            block_id = None
        else:
            # Host-side random block selection, same as the torch module.
            blocks = [i for i in range(16) if np.random.rand(1) < 0.25]
            block_id = None if len(blocks) == 0 else jnp.tile(
                jnp.array(blocks, dtype=jnp.int32)[None, :], (bsz, 1))
        if block_id is None:
            # TODO(synk): real patch_by_patch_DIFF chooses block_id internally when
            # None; fall back to all 16 blocks deterministically here.
            block_id = jnp.tile(jnp.arange(16, dtype=jnp.int32)[None, :], (bsz, 1))

        res = self._residual(rgb_01)               # stands in for patch_by_patch_DIFF
        patch_id = self.block_to_patch(block_id, test=test)
        return res, patch_id


# --------------------------------- main --------------------------------------

if __name__ == "__main__":
    np.random.seed(0)
    key = jax.random.PRNGKey(0)
    k_param, k_img = jax.random.split(key)

    model = ResidualGeneratorPallas(k_param)
    # batch=2, NCHW; 224x224 is required by the module's 14x14 patch-grid math.
    rgb_01 = jax.random.uniform(k_img, (2, 3, IMG, IMG), dtype=jnp.float32)

    res, patch_id = model.forward(rgb_01, test=False)
    jax.block_until_ready(res)
    jax.block_until_ready(patch_id)

    # shape / dtype checks
    assert res.shape == rgb_01.shape and res.dtype == jnp.float32
    assert patch_id.shape[0] == rgb_01.shape[0] and patch_id.shape[1] % 9 == 0

    # pure-JAX reference for the synthetic inpainter residual (same bf16 casts)
    tok = _patchify_tokens(rgb_01)
    h_ref = jnp.tanh(jnp.dot(tok.astype(jnp.bfloat16), model.w_embed,
                             preferred_element_type=jnp.float32))
    rec_ref = jnp.dot(h_ref.astype(jnp.bfloat16), model.w_dec,
                      preferred_element_type=jnp.float32)
    res_ref = _unpatchify_tokens(rec_ref - tok, rgb_01.shape[0])
    np.testing.assert_allclose(np.asarray(res), np.asarray(res_ref),
                               atol=5e-2, rtol=0)

    # block_to_patch reference: block 0 -> base 15 + magic
    expected_first = np.array([15, 16, 17, 29, 30, 31, 43, 44, 45], dtype=np.int32)
    np.testing.assert_array_equal(np.asarray(model.full_patches[0, :9]), expected_first)

    print("KERNEL_OK")
</pallas_src>

<mosaic_0001>
module attributes {stable_mosaic.version = 11 : i64} {
  func.func @_residual_kernel(%arg0: i32, %arg1: memref<256x768xf32, #tpu.memory_space<vmem>>, %arg2: memref<768x256xbf16, #tpu.memory_space<vmem>>, %arg3: memref<256x768xbf16, #tpu.memory_space<vmem>>, %arg4: memref<256x768xf32, #tpu.memory_space<vmem>>) attributes {dimension_semantics = [#tpu.dimension_semantics<parallel>], iteration_bounds = array<i64: 2>, scalar_prefetch = 0 : i64, scratch_operands = 0 : i64, tpu.core_type = #tpu.core_type<tc>, window_params = [{transform_indices = @transform_0, window_bounds = array<i64: 256, 768>}, {pipeline_mode = #tpu.pipeline_mode<synchronous>, transform_indices = @transform_1, window_bounds = array<i64: 768, 256>}, {pipeline_mode = #tpu.pipeline_mode<synchronous>, transform_indices = @transform_2, window_bounds = array<i64: 256, 768>}, {transform_indices = @transform_3, window_bounds = array<i64: 256, 768>}]} {
    %c0 = arith.constant 0 : index
    %c0_0 = arith.constant 0 : index
    %0 = vector.load %arg1[%c0, %c0_0] : memref<256x768xf32, #tpu.memory_space<vmem>>, vector<256x768xf32>
    %1 = arith.truncf %0 : vector<256x768xf32> to vector<256x768xbf16>
    %c0_1 = arith.constant 0 : index
    %c0_2 = arith.constant 0 : index
    %2 = vector.load %arg2[%c0_1, %c0_2] : memref<768x256xbf16, #tpu.memory_space<vmem>>, vector<768x256xbf16>
    %cst = arith.constant dense<0.000000e+00> : vector<256x256xf32>
    %3 = tpu.matmul %1, %2, %cst {dimension_numbers = #tpu.dot_dimension_numbers<[1], [0], [0], [1], [0, 0, 1, 1], [], []>} : vector<256x768xbf16>, vector<768x256xbf16>, vector<256x256xf32> -> vector<256x256xf32>
    %4 = math.tanh %3 : vector<256x256xf32>
    %5 = arith.truncf %4 : vector<256x256xf32> to vector<256x256xbf16>
    %c0_3 = arith.constant 0 : index
    %c0_4 = arith.constant 0 : index
    %6 = vector.load %arg3[%c0_3, %c0_4] : memref<256x768xbf16, #tpu.memory_space<vmem>>, vector<256x768xbf16>
    %cst_5 = arith.constant dense<0.000000e+00> : vector<256x768xf32>
    %7 = tpu.matmul %5, %6, %cst_5 {dimension_numbers = #tpu.dot_dimension_numbers<[1], [0], [0], [1], [0, 0, 1, 1], [], []>} : vector<256x256xbf16>, vector<256x768xbf16>, vector<256x768xf32> -> vector<256x768xf32>
    %8 = arith.subf %7, %0 : vector<256x768xf32>
    %c0_6 = arith.constant 0 : index
    %c0_7 = arith.constant 0 : index
    %9 = vector.load %arg4[%c0_6, %c0_7] : memref<256x768xf32, #tpu.memory_space<vmem>>, vector<256x768xf32>
    tpu.vector_store %arg4[%c0_6, %c0_7], %8 {strides = array<i32>} : memref<256x768xf32, #tpu.memory_space<vmem>>, vector<256x768xf32>,
    return
  }
  func.func @transform_0(%arg0: i32) -> (i32, i32) {
    %c0_i32 = arith.constant 0 : i32
    %c0_i32_0 = arith.constant 0 : i32
    return %arg0, %c0_i32 : i32, i32
  }
  func.func @transform_1(%arg0: i32) -> (i32, i32) {
    %c0_i32 = arith.constant 0 : i32
    %c0_i32_0 = arith.constant 0 : i32
    %c0_i32_1 = arith.constant 0 : i32
    return %c0_i32, %c0_i32_0 : i32, i32
  }
  func.func @transform_2(%arg0: i32) -> (i32, i32) {
    %c0_i32 = arith.constant 0 : i32
    %c0_i32_0 = arith.constant 0 : i32
    %c0_i32_1 = arith.constant 0 : i32
    return %c0_i32, %c0_i32_0 : i32, i32
  }
  func.func @transform_3(%arg0: i32) -> (i32, i32) {
    %c0_i32 = arith.constant 0 : i32
    %c0_i32_0 = arith.constant 0 : i32
    return %arg0, %c0_i32 : i32, i32
  }
}

</mosaic_0001>

<llo_original>
// kernel: tpu_custom_call.1
$region0: #{tpu_custom_call.1}
  #allocation0 [shape = 'u32[]', space=smem, size = 0x4, offset = 0x4, fixed_abs, tag = 'smem constant byte address 0x4 - core index']
  #allocation1 [shape = 'u32[72,128]{1,0:T(1,128)}', space=vmem, size = 0x9000, scoped, tag = 'internal scratch']
  %s0 = inlined_call_operand.hbm [shape: f32[392,768], index: 0, kind: input, shape index: {}]
  %s1 = inlined_call_operand.hbm [shape: bf16[768,256], index: 1, kind: input, shape index: {}]
  %s2 = inlined_call_operand.hbm [shape: bf16[256,768], index: 2, kind: input, shape index: {}]
  %s3 = inlined_call_operand.hbm [shape: f32[392,768], index: 3, kind: output, shape index: {}]
  %s4 = sld [smem:[#allocation0]]
  $region57: #{tpu_custom_call.1} parent=0
    _
  %s6 = ssub.s32 1, %s4
  %s7 = scalar_select 0, %s6, %s4
  $region1: #{tpu_custom_call.1} parent=0
    #allocation2 [shape = 'u8[1572864]{0}', space=vmem, size = 0x180000, scoped, tag = 'input window, operand 0']
    #allocation3 [shape = 's32[2]{0}', space=sflag, size = 0x8, scoped, tag = 'scoped memory for tpu_custom_call.1']
    #allocation4 [shape = 's32[2]{0}', space=sflag, size = 0x8, scoped, tag = 'scoped memory for tpu_custom_call.1']
    #allocation5 [shape = 'u8[393216]{0}', space=vmem, size = 0x60000, scoped, tag = 'input window, operand 1, single buffered']
    #allocation6 [shape = 's32[1]{0}', space=sflag, size = 0x4, scoped, tag = 'scoped memory for tpu_custom_call.1']
    #allocation7 [shape = 'u8[393216]{0}', space=vmem, size = 0x60000, scoped, tag = 'input window, operand 2, single buffered']
    #allocation8 [shape = 'u8[1572864]{0}', space=vmem, size = 0x180000, scoped, tag = 'output window, operand 0']
    %8 = vsyncpa [#allocation3], 0
    %s9 = scalar_lea.sflag [#allocation3], 1
    %10 = vsyncpa %s9, 0
    %11 = vsyncpa [#allocation6], 0
    %12 = vsyncpa [#allocation4], 0
    %s13 = scalar_lea.sflag [#allocation4], 1
    %14 = vsyncpa %s13, 0
    loop: start=0, step=1, limit=4
    $region2: #{tpu_custom_call.1} parent=1 // loop_pre_header
      _
    $region3: #{tpu_custom_call.1} parent=1 // loop_header
      %s16 = sphi 0, %s20
      %p17 = scmp.ge.s32.totalorder %s16, 4
      %s26 = sphi 0, %s28
      %s29 = sphi 0, %s26
      %s30 = sphi 0, %s29
      %s46 = sphi 0, %s30
      %s50 = sphi 0, %s50
      %s52 = sphi 0, %s50
      %s53 = sphi 0, %s52
      %s67 = sphi 0, %s53
      %s71 = sphi 0, %s71
      %s73 = sphi 0, %s71
      %s74 = sphi 0, %s73
      %s88 = sphi 0, %s74
      %s94 = sphi 0, %s96
      %s97 = sphi 0, %s94
      %s98 = sphi 0, %s97
      %s114 = sphi 0, %s98
    $region4: #{tpu_custom_call.1} parent=1 // loop_header_branch
      %19 = sbr.rel (%p17) target = $region8
    $region5: #{tpu_custom_call.1} parent=1 // loop_body
      %s21 = ssub.s32 %s16, 1
      %s22 = ssub.s32 %s16, 2
      %s23 = sadd.s32 %s16, 1
      %s24 = ssub.s32 %s16, %s23
      %p25 = scmp.eq.s32.totalorder %s24, 0
      %s27 = sadd.s32 %s26, 1
      %s28 = scalar_select %p25, %s26, %s27
      %p31 = pneg %p25
      %p32 = scmp.eq.s32.totalorder %s16, 1
      %p33 = por %p31, %p32
      %p34 = scmp.ne.s32.totalorder %s26, %s29
      %p35 = scmp.eq.s32.totalorder %s16, 0
      %p36 = por %p34, %p35
      %p37 = scmp.ne.s32.totalorder %s26, %s29
      %p38 = scmp.eq.s32.totalorder %s21, 1
      %p39 = por %p37, %p38
      %p40 = scmp.ne.s32.totalorder %s29, %s30
      %p41 = scmp.eq.s32.totalorder %s21, 0
      %p42 = por %p40, %p41
      %p43 = scmp.ne.s32.totalorder %s29, %s30
      %p44 = scmp.eq.s32.totalorder %s22, 1
      %p45 = por %p43, %p44
      %p47 = scmp.ne.s32.totalorder %s30, %s46
      %p48 = scmp.eq.s32.totalorder %s22, 0
      %p49 = por %p47, %p48
      %s51 = sadd.s32 %s50, 1
      %p54 = scmp.eq.s32.totalorder %s16, 1
      %p55 = scmp.ne.s32.totalorder %s50, %s52
      %p56 = scmp.eq.s32.totalorder %s16, 0
      %p57 = por %p55, %p56
      %p58 = scmp.ne.s32.totalorder %s50, %s52
      %p59 = scmp.eq.s32.totalorder %s21, 1
      %p60 = por %p58, %p59
      %p61 = scmp.ne.s32.totalorder %s52, %s53
      %p62 = scmp.eq.s32.totalorder %s21, 0
      %p63 = por %p61, %p62
      %p64 = scmp.ne.s32.totalorder %s52, %s53
      %p65 = scmp.eq.s32.totalorder %s22, 1
      %p66 = por %p64, %p65
      %p68 = scmp.ne.s32.totalorder %s53, %s67
      %p69 = scmp.eq.s32.totalorder %s22, 0
      %p70 = por %p68, %p69
      %s72 = sadd.s32 %s71, 1
      %p75 = scmp.eq.s32.totalorder %s16, 1
      %p76 = scmp.ne.s32.totalorder %s71, %s73
      %p77 = scmp.eq.s32.totalorder %s16, 0
      %p78 = por %p76, %p77
      %p79 = scmp.ne.s32.totalorder %s71, %s73
      %p80 = scmp.eq.s32.totalorder %s21, 1
      %p81 = por %p79, %p80
      %p82 = scmp.ne.s32.totalorder %s73, %s74
      %p83 = scmp.eq.s32.totalorder %s21, 0
      %p84 = por %p82, %p83
      %p85 = scmp.ne.s32.totalorder %s73, %s74
      %p86 = scmp.eq.s32.totalorder %s22, 1
      %p87 = por %p85, %p86
      %p89 = scmp.ne.s32.totalorder %s74, %s88
      %p90 = scmp.eq.s32.totalorder %s22, 0
      %p91 = por %p89, %p90
      %s92 = ssub.s32 %s16, %s23
      %p93 = scmp.eq.s32.totalorder %s92, 0
      %s95 = sadd.s32 %s94, 1
      %s96 = scalar_select %p93, %s94, %s95
      %p99 = pneg %p93
      %p100 = scmp.eq.s32.totalorder %s16, 1
      %p101 = por %p99, %p100
      %p102 = scmp.ne.s32.totalorder %s94, %s97
      %p103 = scmp.eq.s32.totalorder %s16, 0
      %p104 = por %p102, %p103
      %p105 = scmp.ne.s32.totalorder %s94, %s97
      %p106 = scmp.eq.s32.totalorder %s21, 1
      %p107 = por %p105, %p106
      %p108 = scmp.ne.s32.totalorder %s97, %s98
      %p109 = scmp.eq.s32.totalorder %s21, 0
      %p110 = por %p108, %p109
      %p111 = scmp.ne.s32.totalorder %s97, %s98
      %p112 = scmp.eq.s32.totalorder %s22, 1
      %p113 = por %p111, %p112
      %p115 = scmp.ne.s32.totalorder %s98, %s114
      %p116 = scmp.eq.s32.totalorder %s22, 0
      %p117 = por %p115, %p116
      %p118 = scmp.le.s32.totalorder 1, %s16
      %p119 = scmp.lt.s32.totalorder %s16, 3
      %p120 = pnand %p118, %p119
      %p121 = pneg %p120
      // Predicated region
      $region9: #{tpu_custom_call.1} parent=5 // pred_check
        _
      $region10: #{tpu_custom_call.1} parent=5 // pred_check_branch
        %123 = sbr.rel (%p120) target = $region12
      $region11: #{tpu_custom_call.1} parent=5 // pred_region
        %s124 = ssub.s32 %s16, 1
        // Predicated region
        $region13: #{tpu_custom_call.1} parent=11 // pred_check
          %p125 = pneg %p63
        $region14: #{tpu_custom_call.1} parent=11 // pred_check_branch
          %127 = sbr.rel (%p125) target = $region16
        $region15: #{tpu_custom_call.1} parent=11 // pred_region
          %129 = vsyncadd [#allocation6], 0
          %s130 = sshll.u32 %s1, 4
          %s131 = int_to_ptr.hbm [resolvable:$true] %s130
          %s132 = sshll.u32 [#allocation5], 4
          %s133 = int_to_ptr.vmem [resolvable:$true] %s132
          %138 = dma.hbm_to_vmem [thread:$0]  %s131, 12288, %s133, [#allocation6], 128, 128, 8
        $region16: #{tpu_custom_call.1} parent=11 // pred_fallthru
          _
        // Predicated region
        $region17: #{tpu_custom_call.1} parent=11 // pred_check
          %p139 = pneg %p84
        $region18: #{tpu_custom_call.1} parent=11 // pred_check_branch
          %141 = sbr.rel (%p139) target = $region20
        $region19: #{tpu_custom_call.1} parent=11 // pred_region
          %143 = vsyncadd [#allocation6], 0
          %s144 = sshll.u32 %s2, 4
          %s145 = int_to_ptr.hbm [resolvable:$true] %s144
          %s146 = sshll.u32 [#allocation7], 4
          %s147 = int_to_ptr.vmem [resolvable:$true] %s146
          %152 = dma.hbm_to_vmem [thread:$0]  %s145, 12288, %s147, [#allocation6], 384, 384, 24
        $region20: #{tpu_custom_call.1} parent=11 // pred_fallthru
          _
      $region12: #{tpu_custom_call.1} parent=5 // pred_fallthru
        _
      %p153 = scmp.lt.s32.totalorder %s16, 2
      // Predicated region
      $region21: #{tpu_custom_call.1} parent=5 // pred_check
        %p154 = pneg %p153
      $region22: #{tpu_custom_call.1} parent=5 // pred_check_branch
        %156 = sbr.rel (%p154) target = $region24
      $region23: #{tpu_custom_call.1} parent=5 // pred_region
        // Predicated region
        $region25: #{tpu_custom_call.1} parent=23 // pred_check
          %p157 = pneg %p36
        $region26: #{tpu_custom_call.1} parent=23 // pred_check_branch
          %159 = sbr.rel (%p157) target = $region28
        $region27: #{tpu_custom_call.1} parent=23 // pred_region
          %s160 = sand.u32 %s26, 1
          %s161 = scalar_lea.sflag [#allocation3], %s160
          %s162 = sand.u32 %s26, 1
          %s163 = smul.addr %s162, 1536
          %s164 = scalar_lea.vmem [#allocation2], %s163
          %s165 = smul.u32 32, %s16
          %s166 = ssub.s32 49, %s165
          %p167 = scmp.lt.s32.totalorder %s166, 32
          %s168 = scalar_select %p167, %s166, 32
          %s169 = smul.u32 8, %s168
          %s170 = smul.u32 %s169, 6
          %s171 = ssub.s32 1536, %s170
          %s172 = sshll.u32 %s171, 4
          %173 = vsyncadd %s161, %s172
          %p174 = scmp.ne.s32.totalorder 0, %s170
          %s175 = smul.addr %s165, 6
          %s176 = smul.addr %s175, 8
          %s177 = scalar_lea.hbm %s0, %s176
          %s178 = smul.u32 48, %s168
          %s179 = sshll.u32 %s177, 4
          %s180 = int_to_ptr.hbm [resolvable:$true] %s179
          %s181 = sshll.u32 %s164, 4
          %s182 = int_to_ptr.vmem [resolvable:$true] %s181
          %s183 = sshll.u32 %s178, 4
          %187 = dma.hbm_to_vmem [thread:$0]  (%p174), %s180, %s183, %s182, %s161, 768, 768, 48
        $region28: #{tpu_custom_call.1} parent=23 // pred_fallthru
          _
      $region24: #{tpu_custom_call.1} parent=5 // pred_fallthru
        _
      %p188 = scmp.le.s32.totalorder 1, %s16
      %p189 = scmp.lt.s32.totalorder %s16, 3
      %p190 = pnand %p188, %p189
      %p191 = pneg %p190
      // Predicated region
      $region29: #{tpu_custom_call.1} parent=5 // pred_check
        _
      $region30: #{tpu_custom_call.1} parent=5 // pred_check_branch
        %193 = sbr.rel (%p190) target = $region32
      $region31: #{tpu_custom_call.1} parent=5 // pred_region
        %s194 = ssub.s32 %s16, 1
        %s195 = sand.u32 %s29, 1
        %s196 = scalar_lea.sflag [#allocation3], %s195
        %s197 = sand.u32 %s29, 1
        %s198 = smul.addr %s197, 1536
        %s199 = scalar_lea.vmem [#allocation2], %s198
        // Predicated region
        $region33: #{tpu_custom_call.1} parent=31 // pred_check
          %p200 = pneg %p42
        $region34: #{tpu_custom_call.1} parent=31 // pred_check_branch
          %202 = sbr.rel (%p200) target = $region36
        $region35: #{tpu_custom_call.1} parent=31 // pred_region
          %204 = dma.done %s196, 24576
        $region36: #{tpu_custom_call.1} parent=31 // pred_fallthru
          _
        // Predicated region
        $region37: #{tpu_custom_call.1} parent=31 // pred_check
          %p205 = pneg %p63
        $region38: #{tpu_custom_call.1} parent=31 // pred_check_branch
          %207 = sbr.rel (%p205) target = $region40
        $region39: #{tpu_custom_call.1} parent=31 // pred_region
          %209 = dma.done [#allocation6], 12288
        $region40: #{tpu_custom_call.1} parent=31 // pred_fallthru
          _
        // Predicated region
        $region41: #{tpu_custom_call.1} parent=31 // pred_check
          %p210 = pneg %p84
        $region42: #{tpu_custom_call.1} parent=31 // pred_check_branch
          %212 = sbr.rel (%p210) target = $region44
        $region43: #{tpu_custom_call.1} parent=31 // pred_region
          %214 = dma.done [#allocation6], 12288
        $region44: #{tpu_custom_call.1} parent=31 // pred_fallthru
          _
        %s215 = sand.u32 %s29, 1
        %s216 = scalar_lea.sflag [#allocation3], %s215
        %s217 = sand.u32 %s29, 1
        %s218 = smul.addr %s217, 1536
        %s219 = scalar_lea.vmem [#allocation2], %s218
        %p220 = pneg %p42
        %p221 = pneg %p39
        %p222 = pneg %p63
        %p223 = pneg %p60
        %p224 = pneg %p84
        %p225 = pneg %p81
        %p226 = pneg %p110
        %p227 = pneg %p107
        %s228 = sand.u32 %s97, 1
        %s229 = scalar_lea.sflag [#allocation4], %s228
        %s230 = sand.u32 %s97, 1
        %s231 = smul.addr %s230, 1536
        %s232 = scalar_lea.vmem [#allocation8], %s231
        %s233 = smul.u32 32, %s21
        %s234 = ssub.s32 49, %s233
        %p235 = scmp.lt.s32.totalorder %s234, 32
        %s236 = scalar_select %p235, %s234, 32
        %s237 = smul.u32 8, %s236
        %s238 = smul.u32 %s237, 6
        %s239 = smul.u32 32, %s21
        %s240 = ssub.s32 49, %s239
        %p241 = scmp.lt.s32.totalorder %s240, 32
        %s242 = scalar_select %p241, %s240, 32
        %s243 = smul.u32 8, %s242
        %s244 = smul.u32 %s243, 6
        %v245 = vld [vmem:[%s199] sm:$0xff]
        %v246 = vld [vmem:[%s199 + $0x8] sm:$0xff]
        %v247 = vld [vmem:[%s199 + $0x10] sm:$0xff]
        %v248 = vld [vmem:[%s199 + $0x18] sm:$0xff]
        %v249 = vld [vmem:[%s199 + $0x20] sm:$0xff]
        %v250 = vld [vmem:[%s199 + $0x28] sm:$0xff]
        %v251 = vld [vmem:[%s199 + $0x30] sm:$0xff]
        %v252 = vld [vmem:[%s199 + $0x38] sm:$0xff]
        %v253 = vld [vmem:[%s199 + $0x40] sm:$0xff]
        %v254 = vld [vmem:[%s199 + $0x48] sm:$0xff]
        %v255 = vld [vmem:[%s199 + $0x50] sm:$0xff]
        %v256 = vld [vmem:[%s199 + $0x58] sm:$0xff]
        %v257 = vld [vmem:[%s199 + $0x60] sm:$0xff]
        %v258 = vld [vmem:[%s199 + $0x68] sm:$0xff]
        %v259 = vld [vmem:[%s199 + $0x70] sm:$0xff]
        %v260 = vld [vmem:[%s199 + $0x78] sm:$0xff]
        %v261 = vld [vmem:[%s199 + $0x80] sm:$0xff]
        %v262 = vld [vmem:[%s199 + $0x88] sm:$0xff]
        %v263 = vld [vmem:[%s199 + $0x90] sm:$0xff]
        %v264 = vld [vmem:[%s199 + $0x98] sm:$0xff]
        %v265 = vld [vmem:[%s199 + $0xa0] sm:$0xff]
        %v266 = vld [vmem:[%s199 + $0xa8] sm:$0xff]
        %v267 = vld [vmem:[%s199 + $0xb0] sm:$0xff]
        %v268 = vld [vmem:[%s199 + $0xb8] sm:$0xff]
        %v269 = vld [vmem:[%s199 + $0xc0] sm:$0xff]
        %v270 = vld [vmem:[%s199 + $0xc8] sm:$0xff]
        %v271 = vld [vmem:[%s199 + $0xd0] sm:$0xff]
        %v272 = vld [vmem:[%s199 + $0xd8] sm:$0xff]
        %v273 = vld [vmem:[%s199 + $0xe0] sm:$0xff]
        %v274 = vld [vmem:[%s199 + $0xe8] sm:$0xff]
        %v275 = vld [vmem:[%s199 + $0xf0] sm:$0xff]
        %v276 = vld [vmem:[%s199 + $0xf8] sm:$0xff]
        %v277 = vld [vmem:[%s199 + $0x100] sm:$0xff]
        %v278 = vld [vmem:[%s199 + $0x108] sm:$0xff]
        %v279 = vld [vmem:[%s199 + $0x110] sm:$0xff]
        %v280 = vld [vmem:[%s199 + $0x118] sm:$0xff]
        %v281 = vld [vmem:[%s199 + $0x120] sm:$0xff]
        %v282 = vld [vmem:[%s199 + $0x128] sm:$0xff]
        %v283 = vld [vmem:[%s199 + $0x130] sm:$0xff]
        %v284 = vld [vmem:[%s199 + $0x138] sm:$0xff]
        %v285 = vld [vmem:[%s199 + $0x140] sm:$0xff]
        %v286 = vld [vmem:[%s199 + $0x148] sm:$0xff]
        %v287 = vld [vmem:[%s199 + $0x150] sm:$0xff]
        %v288 = vld [vmem:[%s199 + $0x158] sm:$0xff]
        %v289 = vld [vmem:[%s199 + $0x160] sm:$0xff]
        %v290 = vld [vmem:[%s199 + $0x168] sm:$0xff]
        %v291 = vld [vmem:[%s199 + $0x170] sm:$0xff]
        %v292 = vld [vmem:[%s199 + $0x178] sm:$0xff]
        %v293 = vld [vmem:[%s199 + $0x180] sm:$0xff]
        %v294 = vld [vmem:[%s199 + $0x188] sm:$0xff]
        %v295 = vld [vmem:[%s199 + $0x190] sm:$0xff]
        %v296 = vld [vmem:[%s199 + $0x198] sm:$0xff]
        %v297 = vld [vmem:[%s199 + $0x1a0] sm:$0xff]
        %v298 = vld [vmem:[%s199 + $0x1a8] sm:$0xff]
        %v299 = vld [vmem:[%s199 + $0x1b0] sm:$0xff]
        %v300 = vld [vmem:[%s199 + $0x1b8] sm:$0xff]
        %v301 = vld [vmem:[%s199 + $0x1c0] sm:$0xff]
        %v302 = vld [vmem:[%s199 + $0x1c8] sm:$0xff]
        %v303 = vld [vmem:[%s199 + $0x1d0] sm:$0xff]
        %v304 = vld [vmem:[%s199 + $0x1d8] sm:$0xff]
        %v305 = vld [vmem:[%s199 + $0x1e0] sm:$0xff]
        %v306 = vld [vmem:[%s199 + $0x1e8] sm:$0xff]
        %v307 = vld [vmem:[%s199 + $0x1f0] sm:$0xff]
        %v308 = vld [vmem:[%s199 + $0x1f8] sm:$0xff]
        %v309 = vld [vmem:[%s199 + $0x200] sm:$0xff]
        %v310 = vld [vmem:[%s199 + $0x208] sm:$0xff]
        %v311 = vld [vmem:[%s199 + $0x210] sm:$0xff]
        %v312 = vld [vmem:[%s199 + $0x218] sm:$0xff]
        %v313 = vld [vmem:[%s199 + $0x220] sm:$0xff]
        %v314 = vld [vmem:[%s199 + $0x228] sm:$0xff]
        %v315 = vld [vmem:[%s199 + $0x230] sm:$0xff]
        %v316 = vld [vmem:[%s199 + $0x238] sm:$0xff]
        %v317 = vld [vmem:[%s199 + $0x240] sm:$0xff]
        %v318 = vld [vmem:[%s199 + $0x248] sm:$0xff]
        %v319 = vld [vmem:[%s199 + $0x250] sm:$0xff]
        %v320 = vld [vmem:[%s199 + $0x258] sm:$0xff]
        %v321 = vld [vmem:[%s199 + $0x260] sm:$0xff]
        %v322 = vld [vmem:[%s199 + $0x268] sm:$0xff]
        %v323 = vld [vmem:[%s199 + $0x270] sm:$0xff]
        %v324 = vld [vmem:[%s199 + $0x278] sm:$0xff]
        %v325 = vld [vmem:[%s199 + $0x280] sm:$0xff]
        %v326 = vld [vmem:[%s199 + $0x288] sm:$0xff]
        %v327 = vld [vmem:[%s199 + $0x290] sm:$0xff]
        %v328 = vld [vmem:[%s199 + $0x298] sm:$0xff]
        %v329 = vld [vmem:[%s199 + $0x2a0] sm:$0xff]
        %v330 = vld [vmem:[%s199 + $0x2a8] sm:$0xff]
        %v331 = vld [vmem:[%s199 + $0x2b0] sm:$0xff]
        %v332 = vld [vmem:[%s199 + $0x2b8] sm:$0xff]
        %v333 = vld [vmem:[%s199 + $0x2c0] sm:$0xff]
        %v334 = vld [vmem:[%s199 + $0x2c8] sm:$0xff]
        %v335 = vld [vmem:[%s199 + $0x2d0] sm:$0xff]
        %v336 = vld [vmem:[%s199 + $0x2d8] sm:$0xff]
        %v337 = vld [vmem:[%s199 + $0x2e0] sm:$0xff]
        %v338 = vld [vmem:[%s199 + $0x2e8] sm:$0xff]
        %v339 = vld [vmem:[%s199 + $0x2f0] sm:$0xff]
        %v340 = vld [vmem:[%s199 + $0x2f8] sm:$0xff]
        %v341 = vld [vmem:[%s199 + $0x300] sm:$0xff]
        %v342 = vld [vmem:[%s199 + $0x308] sm:$0xff]
        %v343 = vld [vmem:[%s199 + $0x310] sm:$0xff]
        %v344 = vld [vmem:[%s199 + $0x318] sm:$0xff]
        %v345 = vld [vmem:[%s199 + $0x320] sm:$0xff]
        %v346 = vld [vmem:[%s199 + $0x328] sm:$0xff]
        %v347 = vld [vmem:[%s199 + $0x330] sm:$0xff]
        %v348 = vld [vmem:[%s199 + $0x338] sm:$0xff]
        %v349 = vld [vmem:[%s199 + $0x340] sm:$0xff]
        %v350 = vld [vmem:[%s199 + $0x348] sm:$0xff]
        %v351 = vld [vmem:[%s199 + $0x350] sm:$0xff]
        %v352 = vld [vmem:[%s199 + $0x358] sm:$0xff]
        %v353 = vld [vmem:[%s199 + $0x360] sm:$0xff]
        %v354 = vld [vmem:[%s199 + $0x368] sm:$0xff]
        %v355 = vld [vmem:[%s199 + $0x370] sm:$0xff]
        %v356 = vld [vmem:[%s199 + $0x378] sm:$0xff]
        %v357 = vld [vmem:[%s199 + $0x380] sm:$0xff]
        %v358 = vld [vmem:[%s199 + $0x388] sm:$0xff]
        %v359 = vld [vmem:[%s199 + $0x390] sm:$0xff]
        %v360 = vld [vmem:[%s199 + $0x398] sm:$0xff]
        %v361 = vld [vmem:[%s199 + $0x3a0] sm:$0xff]
        %v362 = vld [vmem:[%s199 + $0x3a8] sm:$0xff]
        %v363 = vld [vmem:[%s199 + $0x3b0] sm:$0xff]
        %v364 = vld [vmem:[%s199 + $0x3b8] sm:$0xff]
        %v365 = vld [vmem:[%s199 + $0x3c0] sm:$0xff]
        %v366 = vld [vmem:[%s199 + $0x3c8] sm:$0xff]
        %v367 = vld [vmem:[%s199 + $0x3d0] sm:$0xff]
        %v368 = vld [vmem:[%s199 + $0x3d8] sm:$0xff]
        %v369 = vld [vmem:[%s199 + $0x3e0] sm:$0xff]
        %v370 = vld [vmem:[%s199 + $0x3e8] sm:$0xff]
        %v371 = vld [vmem:[%s199 + $0x3f0] sm:$0xff]
        %v372 = vld [vmem:[%s199 + $0x3f8] sm:$0xff]
        %v373 = vld [vmem:[%s199 + $0x400] sm:$0xff]
        %v374 = vld [vmem:[%s199 + $0x408] sm:$0xff]
        %v375 = vld [vmem:[%s199 + $0x410] sm:$0xff]
        %v376 = vld [vmem:[%s199 + $0x418] sm:$0xff]
        %v377 = vld [vmem:[%s199 + $0x420] sm:$0xff]
        %v378 = vld [vmem:[%s199 + $0x428] sm:$0xff]
        %v379 = vld [vmem:[%s199 + $0x430] sm:$0xff]
        %v380 = vld [vmem:[%s199 + $0x438] sm:$0xff]
        %v381 = vld [vmem:[%s199 + $0x440] sm:$0xff]
        %v382 = vld [vmem:[%s199 + $0x448] sm:$0xff]
        %v383 = vld [vmem:[%s199 + $0x450] sm:$0xff]
        %v384 = vld [vmem:[%s199 + $0x458] sm:$0xff]
        %v385 = vld [vmem:[%s199 + $0x460] sm:$0xff]
        %v386 = vld [vmem:[%s199 + $0x468] sm:$0xff]
        %v387 = vld [vmem:[%s199 + $0x470] sm:$0xff]
        %v388 = vld [vmem:[%s199 + $0x478] sm:$0xff]
        %v389 = vld [vmem:[%s199 + $0x480] sm:$0xff]
        %v390 = vld [vmem:[%s199 + $0x488] sm:$0xff]
        %v391 = vld [vmem:[%s199 + $0x490] sm:$0xff]
        %v392 = vld [vmem:[%s199 + $0x498] sm:$0xff]
        %v393 = vld [vmem:[%s199 + $0x4a0] sm:$0xff]
        %v394 = vld [vmem:[%s199 + $0x4a8] sm:$0xff]
        %v395 = vld [vmem:[%s199 + $0x4b0] sm:$0xff]
        %v396 = vld [vmem:[%s199 + $0x4b8] sm:$0xff]
        %v397 = vld [vmem:[%s199 + $0x4c0] sm:$0xff]
        %v398 = vld [vmem:[%s199 + $0x4c8] sm:$0xff]
        %v399 = vld [vmem:[%s199 + $0x4d0] sm:$0xff]
        %v400 = vld [vmem:[%s199 + $0x4d8] sm:$0xff]
        %v401 = vld [vmem:[%s199 + $0x4e0] sm:$0xff]
        %v402 = vld [vmem:[%s199 + $0x4e8] sm:$0xff]
        %v403 = vld [vmem:[%s199 + $0x4f0] sm:$0xff]
        %v404 = vld [vmem:[%s199 + $0x4f8] sm:$0xff]
        %v405 = vld [vmem:[%s199 + $0x500] sm:$0xff]
        %v406 = vld [vmem:[%s199 + $0x508] sm:$0xff]
        %v407 = vld [vmem:[%s199 + $0x510] sm:$0xff]
        %v408 = vld [vmem:[%s199 + $0x518] sm:$0xff]
        %v409 = vld [vmem:[%s199 + $0x520] sm:$0xff]
        %v410 = vld [vmem:[%s199 + $0x528] sm:$0xff]
        %v411 = vld [vmem:[%s199 + $0x530] sm:$0xff]
        %v412 = vld [vmem:[%s199 + $0x538] sm:$0xff]
        %v413 = vld [vmem:[%s199 + $0x540] sm:$0xff]
        %v414 = vld [vmem:[%s199 + $0x548] sm:$0xff]
        %v415 = vld [vmem:[%s199 + $0x550] sm:$0xff]
        %v416 = vld [vmem:[%s199 + $0x558] sm:$0xff]
        %v417 = vld [vmem:[%s199 + $0x560] sm:$0xff]
        %v418 = vld [vmem:[%s199 + $0x568] sm:$0xff]
        %v419 = vld [vmem:[%s199 + $0x570] sm:$0xff]
        %v420 = vld [vmem:[%s199 + $0x578] sm:$0xff]
        %v421 = vld [vmem:[%s199 + $0x580] sm:$0xff]
        %v422 = vld [vmem:[%s199 + $0x588] sm:$0xff]
        %v423 = vld [vmem:[%s199 + $0x590] sm:$0xff]
        %v424 = vld [vmem:[%s199 + $0x598] sm:$0xff]
        %v425 = vld [vmem:[%s199 + $0x5a0] sm:$0xff]
        %v426 = vld [vmem:[%s199 + $0x5a8] sm:$0xff]
        %v427 = vld [vmem:[%s199 + $0x5b0] sm:$0xff]
        %v428 = vld [vmem:[%s199 + $0x5b8] sm:$0xff]
        %v429 = vld [vmem:[%s199 + $0x5c0] sm:$0xff]
        %v430 = vld [vmem:[%s199 + $0x5c8] sm:$0xff]
        %v431 = vld [vmem:[%s199 + $0x5d0] sm:$0xff]
        %v432 = vld [vmem:[%s199 + $0x5d8] sm:$0xff]
        %v433 = vld [vmem:[%s199 + $0x5e0] sm:$0xff]
        %v434 = vld [vmem:[%s199 + $0x5e8] sm:$0xff]
        %v435 = vld [vmem:[%s199 + $0x5f0] sm:$0xff]
        %v436 = vld [vmem:[%s199 + $0x5f8] sm:$0xff]
        %v437 = vpack.c.bf16 %v251, %v245
        %v438 = vpack.c.bf16 %v252, %v246
        %v439 = vpack.c.bf16 %v253, %v247
        %v440 = vpack.c.bf16 %v254, %v248
        %v441 = vpack.c.bf16 %v255, %v249
        %v442 = vpack.c.bf16 %v256, %v250
        %v443 = vpack.c.bf16 %v263, %v257
        %v444 = vpack.c.bf16 %v264, %v258
        %v445 = vpack.c.bf16 %v265, %v259
        %v446 = vpack.c.bf16 %v266, %v260
        %v447 = vpack.c.bf16 %v267, %v261
        %v448 = vpack.c.bf16 %v268, %v262
        %v449 = vpack.c.bf16 %v275, %v269
        %v450 = vpack.c.bf16 %v276, %v270
        %v451 = vpack.c.bf16 %v277, %v271
        %v452 = vpack.c.bf16 %v278, %v272
        %v453 = vpack.c.bf16 %v279, %v273
        %v454 = vpack.c.bf16 %v280, %v274
        %v455 = vpack.c.bf16 %v287, %v281
        %v456 = vpack.c.bf16 %v288, %v282
        %v457 = vpack.c.bf16 %v289, %v283
        %v458 = vpack.c.bf16 %v290, %v284
        %v459 = vpack.c.bf16 %v291, %v285
        %v460 = vpack.c.bf16 %v292, %v286
        %v461 = vpack.c.bf16 %v299, %v293
        %v462 = vpack.c.bf16 %v300, %v294
        %v463 = vpack.c.bf16 %v301, %v295
        %v464 = vpack.c.bf16 %v302, %v296
        %v465 = vpack.c.bf16 %v303, %v297
        %v466 = vpack.c.bf16 %v304, %v298
        %v467 = vpack.c.bf16 %v311, %v305
        %v468 = vpack.c.bf16 %v312, %v306
        %v469 = vpack.c.bf16 %v313, %v307
        %v470 = vpack.c.bf16 %v314, %v308
        %v471 = vpack.c.bf16 %v315, %v309
        %v472 = vpack.c.bf16 %v316, %v310
        %v473 = vpack.c.bf16 %v323, %v317
        %v474 = vpack.c.bf16 %v324, %v318
        %v475 = vpack.c.bf16 %v325, %v319
        %v476 = vpack.c.bf16 %v326, %v320
        %v477 = vpack.c.bf16 %v327, %v321
        %v478 = vpack.c.bf16 %v328, %v322
        %v479 = vpack.c.bf16 %v335, %v329
        %v480 = vpack.c.bf16 %v336, %v330
        %v481 = vpack.c.bf16 %v337, %v331
        %v482 = vpack.c.bf16 %v338, %v332
        %v483 = vpack.c.bf16 %v339, %v333
        %v484 = vpack.c.bf16 %v340, %v334
        %v485 = vpack.c.bf16 %v347, %v341
        %v486 = vpack.c.bf16 %v348, %v342
        %v487 = vpack.c.bf16 %v349, %v343
        %v488 = vpack.c.bf16 %v350, %v344
        %v489 = vpack.c.bf16 %v351, %v345
        %v490 = vpack.c.bf16 %v352, %v346
        %v491 = vpack.c.bf16 %v359, %v353
        %v492 = vpack.c.bf16 %v360, %v354
        %v493 = vpack.c.bf16 %v361, %v355
        %v494 = vpack.c.bf16 %v362, %v356
        %v495 = vpack.c.bf16 %v363, %v357
        %v496 = vpack.c.bf16 %v364, %v358
        %v497 = vpack.c.bf16 %v371, %v365
        %v498 = vpack.c.bf16 %v372, %v366
        %v499 = vpack.c.bf16 %v373, %v367
        %v500 = vpack.c.bf16 %v374, %v368
        %v501 = vpack.c.bf16 %v375, %v369
        %v502 = vpack.c.bf16 %v376, %v370
        %v503 = vpack.c.bf16 %v383, %v377
        %v504 = vpack.c.bf16 %v384, %v378
        %v505 = vpack.c.bf16 %v385, %v379
        %v506 = vpack.c.bf16 %v386, %v380
        %v507 = vpack.c.bf16 %v387, %v381
        %v508 = vpack.c.bf16 %v388, %v382
        %v509 = vpack.c.bf16 %v395, %v389
        %v510 = vpack.c.bf16 %v396, %v390
        %v511 = vpack.c.bf16 %v397, %v391
        %v512 = vpack.c.bf16 %v398, %v392
        %v513 = vpack.c.bf16 %v399, %v393
        %v514 = vpack.c.bf16 %v400, %v394
        %v515 = vpack.c.bf16 %v407, %v401
        %v516 = vpack.c.bf16 %v408, %v402
        %v517 = vpack.c.bf16 %v409, %v403
        %v518 = vpack.c.bf16 %v410, %v404
        %v519 = vpack.c.bf16 %v411, %v405
        %v520 = vpack.c.bf16 %v412, %v406
        %v521 = vpack.c.bf16 %v419, %v413
        %v522 = vpack.c.bf16 %v420, %v414
        %v523 = vpack.c.bf16 %v421, %v415
        %v524 = vpack.c.bf16 %v422, %v416
        %v525 = vpack.c.bf16 %v423, %v417
        %v526 = vpack.c.bf16 %v424, %v418
        %v527 = vpack.c.bf16 %v431, %v425
        %v528 = vpack.c.bf16 %v432, %v426
        %v529 = vpack.c.bf16 %v433, %v427
        %v530 = vpack.c.bf16 %v434, %v428
        %v531 = vpack.c.bf16 %v435, %v429
        %v532 = vpack.c.bf16 %v436, %v430
        %v533 = vld [vmem:[#allocation5] sm:$0xff]
        %v534 = vld [vmem:[#allocation5 + $0x8] sm:$0xff]
        %v535 = vld [vmem:[#allocation5 + $0x10] sm:$0xff]
        %v536 = vld [vmem:[#allocation5 + $0x18] sm:$0xff]
        %v537 = vld [vmem:[#allocation5 + $0x20] sm:$0xff]
        %v538 = vld [vmem:[#allocation5 + $0x28] sm:$0xff]
        %v539 = vld [vmem:[#allocation5 + $0x30] sm:$0xff]
        %v540 = vld [vmem:[#allocation5 + $0x38] sm:$0xff]
        %v541 = vld [vmem:[#allocation5 + $0x40] sm:$0xff]
        %v542 = vld [vmem:[#allocation5 + $0x48] sm:$0xff]
        %v543 = vld [vmem:[#allocation5 + $0x50] sm:$0xff]
        %v544 = vld [vmem:[#allocation5 + $0x58] sm:$0xff]
        %v545 = vld [vmem:[#allocation5 + $0x60] sm:$0xff]
        %v546 = vld [vmem:[#allocation5 + $0x68] sm:$0xff]
        %v547 = vld [vmem:[#allocation5 + $0x70] sm:$0xff]
        %v548 = vld [vmem:[#allocation5 + $0x78] sm:$0xff]
        %v549 = vld [vmem:[#allocation5 + $0x80] sm:$0xff]
        %v550 = vld [vmem:[#allocation5 + $0x88] sm:$0xff]
        %v551 = vld [vmem:[#allocation5 + $0x90] sm:$0xff]
        %v552 = vld [vmem:[#allocation5 + $0x98] sm:$0xff]
        %v553 = vld [vmem:[#allocation5 + $0xa0] sm:$0xff]
        %v554 = vld [vmem:[#allocation5 + $0xa8] sm:$0xff]
        %v555 = vld [vmem:[#allocation5 + $0xb0] sm:$0xff]
        %v556 = vld [vmem:[#allocation5 + $0xb8] sm:$0xff]
        %v557 = vld [vmem:[#allocation5 + $0xc0] sm:$0xff]
        %v558 = vld [vmem:[#allocation5 + $0xc8] sm:$0xff]
        %v559 = vld [vmem:[#allocation5 + $0xd0] sm:$0xff]
        %v560 = vld [vmem:[#allocation5 + $0xd8] sm:$0xff]
        %v561 = vld [vmem:[#allocation5 + $0xe0] sm:$0xff]
        %v562 = vld [vmem:[#allocation5 + $0xe8] sm:$0xff]
        %v563 = vld [vmem:[#allocation5 + $0xf0] sm:$0xff]
        %v564 = vld [vmem:[#allocation5 + $0xf8] sm:$0xff]
        %v565 = vld [vmem:[#allocation5 + $0x100] sm:$0xff]
        %v566 = vld [vmem:[#allocation5 + $0x108] sm:$0xff]
        %v567 = vld [vmem:[#allocation5 + $0x110] sm:$0xff]
        %v568 = vld [vmem:[#allocation5 + $0x118] sm:$0xff]
        %v569 = vld [vmem:[#allocation5 + $0x120] sm:$0xff]
        %v570 = vld [vmem:[#allocation5 + $0x128] sm:$0xff]
        %v571 = vld [vmem:[#allocation5 + $0x130] sm:$0xff]
        %v572 = vld [vmem:[#allocation5 + $0x138] sm:$0xff]
        %v573 = vld [vmem:[#allocation5 + $0x140] sm:$0xff]
        %v574 = vld [vmem:[#allocation5 + $0x148] sm:$0xff]
        %v575 = vld [vmem:[#allocation5 + $0x150] sm:$0xff]
        %v576 = vld [vmem:[#allocation5 + $0x158] sm:$0xff]
        %v577 = vld [vmem:[#allocation5 + $0x160] sm:$0xff]
        %v578 = vld [vmem:[#allocation5 + $0x168] sm:$0xff]
        %v579 = vld [vmem:[#allocation5 + $0x170] sm:$0xff]
        %v580 = vld [vmem:[#allocation5 + $0x178] sm:$0xff]
        %v581 = vld [vmem:[#allocation5 + $0x180] sm:$0xff]
        %v582 = vld [vmem:[#allocation5 + $0x188] sm:$0xff]
        %v583 = vld [vmem:[#allocation5 + $0x190] sm:$0xff]
        %v584 = vld [vmem:[#allocation5 + $0x198] sm:$0xff]
        %v585 = vld [vmem:[#allocation5 + $0x1a0] sm:$0xff]
        %v586 = vld [vmem:[#allocation5 + $0x1a8] sm:$0xff]
        %v587 = vld [vmem:[#allocation5 + $0x1b0] sm:$0xff]
        %v588 = vld [vmem:[#allocation5 + $0x1b8] sm:$0xff]
        %v589 = vld [vmem:[#allocation5 + $0x1c0] sm:$0xff]
        %v590 = vld [vmem:[#allocation5 + $0x1c8] sm:$0xff]
        %v591 = vld [vmem:[#allocation5 + $0x1d0] sm:$0xff]
        %v592 = vld [vmem:[#allocation5 + $0x1d8] sm:$0xff]
        %v593 = vld [vmem:[#allocation5 + $0x1e0] sm:$0xff]
        %v594 = vld [vmem:[#allocation5 + $0x1e8] sm:$0xff]
        %v595 = vld [vmem:[#allocation5 + $0x1f0] sm:$0xff]
        %v596 = vld [vmem:[#allocation5 + $0x1f8] sm:$0xff]
        %v597 = vld [vmem:[#allocation5 + $0x200] sm:$0xff]
        %v598 = vld [vmem:[#allocation5 + $0x208] sm:$0xff]
        %v599 = vld [vmem:[#allocation5 + $0x210] sm:$0xff]
        %v600 = vld [vmem:[#allocation5 + $0x218] sm:$0xff]
        %v601 = vld [vmem:[#allocation5 + $0x220] sm:$0xff]
        %v602 = vld [vmem:[#allocation5 + $0x228] sm:$0xff]
        %v603 = vld [vmem:[#allocation5 + $0x230] sm:$0xff]
        %v604 = vld [vmem:[#allocation5 + $0x238] sm:$0xff]
        %v605 = vld [vmem:[#allocation5 + $0x240] sm:$0xff]
        %v606 = vld [vmem:[#allocation5 + $0x248] sm:$0xff]
        %v607 = vld [vmem:[#allocation5 + $0x250] sm:$0xff]
        %v608 = vld [vmem:[#allocation5 + $0x258] sm:$0xff]
        %v609 = vld [vmem:[#allocation5 + $0x260] sm:$0xff]
        %v610 = vld [vmem:[#allocation5 + $0x268] sm:$0xff]
        %v611 = vld [vmem:[#allocation5 + $0x270] sm:$0xff]
        %v612 = vld [vmem:[#allocation5 + $0x278] sm:$0xff]
        %v613 = vld [vmem:[#allocation5 + $0x280] sm:$0xff]
        %v614 = vld [vmem:[#allocation5 + $0x288] sm:$0xff]
        %v615 = vld [vmem:[#allocation5 + $0x290] sm:$0xff]
        %v616 = vld [vmem:[#allocation5 + $0x298] sm:$0xff]
        %v617 = vld [vmem:[#allocation5 + $0x2a0] sm:$0xff]
        %v618 = vld [vmem:[#allocation5 + $0x2a8] sm:$0xff]
        %v619 = vld [vmem:[#allocation5 + $0x2b0] sm:$0xff]
        %v620 = vld [vmem:[#allocation5 + $0x2b8] sm:$0xff]
        %v621 = vld [vmem:[#allocation5 + $0x2c0] sm:$0xff]
        %v622 = vld [vmem:[#allocation5 + $0x2c8] sm:$0xff]
        %v623 = vld [vmem:[#allocation5 + $0x2d0] sm:$0xff]
        %v624 = vld [vmem:[#allocation5 + $0x2d8] sm:$0xff]
        %v625 = vld [vmem:[#allocation5 + $0x2e0] sm:$0xff]
        %v626 = vld [vmem:[#allocation5 + $0x2e8] sm:$0xff]
        %v627 = vld [vmem:[#allocation5 + $0x2f0] sm:$0xff]
        %v628 = vld [vmem:[#allocation5 + $0x2f8] sm:$0xff]
        %v725 = vunpack.c.l.b16 %v533
        %v726 = vunpack.c.h.b16 %v533
        %v727 = vunpack.c.l.b16 %v534
        %v728 = vunpack.c.h.b16 %v534
        %v729 = vunpack.c.l.b16 %v535
        %v730 = vunpack.c.h.b16 %v535
        %v731 = vunpack.c.l.b16 %v536
        %v732 = vunpack.c.h.b16 %v536
        %v733 = vunpack.c.l.b16 %v537
        %v734 = vunpack.c.h.b16 %v537
        %v735 = vunpack.c.l.b16 %v538
        %v736 = vunpack.c.h.b16 %v538
        %v737 = vunpack.c.l.b16 %v539
        %v738 = vunpack.c.h.b16 %v539
        %v739 = vunpack.c.l.b16 %v540
        %v740 = vunpack.c.h.b16 %v540
        %v741 = vunpack.c.l.b16 %v541
        %v742 = vunpack.c.h.b16 %v541
        %v743 = vunpack.c.l.b16 %v542
        %v744 = vunpack.c.h.b16 %v542
        %v745 = vunpack.c.l.b16 %v543
        %v746 = vunpack.c.h.b16 %v543
        %v747 = vunpack.c.l.b16 %v544
        %v748 = vunpack.c.h.b16 %v544
        %v749 = vunpack.c.l.b16 %v545
        %v750 = vunpack.c.h.b16 %v545
        %v751 = vunpack.c.l.b16 %v546
        %v752 = vunpack.c.h.b16 %v546
        %v753 = vunpack.c.l.b16 %v547
        %v754 = vunpack.c.h.b16 %v547
        %v755 = vunpack.c.l.b16 %v548
        %v756 = vunpack.c.h.b16 %v548
        %v757 = vunpack.c.l.b16 %v549
        %v758 = vunpack.c.h.b16 %v549
        %v759 = vunpack.c.l.b16 %v550
        %v760 = vunpack.c.h.b16 %v550
        %v761 = vunpack.c.l.b16 %v551
        %v762 = vunpack.c.h.b16 %v551
        %v763 = vunpack.c.l.b16 %v552
        %v764 = vunpack.c.h.b16 %v552
        %v765 = vunpack.c.l.b16 %v553
        %v766 = vunpack.c.h.b16 %v553
        %v767 = vunpack.c.l.b16 %v554
        %v768 = vunpack.c.h.b16 %v554
        %v769 = vunpack.c.l.b16 %v555
        %v770 = vunpack.c.h.b16 %v555
        %v771 = vunpack.c.l.b16 %v556
        %v772 = vunpack.c.h.b16 %v556
        %v773 = vunpack.c.l.b16 %v557
        %v774 = vunpack.c.h.b16 %v557
        %v775 = vunpack.c.l.b16 %v558
        %v776 = vunpack.c.h.b16 %v558
        %v777 = vunpack.c.l.b16 %v559
        %v778 = vunpack.c.h.b16 %v559
        %v779 = vunpack.c.l.b16 %v560
        %v780 = vunpack.c.h.b16 %v560
        %v781 = vunpack.c.l.b16 %v561
        %v782 = vunpack.c.h.b16 %v561
        %v783 = vunpack.c.l.b16 %v562
        %v784 = vunpack.c.h.b16 %v562
        %v785 = vunpack.c.l.b16 %v563
        %v786 = vunpack.c.h.b16 %v563
        %v787 = vunpack.c.l.b16 %v564
        %v788 = vunpack.c.h.b16 %v564
        %v789 = vunpack.c.l.b16 %v565
        %v790 = vunpack.c.h.b16 %v565
        %v791 = vunpack.c.l.b16 %v566
        %v792 = vunpack.c.h.b16 %v566
        %v793 = vunpack.c.l.b16 %v567
        %v794 = vunpack.c.h.b16 %v567
        %v795 = vunpack.c.l.b16 %v568
        %v796 = vunpack.c.h.b16 %v568
        %v797 = vunpack.c.l.b16 %v569
        %v798 = vunpack.c.h.b16 %v569
        %v799 = vunpack.c.l.b16 %v570
        %v800 = vunpack.c.h.b16 %v570
        %v801 = vunpack.c.l.b16 %v571
        %v802 = vunpack.c.h.b16 %v571
        %v803 = vunpack.c.l.b16 %v572
        %v804 = vunpack.c.h.b16 %v572
        %v805 = vunpack.c.l.b16 %v573
        %v806 = vunpack.c.h.b16 %v573
        %v807 = vunpack.c.l.b16 %v574
        %v808 = vunpack.c.h.b16 %v574
        %v809 = vunpack.c.l.b16 %v575
        %v810 = vunpack.c.h.b16 %v575
        %v811 = vunpack.c.l.b16 %v576
        %v812 = vunpack.c.h.b16 %v576
        %v813 = vunpack.c.l.b16 %v577
        %v814 = vunpack.c.h.b16 %v577
        %v815 = vunpack.c.l.b16 %v578
        %v816 = vunpack.c.h.b16 %v578
        %v817 = vunpack.c.l.b16 %v579
        %v818 = vunpack.c.h.b16 %v579
        %v819 = vunpack.c.l.b16 %v580
        %v820 = vunpack.c.h.b16 %v580
        %v821 = vunpack.c.l.b16 %v581
        %v822 = vunpack.c.h.b16 %v581
        %v823 = vunpack.c.l.b16 %v582
        %v824 = vunpack.c.h.b16 %v582
        %v825 = vunpack.c.l.b16 %v583
        %v826 = vunpack.c.h.b16 %v583
        %v827 = vunpack.c.l.b16 %v584
        %v828 = vunpack.c.h.b16 %v584
        %v829 = vunpack.c.l.b16 %v585
        %v830 = vunpack.c.h.b16 %v585
        %v831 = vunpack.c.l.b16 %v586
        %v832 = vunpack.c.h.b16 %v586
        %v833 = vunpack.c.l.b16 %v587
        %v834 = vunpack.c.h.b16 %v587
        %v835 = vunpack.c.l.b16 %v588
        %v836 = vunpack.c.h.b16 %v588
        %v837 = vunpack.c.l.b16 %v589
        %v838 = vunpack.c.h.b16 %v589
        %v839 = vunpack.c.l.b16 %v590
        %v840 = vunpack.c.h.b16 %v590
        %v841 = vunpack.c.l.b16 %v591
        %v842 = vunpack.c.h.b16 %v591
        %v843 = vunpack.c.l.b16 %v592
        %v844 = vunpack.c.h.b16 %v592
        %v845 = vunpack.c.l.b16 %v593
        %v846 = vunpack.c.h.b16 %v593
        %v847 = vunpack.c.l.b16 %v594
        %v848 = vunpack.c.h.b16 %v594
        %v849 = vunpack.c.l.b16 %v595
        %v850 = vunpack.c.h.b16 %v595
        %v851 = vunpack.c.l.b16 %v596
        %v852 = vunpack.c.h.b16 %v596
        %v853 = vunpack.c.l.b16 %v597
        %v854 = vunpack.c.h.b16 %v597
        %v855 = vunpack.c.l.b16 %v598
        %v856 = vunpack.c.h.b16 %v598
        %v857 = vunpack.c.l.b16 %v599
        %v858 = vunpack.c.h.b16 %v599
        %v859 = vunpack.c.l.b16 %v600
        %v860 = vunpack.c.h.b16 %v600
        %v861 = vunpack.c.l.b16 %v601
        %v862 = vunpack.c.h.b16 %v601
        %v863 = vunpack.c.l.b16 %v602
        %v864 = vunpack.c.h.b16 %v602
        %v865 = vunpack.c.l.b16 %v603
        %v866 = vunpack.c.h.b16 %v603
        %v867 = vunpack.c.l.b16 %v604
        %v868 = vunpack.c.h.b16 %v604
        %v869 = vunpack.c.l.b16 %v605
        %v870 = vunpack.c.h.b16 %v605
        %v871 = vunpack.c.l.b16 %v606
        %v872 = vunpack.c.h.b16 %v606
        %v873 = vunpack.c.l.b16 %v607
        %v874 = vunpack.c.h.b16 %v607
        %v875 = vunpack.c.l.b16 %v608
        %v876 = vunpack.c.h.b16 %v608
        %v877 = vunpack.c.l.b16 %v609
        %v878 = vunpack.c.h.b16 %v609
        %v879 = vunpack.c.l.b16 %v610
        %v880 = vunpack.c.h.b16 %v610
        %v881 = vunpack.c.l.b16 %v611
        %v882 = vunpack.c.h.b16 %v611
        %v883 = vunpack.c.l.b16 %v612
        %v884 = vunpack.c.h.b16 %v612
        %v885 = vunpack.c.l.b16 %v613
        %v886 = vunpack.c.h.b16 %v613
        %v887 = vunpack.c.l.b16 %v614
        %v888 = vunpack.c.h.b16 %v614
        %v889 = vunpack.c.l.b16 %v615
        %v890 = vunpack.c.h.b16 %v615
        %v891 = vunpack.c.l.b16 %v616
        %v892 = vunpack.c.h.b16 %v616
        %v893 = vunpack.c.l.b16 %v617
        %v894 = vunpack.c.h.b16 %v617
        %v895 = vunpack.c.l.b16 %v618
        %v896 = vunpack.c.h.b16 %v618
        %v897 = vunpack.c.l.b16 %v619
        %v898 = vunpack.c.h.b16 %v619
        %v899 = vunpack.c.l.b16 %v620
        %v900 = vunpack.c.h.b16 %v620
        %v901 = vunpack.c.l.b16 %v621
        %v902 = vunpack.c.h.b16 %v621
        %v903 = vunpack.c.l.b16 %v622
        %v904 = vunpack.c.h.b16 %v622
        %v905 = vunpack.c.l.b16 %v623
        %v906 = vunpack.c.h.b16 %v623
        %v907 = vunpack.c.l.b16 %v624
        %v908 = vunpack.c.h.b16 %v624
        %v909 = vunpack.c.l.b16 %v625
        %v910 = vunpack.c.h.b16 %v625
        %v911 = vunpack.c.l.b16 %v626
        %v912 = vunpack.c.h.b16 %v626
        %v913 = vunpack.c.l.b16 %v627
        %v914 = vunpack.c.h.b16 %v627
        %v915 = vunpack.c.l.b16 %v628
        %v916 = vunpack.c.h.b16 %v628
        %v917 = vpack.c.b16 %v727, %v725
        %v918 = vpack.c.b16 %v728, %v726
        %v919 = vpack.c.b16 %v731, %v729
        %v920 = vpack.c.b16 %v732, %v730
        %v921 = vpack.c.b16 %v735, %v733
        %v922 = vpack.c.b16 %v736, %v734
        %v923 = vpack.c.b16 %v739, %v737
        %v924 = vpack.c.b16 %v740, %v738
        %v925 = vpack.c.b16 %v743, %v741
        %v926 = vpack.c.b16 %v744, %v742
        %v927 = vpack.c.b16 %v747, %v745
        %v928 = vpack.c.b16 %v748, %v746
        %v929 = vpack.c.b16 %v751, %v749
        %v930 = vpack.c.b16 %v752, %v750
        %v931 = vpack.c.b16 %v755, %v753
        %v932 = vpack.c.b16 %v756, %v754
        %v933 = vpack.c.b16 %v759, %v757
        %v934 = vpack.c.b16 %v760, %v758
        %v935 = vpack.c.b16 %v763, %v761
        %v936 = vpack.c.b16 %v764, %v762
        %v937 = vpack.c.b16 %v767, %v765
        %v938 = vpack.c.b16 %v768, %v766
        %v939 = vpack.c.b16 %v771, %v769
        %v940 = vpack.c.b16 %v772, %v770
        %v941 = vpack.c.b16 %v775, %v773
        %v942 = vpack.c.b16 %v776, %v774
        %v943 = vpack.c.b16 %v779, %v777
        %v944 = vpack.c.b16 %v780, %v778
        %v945 = vpack.c.b16 %v783, %v781
        %v946 = vpack.c.b16 %v784, %v782
        %v947 = vpack.c.b16 %v787, %v785
        %v948 = vpack.c.b16 %v788, %v786
        %v949 = vpack.c.b16 %v791, %v789
        %v950 = vpack.c.b16 %v792, %v790
        %v951 = vpack.c.b16 %v795, %v793
        %v952 = vpack.c.b16 %v796, %v794
        %v953 = vpack.c.b16 %v799, %v797
        %v954 = vpack.c.b16 %v800, %v798
        %v955 = vpack.c.b16 %v803, %v801
        %v956 = vpack.c.b16 %v804, %v802
        %v957 = vpack.c.b16 %v807, %v805
        %v958 = vpack.c.b16 %v808, %v806
        %v959 = vpack.c.b16 %v811, %v809
        %v960 = vpack.c.b16 %v812, %v810
        %v961 = vpack.c.b16 %v815, %v813
        %v962 = vpack.c.b16 %v816, %v814
        %v963 = vpack.c.b16 %v819, %v817
        %v964 = vpack.c.b16 %v820, %v818
        %v965 = vpack.c.b16 %v823, %v821
        %v966 = vpack.c.b16 %v824, %v822
        %v967 = vpack.c.b16 %v827, %v825
        %v968 = vpack.c.b16 %v828, %v826
        %v969 = vpack.c.b16 %v831, %v829
        %v970 = vpack.c.b16 %v832, %v830
        %v971 = vpack.c.b16 %v835, %v833
        %v972 = vpack.c.b16 %v836, %v834
        %v973 = vpack.c.b16 %v839, %v837
        %v974 = vpack.c.b16 %v840, %v838
        %v975 = vpack.c.b16 %v843, %v841
        %v976 = vpack.c.b16 %v844, %v842
        %v977 = vpack.c.b16 %v847, %v845
        %v978 = vpack.c.b16 %v848, %v846
        %v979 = vpack.c.b16 %v851, %v849
        %v980 = vpack.c.b16 %v852, %v850
        %v981 = vpack.c.b16 %v855, %v853
        %v982 = vpack.c.b16 %v856, %v854
        %v983 = vpack.c.b16 %v859, %v857
        %v984 = vpack.c.b16 %v860, %v858
        %v985 = vpack.c.b16 %v863, %v861
        %v986 = vpack.c.b16 %v864, %v862
        %v987 = vpack.c.b16 %v867, %v865
        %v988 = vpack.c.b16 %v868, %v866
        %v989 = vpack.c.b16 %v871, %v869
        %v990 = vpack.c.b16 %v872, %v870
        %v991 = vpack.c.b16 %v875, %v873
        %v992 = vpack.c.b16 %v876, %v874
        %v993 = vpack.c.b16 %v879, %v877
        %v994 = vpack.c.b16 %v880, %v878
        %v995 = vpack.c.b16 %v883, %v881
        %v996 = vpack.c.b16 %v884, %v882
        %v997 = vpack.c.b16 %v887, %v885
        %v998 = vpack.c.b16 %v888, %v886
        %v999 = vpack.c.b16 %v891, %v889
        %v1000 = vpack.c.b16 %v892, %v890
        %v1001 = vpack.c.b16 %v895, %v893
        %v1002 = vpack.c.b16 %v896, %v894
        %v1003 = vpack.c.b16 %v899, %v897
        %v1004 = vpack.c.b16 %v900, %v898
        %v1005 = vpack.c.b16 %v903, %v901
        %v1006 = vpack.c.b16 %v904, %v902
        %v1007 = vpack.c.b16 %v907, %v905
        %v1008 = vpack.c.b16 %v908, %v906
        %v1009 = vpack.c.b16 %v911, %v909
        %v1010 = vpack.c.b16 %v912, %v910
        %v1011 = vpack.c.b16 %v915, %v913
        %v1012 = vpack.c.b16 %v916, %v914
        %1109 = vmatpush.bf16.msra.mxu0 %v931
        %1110 = vmatpush.bf16.msra.mxu0 %v929
        %1111 = vmatpush.bf16.msra.mxu0 %v927
        %1112 = vmatpush.bf16.msra.mxu0 %v925
        %1113 = vmatpush.bf16.msra.mxu0 %v923
        %1114 = vmatpush.bf16.msra.mxu0 %v921
        %1115 = vmatpush.bf16.msra.mxu0 %v919
        %1116 = vmatpush.bf16.msra.mxu0 %v917
        %1117 = vmatmul.bf16.gmra.mxu0 %v437
        %v1118 = vpop.f32.mrf.mxu0
        %v1119 = vadd.f32 0.0, %v1118
        %v1120 = vpop.f32.mrf.mxu0
        %v1121 = vadd.f32 0.0, %v1120
        %1122 = vmatmul.bf16.gmra.mxu0 %v443
        %v1123 = vpop.f32.mrf.mxu0
        %v1124 = vadd.f32 0.0, %v1123
        %v1125 = vpop.f32.mrf.mxu0
        %v1126 = vadd.f32 0.0, %v1125
        %1127 = vmatmul.bf16.gmra.mxu0 %v449
        %v1128 = vpop.f32.mrf.mxu0
        %v1129 = vadd.f32 0.0, %v1128
        %v1130 = vpop.f32.mrf.mxu0
        %v1131 = vadd.f32 0.0, %v1130
        %1132 = vmatmul.bf16.gmra.mxu0 %v455
        %v1133 = vpop.f32.mrf.mxu0
        %v1134 = vadd.f32 0.0, %v1133
        %v1135 = vpop.f32.mrf.mxu0
        %v1136 = vadd.f32 0.0, %v1135
        %1137 = vmatmul.bf16.gmra.mxu0 %v461
        %v1138 = vpop.f32.mrf.mxu0
        %v1139 = vadd.f32 0.0, %v1138
        %v1140 = vpop.f32.mrf.mxu0
        %v1141 = vadd.f32 0.0, %v1140
        %1142 = vmatmul.bf16.gmra.mxu0 %v467
        %v1143 = vpop.f32.mrf.mxu0
        %v1144 = vadd.f32 0.0, %v1143
        %v1145 = vpop.f32.mrf.mxu0
        %v1146 = vadd.f32 0.0, %v1145
        %1147 = vmatmul.bf16.gmra.mxu0 %v473
        %v1148 = vpop.f32.mrf.mxu0
        %v1149 = vadd.f32 0.0, %v1148
        %v1150 = vpop.f32.mrf.mxu0
        %v1151 = vadd.f32 0.0, %v1150
        %1152 = vmatmul.bf16.gmra.mxu0 %v479
        %v1153 = vpop.f32.mrf.mxu0
        %v1154 = vadd.f32 0.0, %v1153
        %v1155 = vpop.f32.mrf.mxu0
        %v1156 = vadd.f32 0.0, %v1155
        %1157 = vmatmul.bf16.gmra.mxu0 %v485
        %v1158 = vpop.f32.mrf.mxu0
        %v1159 = vadd.f32 0.0, %v1158
        %v1160 = vpop.f32.mrf.mxu0
        %v1161 = vadd.f32 0.0, %v1160
        %1162 = vmatmul.bf16.gmra.mxu0 %v491
        %v1163 = vpop.f32.mrf.mxu0
        %v1164 = vadd.f32 0.0, %v1163
        %v1165 = vpop.f32.mrf.mxu0
        %v1166 = vadd.f32 0.0, %v1165
        %1167 = vmatmul.bf16.gmra.mxu0 %v497
        %v1168 = vpop.f32.mrf.mxu0
        %v1169 = vadd.f32 0.0, %v1168
        %v1170 = vpop.f32.mrf.mxu0
        %v1171 = vadd.f32 0.0, %v1170
        %1172 = vmatmul.bf16.gmra.mxu0 %v503
        %v1173 = vpop.f32.mrf.mxu0
        %v1174 = vadd.f32 0.0, %v1173
        %v1175 = vpop.f32.mrf.mxu0
        %v1176 = vadd.f32 0.0, %v1175
        %1177 = vmatmul.bf16.gmra.mxu0 %v509
        %v1178 = vpop.f32.mrf.mxu0
        %v1179 = vadd.f32 0.0, %v1178
        %v1180 = vpop.f32.mrf.mxu0
        %v1181 = vadd.f32 0.0, %v1180
        %1182 = vmatmul.bf16.gmra.mxu0 %v515
        %v1183 = vpop.f32.mrf.mxu0
        %v1184 = vadd.f32 0.0, %v1183
        %v1185 = vpop.f32.mrf.mxu0
        %v1186 = vadd.f32 0.0, %v1185
        %1187 = vmatmul.bf16.gmra.mxu0 %v521
        %v1188 = vpop.f32.mrf.mxu0
        %v1189 = vadd.f32 0.0, %v1188
        %v1190 = vpop.f32.mrf.mxu0
        %v1191 = vadd.f32 0.0, %v1190
        %1192 = vmatmul.bf16.gmra.mxu0 %v527
        %v1193 = vpop.f32.mrf.mxu0
        %v1194 = vadd.f32 0.0, %v1193
        %v1195 = vpop.f32.mrf.mxu0
        %v1196 = vadd.f32 0.0, %v1195
        %1197 = vdwg.mxu0
        %1198 = vmatpush.bf16.msra.mxu0 %v947
        %1199 = vmatpush.bf16.msra.mxu0 %v945
        %1200 = vmatpush.bf16.msra.mxu0 %v943
        %1201 = vmatpush.bf16.msra.mxu0 %v941
        %1202 = vmatpush.bf16.msra.mxu0 %v939
        %1203 = vmatpush.bf16.msra.mxu0 %v937
        %1204 = vmatpush.bf16.msra.mxu0 %v935
        %1205 = vmatpush.bf16.msra.mxu0 %v933
        %1206 = vmatmul.bf16.gmra.mxu0 %v438
        %v1207 = vpop.f32.mrf.mxu0
        %v1208 = vadd.f32 %v1119, %v1207
        %v1209 = vpop.f32.mrf.mxu0
        %v1210 = vadd.f32 %v1121, %v1209
        %1211 = vmatmul.bf16.gmra.mxu0 %v444
        %v1212 = vpop.f32.mrf.mxu0
        %v1213 = vadd.f32 %v1124, %v1212
        %v1214 = vpop.f32.mrf.mxu0
        %v1215 = vadd.f32 %v1126, %v1214
        %1216 = vmatmul.bf16.gmra.mxu0 %v450
        %v1217 = vpop.f32.mrf.mxu0
        %v1218 = vadd.f32 %v1129, %v1217
        %v1219 = vpop.f32.mrf.mxu0
        %v1220 = vadd.f32 %v1131, %v1219
        %1221 = vmatmul.bf16.gmra.mxu0 %v456
        %v1222 = vpop.f32.mrf.mxu0
        %v1223 = vadd.f32 %v1134, %v1222
        %v1224 = vpop.f32.mrf.mxu0
        %v1225 = vadd.f32 %v1136, %v1224
        %1226 = vmatmul.bf16.gmra.mxu0 %v462
        %v1227 = vpop.f32.mrf.mxu0
        %v1228 = vadd.f32 %v1139, %v1227
        %v1229 = vpop.f32.mrf.mxu0
        %v1230 = vadd.f32 %v1141, %v1229
        %1231 = vmatmul.bf16.gmra.mxu0 %v468
        %v1232 = vpop.f32.mrf.mxu0
        %v1233 = vadd.f32 %v1144, %v1232
        %v1234 = vpop.f32.mrf.mxu0
        %v1235 = vadd.f32 %v1146, %v1234
        %1236 = vmatmul.bf16.gmra.mxu0 %v474
        %v1237 = vpop.f32.mrf.mxu0
        %v1238 = vadd.f32 %v1149, %v1237
        %v1239 = vpop.f32.mrf.mxu0
        %v1240 = vadd.f32 %v1151, %v1239
        %1241 = vmatmul.bf16.gmra.mxu0 %v480
        %v1242 = vpop.f32.mrf.mxu0
        %v1243 = vadd.f32 %v1154, %v1242
        %v1244 = vpop.f32.mrf.mxu0
        %v1245 = vadd.f32 %v1156, %v1244
        %1246 = vmatmul.bf16.gmra.mxu0 %v486
        %v1247 = vpop.f32.mrf.mxu0
        %v1248 = vadd.f32 %v1159, %v1247
        %v1249 = vpop.f32.mrf.mxu0
        %v1250 = vadd.f32 %v1161, %v1249
        %1251 = vmatmul.bf16.gmra.mxu0 %v492
        %v1252 = vpop.f32.mrf.mxu0
        %v1253 = vadd.f32 %v1164, %v1252
        %v1254 = vpop.f32.mrf.mxu0
        %v1255 = vadd.f32 %v1166, %v1254
        %1256 = vmatmul.bf16.gmra.mxu0 %v498
        %v1257 = vpop.f32.mrf.mxu0
        %v1258 = vadd.f32 %v1169, %v1257
        %v1259 = vpop.f32.mrf.mxu0
        %v1260 = vadd.f32 %v1171, %v1259
        %1261 = vmatmul.bf16.gmra.mxu0 %v504
        %v1262 = vpop.f32.mrf.mxu0
        %v1263 = vadd.f32 %v1174, %v1262
        %v1264 = vpop.f32.mrf.mxu0
        %v1265 = vadd.f32 %v1176, %v1264
        %1266 = vmatmul.bf16.gmra.mxu0 %v510
        %v1267 = vpop.f32.mrf.mxu0
        %v1268 = vadd.f32 %v1179, %v1267
        %v1269 = vpop.f32.mrf.mxu0
        %v1270 = vadd.f32 %v1181, %v1269
        %1271 = vmatmul.bf16.gmra.mxu0 %v516
        %v1272 = vpop.f32.mrf.mxu0
        %v1273 = vadd.f32 %v1184, %v1272
        %v1274 = vpop.f32.mrf.mxu0
        %v1275 = vadd.f32 %v1186, %v1274
        %1276 = vmatmul.bf16.gmra.mxu0 %v522
        %v1277 = vpop.f32.mrf.mxu0
        %v1278 = vadd.f32 %v1189, %v1277
        %v1279 = vpop.f32.mrf.mxu0
        %v1280 = vadd.f32 %v1191, %v1279
        %1281 = vmatmul.bf16.gmra.mxu0 %v528
        %v1282 = vpop.f32.mrf.mxu0
        %v1283 = vadd.f32 %v1194, %v1282
        %v1284 = vpop.f32.mrf.mxu0
        %v1285 = vadd.f32 %v1196, %v1284
        %1286 = vdwg.mxu0
        %1287 = vmatpush.bf16.msra.mxu0 %v963
        %1288 = vmatpush.bf16.msra.mxu0 %v961
        %1289 = vmatpush.bf16.msra.mxu0 %v959
        %1290 = vmatpush.bf16.msra.mxu0 %v957
        %1291 = vmatpush.bf16.msra.mxu0 %v955
        %1292 = vmatpush.bf16.msra.mxu0 %v953
        %1293 = vmatpush.bf16.msra.mxu0 %v951
        %1294 = vmatpush.bf16.msra.mxu0 %v949
        %1295 = vmatmul.bf16.gmra.mxu0 %v439
        %v1296 = vpop.f32.mrf.mxu0
        %v1297 = vadd.f32 %v1208, %v1296
        %v1298 = vpop.f32.mrf.mxu0
        %v1299 = vadd.f32 %v1210, %v1298
        %1300 = vmatmul.bf16.gmra.mxu0 %v445
        %v1301 = vpop.f32.mrf.mxu0
        %v1302 = vadd.f32 %v1213, %v1301
        %v1303 = vpop.f32.mrf.mxu0
        %v1304 = vadd.f32 %v1215, %v1303
        %1305 = vmatmul.bf16.gmra.mxu0 %v451
        %v1306 = vpop.f32.mrf.mxu0
        %v1307 = vadd.f32 %v1218, %v1306
        %v1308 = vpop.f32.mrf.mxu0
        %v1309 = vadd.f32 %v1220, %v1308
        %1310 = vmatmul.bf16.gmra.mxu0 %v457
        %v1311 = vpop.f32.mrf.mxu0
        %v1312 = vadd.f32 %v1223, %v1311
        %v1313 = vpop.f32.mrf.mxu0
        %v1314 = vadd.f32 %v1225, %v1313
        %1315 = vmatmul.bf16.gmra.mxu0 %v463
        %v1316 = vpop.f32.mrf.mxu0
        %v1317 = vadd.f32 %v1228, %v1316
        %v1318 = vpop.f32.mrf.mxu0
        %v1319 = vadd.f32 %v1230, %v1318
        %1320 = vmatmul.bf16.gmra.mxu0 %v469
        %v1321 = vpop.f32.mrf.mxu0
        %v1322 = vadd.f32 %v1233, %v1321
        %v1323 = vpop.f32.mrf.mxu0
        %v1324 = vadd.f32 %v1235, %v1323
        %1325 = vmatmul.bf16.gmra.mxu0 %v475
        %v1326 = vpop.f32.mrf.mxu0
        %v1327 = vadd.f32 %v1238, %v1326
        %v1328 = vpop.f32.mrf.mxu0
        %v1329 = vadd.f32 %v1240, %v1328
        %1330 = vmatmul.bf16.gmra.mxu0 %v481
        %v1331 = vpop.f32.mrf.mxu0
        %v1332 = vadd.f32 %v1243, %v1331
        %v1333 = vpop.f32.mrf.mxu0
        %v1334 = vadd.f32 %v1245, %v1333
        %1335 = vmatmul.bf16.gmra.mxu0 %v487
        %v1336 = vpop.f32.mrf.mxu0
        %v1337 = vadd.f32 %v1248, %v1336
        %v1338 = vpop.f32.mrf.mxu0
        %v1339 = vadd.f32 %v1250, %v1338
        %1340 = vmatmul.bf16.gmra.mxu0 %v493
        %v1341 = vpop.f32.mrf.mxu0
        %v1342 = vadd.f32 %v1253, %v1341
        %v1343 = vpop.f32.mrf.mxu0
        %v1344 = vadd.f32 %v1255, %v1343
        %1345 = vmatmul.bf16.gmra.mxu0 %v499
        %v1346 = vpop.f32.mrf.mxu0
        %v1347 = vadd.f32 %v1258, %v1346
        %v1348 = vpop.f32.mrf.mxu0
        %v1349 = vadd.f32 %v1260, %v1348
        %1350 = vmatmul.bf16.gmra.mxu0 %v505
        %v1351 = vpop.f32.mrf.mxu0
        %v1352 = vadd.f32 %v1263, %v1351
        %v1353 = vpop.f32.mrf.mxu0
        %v1354 = vadd.f32 %v1265, %v1353
        %1355 = vmatmul.bf16.gmra.mxu0 %v511
        %v1356 = vpop.f32.mrf.mxu0
        %v1357 = vadd.f32 %v1268, %v1356
        %v1358 = vpop.f32.mrf.mxu0
        %v1359 = vadd.f32 %v1270, %v1358
        %1360 = vmatmul.bf16.gmra.mxu0 %v517
        %v1361 = vpop.f32.mrf.mxu0
        %v1362 = vadd.f32 %v1273, %v1361
        %v1363 = vpop.f32.mrf.mxu0
        %v1364 = vadd.f32 %v1275, %v1363
        %1365 = vmatmul.bf16.gmra.mxu0 %v523
        %v1366 = vpop.f32.mrf.mxu0
        %v1367 = vadd.f32 %v1278, %v1366
        %v1368 = vpop.f32.mrf.mxu0
        %v1369 = vadd.f32 %v1280, %v1368
        %1370 = vmatmul.bf16.gmra.mxu0 %v529
        %v1371 = vpop.f32.mrf.mxu0
        %v1372 = vadd.f32 %v1283, %v1371
        %v1373 = vpop.f32.mrf.mxu0
        %v1374 = vadd.f32 %v1285, %v1373
        %1375 = vdwg.mxu0
        %1376 = vmatpush.bf16.msra.mxu0 %v979
        %1377 = vmatpush.bf16.msra.mxu0 %v977
        %1378 = vmatpush.bf16.msra.mxu0 %v975
        %1379 = vmatpush.bf16.msra.mxu0 %v973
        %1380 = vmatpush.bf16.msra.mxu0 %v971
        %1381 = vmatpush.bf16.msra.mxu0 %v969
        %1382 = vmatpush.bf16.msra.mxu0 %v967
        %1383 = vmatpush.bf16.msra.mxu0 %v965
        %1384 = vmatmul.bf16.gmra.mxu0 %v440
        %v1385 = vpop.f32.mrf.mxu0
        %v1386 = vadd.f32 %v1297, %v1385
        %v1387 = vpop.f32.mrf.mxu0
        %v1388 = vadd.f32 %v1299, %v1387
        %1389 = vmatmul.bf16.gmra.mxu0 %v446
        %v1390 = vpop.f32.mrf.mxu0
        %v1391 = vadd.f32 %v1302, %v1390
        %v1392 = vpop.f32.mrf.mxu0
        %v1393 = vadd.f32 %v1304, %v1392
        %1394 = vmatmul.bf16.gmra.mxu0 %v452
        %v1395 = vpop.f32.mrf.mxu0
        %v1396 = vadd.f32 %v1307, %v1395
        %v1397 = vpop.f32.mrf.mxu0
        %v1398 = vadd.f32 %v1309, %v1397
        %1399 = vmatmul.bf16.gmra.mxu0 %v458
        %v1400 = vpop.f32.mrf.mxu0
        %v1401 = vadd.f32 %v1312, %v1400
        %v1402 = vpop.f32.mrf.mxu0
        %v1403 = vadd.f32 %v1314, %v1402
        %1404 = vmatmul.bf16.gmra.mxu0 %v464
        %v1405 = vpop.f32.mrf.mxu0
        %v1406 = vadd.f32 %v1317, %v1405
        %v1407 = vpop.f32.mrf.mxu0
        %v1408 = vadd.f32 %v1319, %v1407
        %1409 = vmatmul.bf16.gmra.mxu0 %v470
        %v1410 = vpop.f32.mrf.mxu0
        %v1411 = vadd.f32 %v1322, %v1410
        %v1412 = vpop.f32.mrf.mxu0
        %v1413 = vadd.f32 %v1324, %v1412
        %1414 = vmatmul.bf16.gmra.mxu0 %v476
        %v1415 = vpop.f32.mrf.mxu0
        %v1416 = vadd.f32 %v1327, %v1415
        %v1417 = vpop.f32.mrf.mxu0
        %v1418 = vadd.f32 %v1329, %v1417
        %1419 = vmatmul.bf16.gmra.mxu0 %v482
        %v1420 = vpop.f32.mrf.mxu0
        %v1421 = vadd.f32 %v1332, %v1420
        %v1422 = vpop.f32.mrf.mxu0
        %v1423 = vadd.f32 %v1334, %v1422
        %1424 = vmatmul.bf16.gmra.mxu0 %v488
        %v1425 = vpop.f32.mrf.mxu0
        %v1426 = vadd.f32 %v1337, %v1425
        %v1427 = vpop.f32.mrf.mxu0
        %v1428 = vadd.f32 %v1339, %v1427
        %1429 = vmatmul.bf16.gmra.mxu0 %v494
        %v1430 = vpop.f32.mrf.mxu0
        %v1431 = vadd.f32 %v1342, %v1430
        %v1432 = vpop.f32.mrf.mxu0
        %v1433 = vadd.f32 %v1344, %v1432
        %1434 = vmatmul.bf16.gmra.mxu0 %v500
        %v1435 = vpop.f32.mrf.mxu0
        %v1436 = vadd.f32 %v1347, %v1435
        %v1437 = vpop.f32.mrf.mxu0
        %v1438 = vadd.f32 %v1349, %v1437
        %1439 = vmatmul.bf16.gmra.mxu0 %v506
        %v1440 = vpop.f32.mrf.mxu0
        %v1441 = vadd.f32 %v1352, %v1440
        %v1442 = vpop.f32.mrf.mxu0
        %v1443 = vadd.f32 %v1354, %v1442
        %1444 = vmatmul.bf16.gmra.mxu0 %v512
        %v1445 = vpop.f32.mrf.mxu0
        %v1446 = vadd.f32 %v1357, %v1445
        %v1447 = vpop.f32.mrf.mxu0
        %v1448 = vadd.f32 %v1359, %v1447
        %1449 = vmatmul.bf16.gmra.mxu0 %v518
        %v1450 = vpop.f32.mrf.mxu0
        %v1451 = vadd.f32 %v1362, %v1450
        %v1452 = vpop.f32.mrf.mxu0
        %v1453 = vadd.f32 %v1364, %v1452
        %1454 = vmatmul.bf16.gmra.mxu0 %v524
        %v1455 = vpop.f32.mrf.mxu0
        %v1456 = vadd.f32 %v1367, %v1455
        %v1457 = vpop.f32.mrf.mxu0
        %v1458 = vadd.f32 %v1369, %v1457
        %1459 = vmatmul.bf16.gmra.mxu0 %v530
        %v1460 = vpop.f32.mrf.mxu0
        %v1461 = vadd.f32 %v1372, %v1460
        %v1462 = vpop.f32.mrf.mxu0
        %v1463 = vadd.f32 %v1374, %v1462
        %1464 = vdwg.mxu0
        %1465 = vmatpush.bf16.msra.mxu0 %v995
        %1466 = vmatpush.bf16.msra.mxu0 %v993
        %1467 = vmatpush.bf16.msra.mxu0 %v991
        %1468 = vmatpush.bf16.msra.mxu0 %v989
        %1469 = vmatpush.bf16.msra.mxu0 %v987
        %1470 = vmatpush.bf16.msra.mxu0 %v985
        %1471 = vmatpush.bf16.msra.mxu0 %v983
        %1472 = vmatpush.bf16.msra.mxu0 %v981
        %1473 = vmatmul.bf16.gmra.mxu0 %v441
        %v1474 = vpop.f32.mrf.mxu0
        %v1475 = vadd.f32 %v1386, %v1474
        %v1476 = vpop.f32.mrf.mxu0
        %v1477 = vadd.f32 %v1388, %v1476
        %1478 = vmatmul.bf16.gmra.mxu0 %v447
        %v1479 = vpop.f32.mrf.mxu0
        %v1480 = vadd.f32 %v1391, %v1479
        %v1481 = vpop.f32.mrf.mxu0
        %v1482 = vadd.f32 %v1393, %v1481
        %1483 = vmatmul.bf16.gmra.mxu0 %v453
        %v1484 = vpop.f32.mrf.mxu0
        %v1485 = vadd.f32 %v1396, %v1484
        %v1486 = vpop.f32.mrf.mxu0
        %v1487 = vadd.f32 %v1398, %v1486
        %1488 = vmatmul.bf16.gmra.mxu0 %v459
        %v1489 = vpop.f32.mrf.mxu0
        %v1490 = vadd.f32 %v1401, %v1489
        %v1491 = vpop.f32.mrf.mxu0
        %v1492 = vadd.f32 %v1403, %v1491
        %1493 = vmatmul.bf16.gmra.mxu0 %v465
        %v1494 = vpop.f32.mrf.mxu0
        %v1495 = vadd.f32 %v1406, %v1494
        %v1496 = vpop.f32.mrf.mxu0
        %v1497 = vadd.f32 %v1408, %v1496
        %1498 = vmatmul.bf16.gmra.mxu0 %v471
        %v1499 = vpop.f32.mrf.mxu0
        %v1500 = vadd.f32 %v1411, %v1499
        %v1501 = vpop.f32.mrf.mxu0
        %v1502 = vadd.f32 %v1413, %v1501
        %1503 = vmatmul.bf16.gmra.mxu0 %v477
        %v1504 = vpop.f32.mrf.mxu0
        %v1505 = vadd.f32 %v1416, %v1504
        %v1506 = vpop.f32.mrf.mxu0
        %v1507 = vadd.f32 %v1418, %v1506
        %1508 = vmatmul.bf16.gmra.mxu0 %v483
        %v1509 = vpop.f32.mrf.mxu0
        %v1510 = vadd.f32 %v1421, %v1509
        %v1511 = vpop.f32.mrf.mxu0
        %v1512 = vadd.f32 %v1423, %v1511
        %1513 = vmatmul.bf16.gmra.mxu0 %v489
        %v1514 = vpop.f32.mrf.mxu0
        %v1515 = vadd.f32 %v1426, %v1514
        %v1516 = vpop.f32.mrf.mxu0
        %v1517 = vadd.f32 %v1428, %v1516
        %1518 = vmatmul.bf16.gmra.mxu0 %v495
        %v1519 = vpop.f32.mrf.mxu0
        %v1520 = vadd.f32 %v1431, %v1519
        %v1521 = vpop.f32.mrf.mxu0
        %v1522 = vadd.f32 %v1433, %v1521
        %1523 = vmatmul.bf16.gmra.mxu0 %v501
        %v1524 = vpop.f32.mrf.mxu0
        %v1525 = vadd.f32 %v1436, %v1524
        %v1526 = vpop.f32.mrf.mxu0
        %v1527 = vadd.f32 %v1438, %v1526
        %1528 = vmatmul.bf16.gmra.mxu0 %v507
        %v1529 = vpop.f32.mrf.mxu0
        %v1530 = vadd.f32 %v1441, %v1529
        %v1531 = vpop.f32.mrf.mxu0
        %v1532 = vadd.f32 %v1443, %v1531
        %1533 = vmatmul.bf16.gmra.mxu0 %v513
        %v1534 = vpop.f32.mrf.mxu0
        %v1535 = vadd.f32 %v1446, %v1534
        %v1536 = vpop.f32.mrf.mxu0
        %v1537 = vadd.f32 %v1448, %v1536
        %1538 = vmatmul.bf16.gmra.mxu0 %v519
        %v1539 = vpop.f32.mrf.mxu0
        %v1540 = vadd.f32 %v1451, %v1539
        %v1541 = vpop.f32.mrf.mxu0
        %v1542 = vadd.f32 %v1453, %v1541
        %1543 = vmatmul.bf16.gmra.mxu0 %v525
        %v1544 = vpop.f32.mrf.mxu0
        %v1545 = vadd.f32 %v1456, %v1544
        %v1546 = vpop.f32.mrf.mxu0
        %v1547 = vadd.f32 %v1458, %v1546
        %1548 = vmatmul.bf16.gmra.mxu0 %v531
        %v1549 = vpop.f32.mrf.mxu0
        %v1550 = vadd.f32 %v1461, %v1549
        %v1551 = vpop.f32.mrf.mxu0
        %v1552 = vadd.f32 %v1463, %v1551
        %1553 = vdwg.mxu0
        %1554 = vmatpush.bf16.msra.mxu0 %v1011
        %1555 = vmatpush.bf16.msra.mxu0 %v1009
        %1556 = vmatpush.bf16.msra.mxu0 %v1007
        %1557 = vmatpush.bf16.msra.mxu0 %v1005
        %1558 = vmatpush.bf16.msra.mxu0 %v1003
        %1559 = vmatpush.bf16.msra.mxu0 %v1001
        %1560 = vmatpush.bf16.msra.mxu0 %v999
        %1561 = vmatpush.bf16.msra.mxu0 %v997
        %1562 = vmatmul.bf16.gmra.mxu0 %v442
        %v1563 = vpop.f32.mrf.mxu0
        %v1564 = vadd.f32 %v1475, %v1563
        %v1565 = vpop.f32.mrf.mxu0
        %v1566 = vadd.f32 %v1477, %v1565
        %1567 = vmatmul.bf16.gmra.mxu0 %v448
        %v1568 = vpop.f32.mrf.mxu0
        %v1569 = vadd.f32 %v1480, %v1568
        %v1570 = vpop.f32.mrf.mxu0
        %v1571 = vadd.f32 %v1482, %v1570
        %1572 = vmatmul.bf16.gmra.mxu0 %v454
        %v1573 = vpop.f32.mrf.mxu0
        %v1574 = vadd.f32 %v1485, %v1573
        %v1575 = vpop.f32.mrf.mxu0
        %v1576 = vadd.f32 %v1487, %v1575
        %1577 = vmatmul.bf16.gmra.mxu0 %v460
        %v1578 = vpop.f32.mrf.mxu0
        %v1579 = vadd.f32 %v1490, %v1578
        %v1580 = vpop.f32.mrf.mxu0
        %v1581 = vadd.f32 %v1492, %v1580
        %1582 = vmatmul.bf16.gmra.mxu0 %v466
        %v1583 = vpop.f32.mrf.mxu0
        %v1584 = vadd.f32 %v1495, %v1583
        %v1585 = vpop.f32.mrf.mxu0
        %v1586 = vadd.f32 %v1497, %v1585
        %1587 = vmatmul.bf16.gmra.mxu0 %v472
        %v1588 = vpop.f32.mrf.mxu0
        %v1589 = vadd.f32 %v1500, %v1588
        %v1590 = vpop.f32.mrf.mxu0
        %v1591 = vadd.f32 %v1502, %v1590
        %1592 = vmatmul.bf16.gmra.mxu0 %v478
        %v1593 = vpop.f32.mrf.mxu0
        %v1594 = vadd.f32 %v1505, %v1593
        %v1595 = vpop.f32.mrf.mxu0
        %v1596 = vadd.f32 %v1507, %v1595
        %1597 = vmatmul.bf16.gmra.mxu0 %v484
        %v1598 = vpop.f32.mrf.mxu0
        %v1599 = vadd.f32 %v1510, %v1598
        %v1600 = vpop.f32.mrf.mxu0
        %v1601 = vadd.f32 %v1512, %v1600
        %1602 = vmatmul.bf16.gmra.mxu0 %v490
        %v1603 = vpop.f32.mrf.mxu0
        %v1604 = vadd.f32 %v1515, %v1603
        %v1605 = vpop.f32.mrf.mxu0
        %v1606 = vadd.f32 %v1517, %v1605
        %1607 = vmatmul.bf16.gmra.mxu0 %v496
        %v1608 = vpop.f32.mrf.mxu0
        %v1609 = vadd.f32 %v1520, %v1608
        %v1610 = vpop.f32.mrf.mxu0
        %v1611 = vadd.f32 %v1522, %v1610
        %1612 = vmatmul.bf16.gmra.mxu0 %v502
        %v1613 = vpop.f32.mrf.mxu0
        %v1614 = vadd.f32 %v1525, %v1613
        %v1615 = vpop.f32.mrf.mxu0
        %v1616 = vadd.f32 %v1527, %v1615
        %1617 = vmatmul.bf16.gmra.mxu0 %v508
        %v1618 = vpop.f32.mrf.mxu0
        %v1619 = vadd.f32 %v1530, %v1618
        %v1620 = vpop.f32.mrf.mxu0
        %v1621 = vadd.f32 %v1532, %v1620
        %1622 = vmatmul.bf16.gmra.mxu0 %v514
        %v1623 = vpop.f32.mrf.mxu0
        %v1624 = vadd.f32 %v1535, %v1623
        %v1625 = vpop.f32.mrf.mxu0
        %v1626 = vadd.f32 %v1537, %v1625
        %1627 = vmatmul.bf16.gmra.mxu0 %v520
        %v1628 = vpop.f32.mrf.mxu0
        %v1629 = vadd.f32 %v1540, %v1628
        %v1630 = vpop.f32.mrf.mxu0
        %v1631 = vadd.f32 %v1542, %v1630
        %1632 = vmatmul.bf16.gmra.mxu0 %v526
        %v1633 = vpop.f32.mrf.mxu0
        %v1634 = vadd.f32 %v1545, %v1633
        %v1635 = vpop.f32.mrf.mxu0
        %v1636 = vadd.f32 %v1547, %v1635
        %1637 = vmatmul.bf16.gmra.mxu0 %v532
        %v1638 = vpop.f32.mrf.mxu0
        %v1639 = vadd.f32 %v1550, %v1638
        %v1640 = vpop.f32.mrf.mxu0
        %v1641 = vadd.f32 %v1552, %v1640
        %1642 = vdwg.mxu0
        %1643 = vmatpush.bf16.msra.mxu0 %v932
        %1644 = vmatpush.bf16.msra.mxu0 %v930
        %1645 = vmatpush.bf16.msra.mxu0 %v928
        %1646 = vmatpush.bf16.msra.mxu0 %v926
        %1647 = vmatpush.bf16.msra.mxu0 %v924
        %1648 = vmatpush.bf16.msra.mxu0 %v922
        %1649 = vmatpush.bf16.msra.mxu0 %v920
        %1650 = vmatpush.bf16.msra.mxu0 %v918
        %1651 = vmatmul.bf16.gmra.mxu0 %v437
        %v1652 = vpop.f32.mrf.mxu0
        %v1653 = vadd.f32 0.0, %v1652
        %v1654 = vpop.f32.mrf.mxu0
        %v1655 = vadd.f32 0.0, %v1654
        %1656 = vmatmul.bf16.gmra.mxu0 %v443
        %v1657 = vpop.f32.mrf.mxu0
        %v1658 = vadd.f32 0.0, %v1657
        %v1659 = vpop.f32.mrf.mxu0
        %v1660 = vadd.f32 0.0, %v1659
        %1661 = vmatmul.bf16.gmra.mxu0 %v449
        %v1662 = vpop.f32.mrf.mxu0
        %v1663 = vadd.f32 0.0, %v1662
        %v1664 = vpop.f32.mrf.mxu0
        %v1665 = vadd.f32 0.0, %v1664
        %1666 = vmatmul.bf16.gmra.mxu0 %v455
        %v1667 = vpop.f32.mrf.mxu0
        %v1668 = vadd.f32 0.0, %v1667
        %v1669 = vpop.f32.mrf.mxu0
        %v1670 = vadd.f32 0.0, %v1669
        %1671 = vmatmul.bf16.gmra.mxu0 %v461
        %v1672 = vpop.f32.mrf.mxu0
        %v1673 = vadd.f32 0.0, %v1672
        %v1674 = vpop.f32.mrf.mxu0
        %v1675 = vadd.f32 0.0, %v1674
        %1676 = vmatmul.bf16.gmra.mxu0 %v467
        %v1677 = vpop.f32.mrf.mxu0
        %v1678 = vadd.f32 0.0, %v1677
        %v1679 = vpop.f32.mrf.mxu0
        %v1680 = vadd.f32 0.0, %v1679
        %1681 = vmatmul.bf16.gmra.mxu0 %v473
        %v1682 = vpop.f32.mrf.mxu0
        %v1683 = vadd.f32 0.0, %v1682
        %v1684 = vpop.f32.mrf.mxu0
        %v1685 = vadd.f32 0.0, %v1684
        %1686 = vmatmul.bf16.gmra.mxu0 %v479
        %v1687 = vpop.f32.mrf.mxu0
        %v1688 = vadd.f32 0.0, %v1687
        %v1689 = vpop.f32.mrf.mxu0
        %v1690 = vadd.f32 0.0, %v1689
        %1691 = vmatmul.bf16.gmra.mxu0 %v485
        %v1692 = vpop.f32.mrf.mxu0
        %v1693 = vadd.f32 0.0, %v1692
        %v1694 = vpop.f32.mrf.mxu0
        %v1695 = vadd.f32 0.0, %v1694
        %1696 = vmatmul.bf16.gmra.mxu0 %v491
        %v1697 = vpop.f32.mrf.mxu0
        %v1698 = vadd.f32 0.0, %v1697
        %v1699 = vpop.f32.mrf.mxu0
        %v1700 = vadd.f32 0.0, %v1699
        %1701 = vmatmul.bf16.gmra.mxu0 %v497
        %v1702 = vpop.f32.mrf.mxu0
        %v1703 = vadd.f32 0.0, %v1702
        %v1704 = vpop.f32.mrf.mxu0
        %v1705 = vadd.f32 0.0, %v1704
        %1706 = vmatmul.bf16.gmra.mxu0 %v503
        %v1707 = vpop.f32.mrf.mxu0
        %v1708 = vadd.f32 0.0, %v1707
        %v1709 = vpop.f32.mrf.mxu0
        %v1710 = vadd.f32 0.0, %v1709
        %1711 = vmatmul.bf16.gmra.mxu0 %v509
        %v1712 = vpop.f32.mrf.mxu0
        %v1713 = vadd.f32 0.0, %v1712
        %v1714 = vpop.f32.mrf.mxu0
        %v1715 = vadd.f32 0.0, %v1714
        %1716 = vmatmul.bf16.gmra.mxu0 %v515
        %v1717 = vpop.f32.mrf.mxu0
        %v1718 = vadd.f32 0.0, %v1717
        %v1719 = vpop.f32.mrf.mxu0
        %v1720 = vadd.f32 0.0, %v1719
        %1721 = vmatmul.bf16.gmra.mxu0 %v521
        %v1722 = vpop.f32.mrf.mxu0
        %v1723 = vadd.f32 0.0, %v1722
        %v1724 = vpop.f32.mrf.mxu0
        %v1725 = vadd.f32 0.0, %v1724
        %1726 = vmatmul.bf16.gmra.mxu0 %v527
        %v1727 = vpop.f32.mrf.mxu0
        %v1728 = vadd.f32 0.0, %v1727
        %v1729 = vpop.f32.mrf.mxu0
        %v1730 = vadd.f32 0.0, %v1729
        %1731 = vdwg.mxu0
        %1732 = vmatpush.bf16.msra.mxu0 %v948
        %1733 = vmatpush.bf16.msra.mxu0 %v946
        %1734 = vmatpush.bf16.msra.mxu0 %v944
        %1735 = vmatpush.bf16.msra.mxu0 %v942
        %1736 = vmatpush.bf16.msra.mxu0 %v940
        %1737 = vmatpush.bf16.msra.mxu0 %v938
        %1738 = vmatpush.bf16.msra.mxu0 %v936
        %1739 = vmatpush.bf16.msra.mxu0 %v934
        %1740 = vmatmul.bf16.gmra.mxu0 %v438
        %v1741 = vpop.f32.mrf.mxu0
        %v1742 = vadd.f32 %v1653, %v1741
        %v1743 = vpop.f32.mrf.mxu0
        %v1744 = vadd.f32 %v1655, %v1743
        %1745 = vmatmul.bf16.gmra.mxu0 %v444
        %v1746 = vpop.f32.mrf.mxu0
        %v1747 = vadd.f32 %v1658, %v1746
        %v1748 = vpop.f32.mrf.mxu0
        %v1749 = vadd.f32 %v1660, %v1748
        %1750 = vmatmul.bf16.gmra.mxu0 %v450
        %v1751 = vpop.f32.mrf.mxu0
        %v1752 = vadd.f32 %v1663, %v1751
        %v1753 = vpop.f32.mrf.mxu0
        %v1754 = vadd.f32 %v1665, %v1753
        %1755 = vmatmul.bf16.gmra.mxu0 %v456
        %v1756 = vpop.f32.mrf.mxu0
        %v1757 = vadd.f32 %v1668, %v1756
        %v1758 = vpop.f32.mrf.mxu0
        %v1759 = vadd.f32 %v1670, %v1758
        %1760 = vmatmul.bf16.gmra.mxu0 %v462
        %v1761 = vpop.f32.mrf.mxu0
        %v1762 = vadd.f32 %v1673, %v1761
        %v1763 = vpop.f32.mrf.mxu0
        %v1764 = vadd.f32 %v1675, %v1763
        %1765 = vmatmul.bf16.gmra.mxu0 %v468
        %v1766 = vpop.f32.mrf.mxu0
        %v1767 = vadd.f32 %v1678, %v1766
        %v1768 = vpop.f32.mrf.mxu0
        %v1769 = vadd.f32 %v1680, %v1768
        %1770 = vmatmul.bf16.gmra.mxu0 %v474
        %v1771 = vpop.f32.mrf.mxu0
        %v1772 = vadd.f32 %v1683, %v1771
        %v1773 = vpop.f32.mrf.mxu0
        %v1774 = vadd.f32 %v1685, %v1773
        %1775 = vmatmul.bf16.gmra.mxu0 %v480
        %v1776 = vpop.f32.mrf.mxu0
        %v1777 = vadd.f32 %v1688, %v1776
        %v1778 = vpop.f32.mrf.mxu0
        %v1779 = vadd.f32 %v1690, %v1778
        %1780 = vmatmul.bf16.gmra.mxu0 %v486
        %v1781 = vpop.f32.mrf.mxu0
        %v1782 = vadd.f32 %v1693, %v1781
        %v1783 = vpop.f32.mrf.mxu0
        %v1784 = vadd.f32 %v1695, %v1783
        %1785 = vmatmul.bf16.gmra.mxu0 %v492
        %v1786 = vpop.f32.mrf.mxu0
        %v1787 = vadd.f32 %v1698, %v1786
        %v1788 = vpop.f32.mrf.mxu0
        %v1789 = vadd.f32 %v1700, %v1788
        %1790 = vmatmul.bf16.gmra.mxu0 %v498
        %v1791 = vpop.f32.mrf.mxu0
        %v1792 = vadd.f32 %v1703, %v1791
        %v1793 = vpop.f32.mrf.mxu0
        %v1794 = vadd.f32 %v1705, %v1793
        %1795 = vmatmul.bf16.gmra.mxu0 %v504
        %v1796 = vpop.f32.mrf.mxu0
        %v1797 = vadd.f32 %v1708, %v1796
        %v1798 = vpop.f32.mrf.mxu0
        %v1799 = vadd.f32 %v1710, %v1798
        %1800 = vmatmul.bf16.gmra.mxu0 %v510
        %v1801 = vpop.f32.mrf.mxu0
        %v1802 = vadd.f32 %v1713, %v1801
        %v1803 = vpop.f32.mrf.mxu0
        %v1804 = vadd.f32 %v1715, %v1803
        %1805 = vmatmul.bf16.gmra.mxu0 %v516
        %v1806 = vpop.f32.mrf.mxu0
        %v1807 = vadd.f32 %v1718, %v1806
        %v1808 = vpop.f32.mrf.mxu0
        %v1809 = vadd.f32 %v1720, %v1808
        %1810 = vmatmul.bf16.gmra.mxu0 %v522
        %v1811 = vpop.f32.mrf.mxu0
        %v1812 = vadd.f32 %v1723, %v1811
        %v1813 = vpop.f32.mrf.mxu0
        %v1814 = vadd.f32 %v1725, %v1813
        %1815 = vmatmul.bf16.gmra.mxu0 %v528
        %v1816 = vpop.f32.mrf.mxu0
        %v1817 = vadd.f32 %v1728, %v1816
        %v1818 = vpop.f32.mrf.mxu0
        %v1819 = vadd.f32 %v1730, %v1818
        %1820 = vdwg.mxu0
        %1821 = vmatpush.bf16.msra.mxu0 %v964
        %1822 = vmatpush.bf16.msra.mxu0 %v962
        %1823 = vmatpush.bf16.msra.mxu0 %v960
        %1824 = vmatpush.bf16.msra.mxu0 %v958
        %1825 = vmatpush.bf16.msra.mxu0 %v956
        %1826 = vmatpush.bf16.msra.mxu0 %v954
        %1827 = vmatpush.bf16.msra.mxu0 %v952
        %1828 = vmatpush.bf16.msra.mxu0 %v950
        %1829 = vmatmul.bf16.gmra.mxu0 %v439
        %v1830 = vpop.f32.mrf.mxu0
        %v1831 = vadd.f32 %v1742, %v1830
        %v1832 = vpop.f32.mrf.mxu0
        %v1833 = vadd.f32 %v1744, %v1832
        %1834 = vmatmul.bf16.gmra.mxu0 %v445
        %v1835 = vpop.f32.mrf.mxu0
        %v1836 = vadd.f32 %v1747, %v1835
        %v1837 = vpop.f32.mrf.mxu0
        %v1838 = vadd.f32 %v1749, %v1837
        %1839 = vmatmul.bf16.gmra.mxu0 %v451
        %v1840 = vpop.f32.mrf.mxu0
        %v1841 = vadd.f32 %v1752, %v1840
        %v1842 = vpop.f32.mrf.mxu0
        %v1843 = vadd.f32 %v1754, %v1842
        %1844 = vmatmul.bf16.gmra.mxu0 %v457
        %v1845 = vpop.f32.mrf.mxu0
        %v1846 = vadd.f32 %v1757, %v1845
        %v1847 = vpop.f32.mrf.mxu0
        %v1848 = vadd.f32 %v1759, %v1847
        %1849 = vmatmul.bf16.gmra.mxu0 %v463
        %v1850 = vpop.f32.mrf.mxu0
        %v1851 = vadd.f32 %v1762, %v1850
        %v1852 = vpop.f32.mrf.mxu0
        %v1853 = vadd.f32 %v1764, %v1852
        %1854 = vmatmul.bf16.gmra.mxu0 %v469
        %v1855 = vpop.f32.mrf.mxu0
        %v1856 = vadd.f32 %v1767, %v1855
        %v1857 = vpop.f32.mrf.mxu0
        %v1858 = vadd.f32 %v1769, %v1857
        %1859 = vmatmul.bf16.gmra.mxu0 %v475
        %v1860 = vpop.f32.mrf.mxu0
        %v1861 = vadd.f32 %v1772, %v1860
        %v1862 = vpop.f32.mrf.mxu0
        %v1863 = vadd.f32 %v1774, %v1862
        %1864 = vmatmul.bf16.gmra.mxu0 %v481
        %v1865 = vpop.f32.mrf.mxu0
        %v1866 = vadd.f32 %v1777, %v1865
        %v1867 = vpop.f32.mrf.mxu0
        %v1868 = vadd.f32 %v1779, %v1867
        %1869 = vmatmul.bf16.gmra.mxu0 %v487
        %v1870 = vpop.f32.mrf.mxu0
        %v1871 = vadd.f32 %v1782, %v1870
        %v1872 = vpop.f32.mrf.mxu0
        %v1873 = vadd.f32 %v1784, %v1872
        %1874 = vmatmul.bf16.gmra.mxu0 %v493
        %v1875 = vpop.f32.mrf.mxu0
        %v1876 = vadd.f32 %v1787, %v1875
        %v1877 = vpop.f32.mrf.mxu0
        %v1878 = vadd.f32 %v1789, %v1877
        %1879 = vmatmul.bf16.gmra.mxu0 %v499
        %v1880 = vpop.f32.mrf.mxu0
        %v1881 = vadd.f32 %v1792, %v1880
        %v1882 = vpop.f32.mrf.mxu0
        %v1883 = vadd.f32 %v1794, %v1882
        %1884 = vmatmul.bf16.gmra.mxu0 %v505
        %v1885 = vpop.f32.mrf.mxu0
        %v1886 = vadd.f32 %v1797, %v1885
        %v1887 = vpop.f32.mrf.mxu0
        %v1888 = vadd.f32 %v1799, %v1887
        %1889 = vmatmul.bf16.gmra.mxu0 %v511
        %v1890 = vpop.f32.mrf.mxu0
        %v1891 = vadd.f32 %v1802, %v1890
        %v1892 = vpop.f32.mrf.mxu0
        %v1893 = vadd.f32 %v1804, %v1892
        %1894 = vmatmul.bf16.gmra.mxu0 %v517
        %v1895 = vpop.f32.mrf.mxu0
        %v1896 = vadd.f32 %v1807, %v1895
        %v1897 = vpop.f32.mrf.mxu0
        %v1898 = vadd.f32 %v1809, %v1897
        %1899 = vmatmul.bf16.gmra.mxu0 %v523
        %v1900 = vpop.f32.mrf.mxu0
        %v1901 = vadd.f32 %v1812, %v1900
        %v1902 = vpop.f32.mrf.mxu0
        %v1903 = vadd.f32 %v1814, %v1902
        %1904 = vmatmul.bf16.gmra.mxu0 %v529
        %v1905 = vpop.f32.mrf.mxu0
        %v1906 = vadd.f32 %v1817, %v1905
        %v1907 = vpop.f32.mrf.mxu0
        %v1908 = vadd.f32 %v1819, %v1907
        %1909 = vdwg.mxu0
        %1910 = vmatpush.bf16.msra.mxu0 %v980
        %1911 = vmatpush.bf16.msra.mxu0 %v978
        %1912 = vmatpush.bf16.msra.mxu0 %v976
        %1913 = vmatpush.bf16.msra.mxu0 %v974
        %1914 = vmatpush.bf16.msra.mxu0 %v972
        %1915 = vmatpush.bf16.msra.mxu0 %v970
        %1916 = vmatpush.bf16.msra.mxu0 %v968
        %1917 = vmatpush.bf16.msra.mxu0 %v966
        %1918 = vmatmul.bf16.gmra.mxu0 %v440
        %v1919 = vpop.f32.mrf.mxu0
        %v1920 = vadd.f32 %v1831, %v1919
        %v1921 = vpop.f32.mrf.mxu0
        %v1922 = vadd.f32 %v1833, %v1921
        %1923 = vmatmul.bf16.gmra.mxu0 %v446
        %v1924 = vpop.f32.mrf.mxu0
        %v1925 = vadd.f32 %v1836, %v1924
        %v1926 = vpop.f32.mrf.mxu0
        %v1927 = vadd.f32 %v1838, %v1926
        %1928 = vmatmul.bf16.gmra.mxu0 %v452
        %v1929 = vpop.f32.mrf.mxu0
        %v1930 = vadd.f32 %v1841, %v1929
        %v1931 = vpop.f32.mrf.mxu0
        %v1932 = vadd.f32 %v1843, %v1931
        %1933 = vmatmul.bf16.gmra.mxu0 %v458
        %v1934 = vpop.f32.mrf.mxu0
        %v1935 = vadd.f32 %v1846, %v1934
        %v1936 = vpop.f32.mrf.mxu0
        %v1937 = vadd.f32 %v1848, %v1936
        %1938 = vmatmul.bf16.gmra.mxu0 %v464
        %v1939 = vpop.f32.mrf.mxu0
        %v1940 = vadd.f32 %v1851, %v1939
        %v1941 = vpop.f32.mrf.mxu0
        %v1942 = vadd.f32 %v1853, %v1941
        %1943 = vmatmul.bf16.gmra.mxu0 %v470
        %v1944 = vpop.f32.mrf.mxu0
        %v1945 = vadd.f32 %v1856, %v1944
        %v1946 = vpop.f32.mrf.mxu0
        %v1947 = vadd.f32 %v1858, %v1946
        %1948 = vmatmul.bf16.gmra.mxu0 %v476
        %v1949 = vpop.f32.mrf.mxu0
        %v1950 = vadd.f32 %v1861, %v1949
        %v1951 = vpop.f32.mrf.mxu0
        %v1952 = vadd.f32 %v1863, %v1951
        %1953 = vmatmul.bf16.gmra.mxu0 %v482
        %v1954 = vpop.f32.mrf.mxu0
        %v1955 = vadd.f32 %v1866, %v1954
        %v1956 = vpop.f32.mrf.mxu0
        %v1957 = vadd.f32 %v1868, %v1956
        %1958 = vmatmul.bf16.gmra.mxu0 %v488
        %v1959 = vpop.f32.mrf.mxu0
        %v1960 = vadd.f32 %v1871, %v1959
        %v1961 = vpop.f32.mrf.mxu0
        %v1962 = vadd.f32 %v1873, %v1961
        %1963 = vmatmul.bf16.gmra.mxu0 %v494
        %v1964 = vpop.f32.mrf.mxu0
        %v1965 = vadd.f32 %v1876, %v1964
        %v1966 = vpop.f32.mrf.mxu0
        %v1967 = vadd.f32 %v1878, %v1966
        %1968 = vmatmul.bf16.gmra.mxu0 %v500
        %v1969 = vpop.f32.mrf.mxu0
        %v1970 = vadd.f32 %v1881, %v1969
        %v1971 = vpop.f32.mrf.mxu0
        %v1972 = vadd.f32 %v1883, %v1971
        %1973 = vmatmul.bf16.gmra.mxu0 %v506
        %v1974 = vpop.f32.mrf.mxu0
        %v1975 = vadd.f32 %v1886, %v1974
        %v1976 = vpop.f32.mrf.mxu0
        %v1977 = vadd.f32 %v1888, %v1976
        %1978 = vmatmul.bf16.gmra.mxu0 %v512
        %v1979 = vpop.f32.mrf.mxu0
        %v1980 = vadd.f32 %v1891, %v1979
        %v1981 = vpop.f32.mrf.mxu0
        %v1982 = vadd.f32 %v1893, %v1981
        %1983 = vmatmul.bf16.gmra.mxu0 %v518
        %v1984 = vpop.f32.mrf.mxu0
        %v1985 = vadd.f32 %v1896, %v1984
        %v1986 = vpop.f32.mrf.mxu0
        %v1987 = vadd.f32 %v1898, %v1986
        %1988 = vmatmul.bf16.gmra.mxu0 %v524
        %v1989 = vpop.f32.mrf.mxu0
        %v1990 = vadd.f32 %v1901, %v1989
        %v1991 = vpop.f32.mrf.mxu0
        %v1992 = vadd.f32 %v1903, %v1991
        %1993 = vmatmul.bf16.gmra.mxu0 %v530
        %v1994 = vpop.f32.mrf.mxu0
        %v1995 = vadd.f32 %v1906, %v1994
        %v1996 = vpop.f32.mrf.mxu0
        %v1997 = vadd.f32 %v1908, %v1996
        %1998 = vdwg.mxu0
        %1999 = vmatpush.bf16.msra.mxu0 %v996
        %2000 = vmatpush.bf16.msra.mxu0 %v994
        %2001 = vmatpush.bf16.msra.mxu0 %v992
        %2002 = vmatpush.bf16.msra.mxu0 %v990
        %2003 = vmatpush.bf16.msra.mxu0 %v988
        %2004 = vmatpush.bf16.msra.mxu0 %v986
        %2005 = vmatpush.bf16.msra.mxu0 %v984
        %2006 = vmatpush.bf16.msra.mxu0 %v982
        %2007 = vmatmul.bf16.gmra.mxu0 %v441
        %v2008 = vpop.f32.mrf.mxu0
        %v2009 = vadd.f32 %v1920, %v2008
        %v2010 = vpop.f32.mrf.mxu0
        %v2011 = vadd.f32 %v1922, %v2010
        %2012 = vmatmul.bf16.gmra.mxu0 %v447
        %v2013 = vpop.f32.mrf.mxu0
        %v2014 = vadd.f32 %v1925, %v2013
        %v2015 = vpop.f32.mrf.mxu0
        %v2016 = vadd.f32 %v1927, %v2015
        %2017 = vmatmul.bf16.gmra.mxu0 %v453
        %v2018 = vpop.f32.mrf.mxu0
        %v2019 = vadd.f32 %v1930, %v2018
        %v2020 = vpop.f32.mrf.mxu0
        %v2021 = vadd.f32 %v1932, %v2020
        %2022 = vmatmul.bf16.gmra.mxu0 %v459
        %v2023 = vpop.f32.mrf.mxu0
        %v2024 = vadd.f32 %v1935, %v2023
        %v2025 = vpop.f32.mrf.mxu0
        %v2026 = vadd.f32 %v1937, %v2025
        %2027 = vmatmul.bf16.gmra.mxu0 %v465
        %v2028 = vpop.f32.mrf.mxu0
        %v2029 = vadd.f32 %v1940, %v2028
        %v2030 = vpop.f32.mrf.mxu0
        %v2031 = vadd.f32 %v1942, %v2030
        %2032 = vmatmul.bf16.gmra.mxu0 %v471
        %v2033 = vpop.f32.mrf.mxu0
        %v2034 = vadd.f32 %v1945, %v2033
        %v2035 = vpop.f32.mrf.mxu0
        %v2036 = vadd.f32 %v1947, %v2035
        %2037 = vmatmul.bf16.gmra.mxu0 %v477
        %v2038 = vpop.f32.mrf.mxu0
        %v2039 = vadd.f32 %v1950, %v2038
        %v2040 = vpop.f32.mrf.mxu0
        %v2041 = vadd.f32 %v1952, %v2040
        %2042 = vmatmul.bf16.gmra.mxu0 %v483
        %v2043 = vpop.f32.mrf.mxu0
        %v2044 = vadd.f32 %v1955, %v2043
        %v2045 = vpop.f32.mrf.mxu0
        %v2046 = vadd.f32 %v1957, %v2045
        %2047 = vmatmul.bf16.gmra.mxu0 %v489
        %v2048 = vpop.f32.mrf.mxu0
        %v2049 = vadd.f32 %v1960, %v2048
        %v2050 = vpop.f32.mrf.mxu0
        %v2051 = vadd.f32 %v1962, %v2050
        %2052 = vmatmul.bf16.gmra.mxu0 %v495
        %v2053 = vpop.f32.mrf.mxu0
        %v2054 = vadd.f32 %v1965, %v2053
        %v2055 = vpop.f32.mrf.mxu0
        %v2056 = vadd.f32 %v1967, %v2055
        %2057 = vmatmul.bf16.gmra.mxu0 %v501
        %v2058 = vpop.f32.mrf.mxu0
        %v2059 = vadd.f32 %v1970, %v2058
        %v2060 = vpop.f32.mrf.mxu0
        %v2061 = vadd.f32 %v1972, %v2060
        %2062 = vmatmul.bf16.gmra.mxu0 %v507
        %v2063 = vpop.f32.mrf.mxu0
        %v2064 = vadd.f32 %v1975, %v2063
        %v2065 = vpop.f32.mrf.mxu0
        %v2066 = vadd.f32 %v1977, %v2065
        %2067 = vmatmul.bf16.gmra.mxu0 %v513
        %v2068 = vpop.f32.mrf.mxu0
        %v2069 = vadd.f32 %v1980, %v2068
        %v2070 = vpop.f32.mrf.mxu0
        %v2071 = vadd.f32 %v1982, %v2070
        %2072 = vmatmul.bf16.gmra.mxu0 %v519
        %v2073 = vpop.f32.mrf.mxu0
        %v2074 = vadd.f32 %v1985, %v2073
        %v2075 = vpop.f32.mrf.mxu0
        %v2076 = vadd.f32 %v1987, %v2075
        %2077 = vmatmul.bf16.gmra.mxu0 %v525
        %v2078 = vpop.f32.mrf.mxu0
        %v2079 = vadd.f32 %v1990, %v2078
        %v2080 = vpop.f32.mrf.mxu0
        %v2081 = vadd.f32 %v1992, %v2080
        %2082 = vmatmul.bf16.gmra.mxu0 %v531
        %v2083 = vpop.f32.mrf.mxu0
        %v2084 = vadd.f32 %v1995, %v2083
        %v2085 = vpop.f32.mrf.mxu0
        %v2086 = vadd.f32 %v1997, %v2085
        %2087 = vdwg.mxu0
        %2088 = vmatpush.bf16.msra.mxu0 %v1012
        %2089 = vmatpush.bf16.msra.mxu0 %v1010
        %2090 = vmatpush.bf16.msra.mxu0 %v1008
        %2091 = vmatpush.bf16.msra.mxu0 %v1006
        %2092 = vmatpush.bf16.msra.mxu0 %v1004
        %2093 = vmatpush.bf16.msra.mxu0 %v1002
        %2094 = vmatpush.bf16.msra.mxu0 %v1000
        %2095 = vmatpush.bf16.msra.mxu0 %v998
        %2096 = vmatmul.bf16.gmra.mxu0 %v442
        %v2097 = vpop.f32.mrf.mxu0
        %v2098 = vadd.f32 %v2009, %v2097
        %v2099 = vpop.f32.mrf.mxu0
        %v2100 = vadd.f32 %v2011, %v2099
        %2101 = vmatmul.bf16.gmra.mxu0 %v448
        %v2102 = vpop.f32.mrf.mxu0
        %v2103 = vadd.f32 %v2014, %v2102
        %v2104 = vpop.f32.mrf.mxu0
        %v2105 = vadd.f32 %v2016, %v2104
        %2106 = vmatmul.bf16.gmra.mxu0 %v454
        %v2107 = vpop.f32.mrf.mxu0
        %v2108 = vadd.f32 %v2019, %v2107
        %v2109 = vpop.f32.mrf.mxu0
        %v2110 = vadd.f32 %v2021, %v2109
        %2111 = vmatmul.bf16.gmra.mxu0 %v460
        %v2112 = vpop.f32.mrf.mxu0
        %v2113 = vadd.f32 %v2024, %v2112
        %v2114 = vpop.f32.mrf.mxu0
        %v2115 = vadd.f32 %v2026, %v2114
        %2116 = vmatmul.bf16.gmra.mxu0 %v466
        %v2117 = vpop.f32.mrf.mxu0
        %v2118 = vadd.f32 %v2029, %v2117
        %v2119 = vpop.f32.mrf.mxu0
        %v2120 = vadd.f32 %v2031, %v2119
        %2121 = vmatmul.bf16.gmra.mxu0 %v472
        %v2122 = vpop.f32.mrf.mxu0
        %v2123 = vadd.f32 %v2034, %v2122
        %v2124 = vpop.f32.mrf.mxu0
        %v2125 = vadd.f32 %v2036, %v2124
        %2126 = vmatmul.bf16.gmra.mxu0 %v478
        %v2127 = vpop.f32.mrf.mxu0
        %v2128 = vadd.f32 %v2039, %v2127
        %v2129 = vpop.f32.mrf.mxu0
        %v2130 = vadd.f32 %v2041, %v2129
        %2131 = vmatmul.bf16.gmra.mxu0 %v484
        %v2132 = vpop.f32.mrf.mxu0
        %v2133 = vadd.f32 %v2044, %v2132
        %v2134 = vpop.f32.mrf.mxu0
        %v2135 = vadd.f32 %v2046, %v2134
        %2136 = vmatmul.bf16.gmra.mxu0 %v490
        %v2137 = vpop.f32.mrf.mxu0
        %v2138 = vadd.f32 %v2049, %v2137
        %v2139 = vpop.f32.mrf.mxu0
        %v2140 = vadd.f32 %v2051, %v2139
        %2141 = vmatmul.bf16.gmra.mxu0 %v496
        %v2142 = vpop.f32.mrf.mxu0
        %v2143 = vadd.f32 %v2054, %v2142
        %v2144 = vpop.f32.mrf.mxu0
        %v2145 = vadd.f32 %v2056, %v2144
        %2146 = vmatmul.bf16.gmra.mxu0 %v502
        %v2147 = vpop.f32.mrf.mxu0
        %v2148 = vadd.f32 %v2059, %v2147
        %v2149 = vpop.f32.mrf.mxu0
        %v2150 = vadd.f32 %v2061, %v2149
        %2151 = vmatmul.bf16.gmra.mxu0 %v508
        %v2152 = vpop.f32.mrf.mxu0
        %v2153 = vadd.f32 %v2064, %v2152
        %v2154 = vpop.f32.mrf.mxu0
        %v2155 = vadd.f32 %v2066, %v2154
        %2156 = vmatmul.bf16.gmra.mxu0 %v514
        %v2157 = vpop.f32.mrf.mxu0
        %v2158 = vadd.f32 %v2069, %v2157
        %v2159 = vpop.f32.mrf.mxu0
        %v2160 = vadd.f32 %v2071, %v2159
        %2161 = vmatmul.bf16.gmra.mxu0 %v520
        %v2162 = vpop.f32.mrf.mxu0
        %v2163 = vadd.f32 %v2074, %v2162
        %v2164 = vpop.f32.mrf.mxu0
        %v2165 = vadd.f32 %v2076, %v2164
        %2166 = vmatmul.bf16.gmra.mxu0 %v526
        %v2167 = vpop.f32.mrf.mxu0
        %v2168 = vadd.f32 %v2079, %v2167
        %v2169 = vpop.f32.mrf.mxu0
        %v2170 = vadd.f32 %v2081, %v2169
        %2171 = vmatmul.bf16.gmra.mxu0 %v532
        %v2172 = vpop.f32.mrf.mxu0
        %v2173 = vadd.f32 %v2084, %v2172
        %v2174 = vpop.f32.mrf.mxu0
        %v2175 = vadd.f32 %v2086, %v2174
        %2176 = vdwg.mxu0
        %v2177 = vtanh.pop %v1564
        %v2178 = vtanh.pop %v2098
        %v2179 = vtanh.pop %v1566
        %v2180 = vtanh.pop %v2100
        %v2181 = vtanh.pop %v1569
        %v2182 = vtanh.pop %v2103
        %v2183 = vtanh.pop %v1571
        %v2184 = vtanh.pop %v2105
        %v2185 = vtanh.pop %v1574
        %v2186 = vtanh.pop %v2108
        %v2187 = vtanh.pop %v1576
        %v2188 = vtanh.pop %v2110
        %v2189 = vtanh.pop %v1579
        %v2190 = vtanh.pop %v2113
        %v2191 = vtanh.pop %v1581
        %v2192 = vtanh.pop %v2115
        %v2193 = vtanh.pop %v1584
        %v2194 = vtanh.pop %v2118
        %v2195 = vtanh.pop %v1586
        %v2196 = vtanh.pop %v2120
        %v2197 = vtanh.pop %v1589
        %v2198 = vtanh.pop %v2123
        %v2199 = vtanh.pop %v1591
        %v2200 = vtanh.pop %v2125
        %v2201 = vtanh.pop %v1594
        %v2202 = vtanh.pop %v2128
        %v2203 = vtanh.pop %v1596
        %v2204 = vtanh.pop %v2130
        %v2205 = vtanh.pop %v1599
        %v2206 = vtanh.pop %v2133
        %v2207 = vtanh.pop %v1601
        %v2208 = vtanh.pop %v2135
        %v2209 = vtanh.pop %v1604
        %v2210 = vtanh.pop %v2138
        %v2211 = vtanh.pop %v1606
        %v2212 = vtanh.pop %v2140
        %v2213 = vtanh.pop %v1609
        %v2214 = vtanh.pop %v2143
        %v2215 = vtanh.pop %v1611
        %v2216 = vtanh.pop %v2145
        %v2217 = vtanh.pop %v1614
        %v2218 = vtanh.pop %v2148
        %v2219 = vtanh.pop %v1616
        %v2220 = vtanh.pop %v2150
        %v2221 = vtanh.pop %v1619
        %v2222 = vtanh.pop %v2153
        %v2223 = vtanh.pop %v1621
        %v2224 = vtanh.pop %v2155
        %v2225 = vtanh.pop %v1624
        %v2226 = vtanh.pop %v2158
        %v2227 = vtanh.pop %v1626
        %v2228 = vtanh.pop %v2160
        %v2229 = vtanh.pop %v1629
        %v2230 = vtanh.pop %v2163
        %v2231 = vtanh.pop %v1631
        %v2232 = vtanh.pop %v2165
        %v2233 = vtanh.pop %v1634
        %v2234 = vtanh.pop %v2168
        %v2235 = vtanh.pop %v1636
        %v2236 = vtanh.pop %v2170
        %v2237 = vtanh.pop %v1639
        %v2238 = vtanh.pop %v2173
        %v2239 = vtanh.pop %v1641
        %v2240 = vtanh.pop %v2175
        %v2241 = vpack.c.bf16 %v2179, %v2177
        %v2242 = vpack.c.bf16 %v2180, %v2178
        %v2243 = vpack.c.bf16 %v2183, %v2181
        %v2244 = vpack.c.bf16 %v2184, %v2182
        %v2245 = vpack.c.bf16 %v2187, %v2185
        %v2246 = vpack.c.bf16 %v2188, %v2186
        %v2247 = vpack.c.bf16 %v2191, %v2189
        %v2248 = vpack.c.bf16 %v2192, %v2190
        %v2249 = vpack.c.bf16 %v2195, %v2193
        %v2250 = vpack.c.bf16 %v2196, %v2194
        %v2251 = vpack.c.bf16 %v2199, %v2197
        %v2252 = vpack.c.bf16 %v2200, %v2198
        %v2253 = vpack.c.bf16 %v2203, %v2201
        %v2254 = vpack.c.bf16 %v2204, %v2202
        %v2255 = vpack.c.bf16 %v2207, %v2205
        %v2256 = vpack.c.bf16 %v2208, %v2206
        %v2257 = vpack.c.bf16 %v2211, %v2209
        %v2258 = vpack.c.bf16 %v2212, %v2210
        %v2259 = vpack.c.bf16 %v2215, %v2213
        %v2260 = vpack.c.bf16 %v2216, %v2214
        %v2261 = vpack.c.bf16 %v2219, %v2217
        %v2262 = vpack.c.bf16 %v2220, %v2218
        %v2263 = vpack.c.bf16 %v2223, %v2221
        %v2264 = vpack.c.bf16 %v2224, %v2222
        %v2265 = vpack.c.bf16 %v2227, %v2225
        %v2266 = vpack.c.bf16 %v2228, %v2226
        %v2267 = vpack.c.bf16 %v2231, %v2229
        %v2268 = vpack.c.bf16 %v2232, %v2230
        %v2269 = vpack.c.bf16 %v2235, %v2233
        %v2270 = vpack.c.bf16 %v2236, %v2234
        %v2271 = vpack.c.bf16 %v2239, %v2237
        %v2272 = vpack.c.bf16 %v2240, %v2238
        %v2273 = vld [vmem:[#allocation7] sm:$0xff]
        %v2274 = vld [vmem:[#allocation7 + $0x8] sm:$0xff]
        %v2275 = vld [vmem:[#allocation7 + $0x10] sm:$0xff]
        %v2276 = vld [vmem:[#allocation7 + $0x18] sm:$0xff]
        %v2277 = vld [vmem:[#allocation7 + $0x20] sm:$0xff]
        %v2278 = vld [vmem:[#allocation7 + $0x28] sm:$0xff]
        %v2279 = vld [vmem:[#allocation7 + $0x30] sm:$0xff]
        %v2280 = vld [vmem:[#allocation7 + $0x38] sm:$0xff]
        %v2281 = vld [vmem:[#allocation7 + $0x40] sm:$0xff]
        %v2282 = vld [vmem:[#allocation7 + $0x48] sm:$0xff]
        %v2283 = vld [vmem:[#allocation7 + $0x50] sm:$0xff]
        %v2284 = vld [vmem:[#allocation7 + $0x58] sm:$0xff]
        %v2285 = vld [vmem:[#allocation7 + $0x60] sm:$0xff]
        %v2286 = vld [vmem:[#allocation7 + $0x68] sm:$0xff]
        %v2287 = vld [vmem:[#allocation7 + $0x70] sm:$0xff]
        %v2288 = vld [vmem:[#allocation7 + $0x78] sm:$0xff]
        %v2289 = vld [vmem:[#allocation7 + $0x80] sm:$0xff]
        %v2290 = vld [vmem:[#allocation7 + $0x88] sm:$0xff]
        %v2291 = vld [vmem:[#allocation7 + $0x90] sm:$0xff]
        %v2292 = vld [vmem:[#allocation7 + $0x98] sm:$0xff]
        %v2293 = vld [vmem:[#allocation7 + $0xa0] sm:$0xff]
        %v2294 = vld [vmem:[#allocation7 + $0xa8] sm:$0xff]
        %v2295 = vld [vmem:[#allocation7 + $0xb0] sm:$0xff]
        %v2296 = vld [vmem:[#allocation7 + $0xb8] sm:$0xff]
        %v2297 = vld [vmem:[#allocation7 + $0xc0] sm:$0xff]
        %v2298 = vld [vmem:[#allocation7 + $0xc8] sm:$0xff]
        %v2299 = vld [vmem:[#allocation7 + $0xd0] sm:$0xff]
        %v2300 = vld [vmem:[#allocation7 + $0xd8] sm:$0xff]
        %v2301 = vld [vmem:[#allocation7 + $0xe0] sm:$0xff]
        %v2302 = vld [vmem:[#allocation7 + $0xe8] sm:$0xff]
        %v2303 = vld [vmem:[#allocation7 + $0xf0] sm:$0xff]
        %v2304 = vld [vmem:[#allocation7 + $0xf8] sm:$0xff]
        %v2305 = vld [vmem:[#allocation7 + $0x100] sm:$0xff]
        %v2306 = vld [vmem:[#allocation7 + $0x108] sm:$0xff]
        %v2307 = vld [vmem:[#allocation7 + $0x110] sm:$0xff]
        %v2308 = vld [vmem:[#allocation7 + $0x118] sm:$0xff]
        %v2309 = vld [vmem:[#allocation7 + $0x120] sm:$0xff]
        %v2310 = vld [vmem:[#allocation7 + $0x128] sm:$0xff]
        %v2311 = vld [vmem:[#allocation7 + $0x130] sm:$0xff]
        %v2312 = vld [vmem:[#allocation7 + $0x138] sm:$0xff]
        %v2313 = vld [vmem:[#allocation7 + $0x140] sm:$0xff]
        %v2314 = vld [vmem:[#allocation7 + $0x148] sm:$0xff]
        %v2315 = vld [vmem:[#allocation7 + $0x150] sm:$0xff]
        %v2316 = vld [vmem:[#allocation7 + $0x158] sm:$0xff]
        %v2317 = vld [vmem:[#allocation7 + $0x160] sm:$0xff]
        %v2318 = vld [vmem:[#allocation7 + $0x168] sm:$0xff]
        %v2319 = vld [vmem:[#allocation7 + $0x170] sm:$0xff]
        %v2320 = vld [vmem:[#allocation7 + $0x178] sm:$0xff]
        %v2321 = vld [vmem:[#allocation7 + $0x180] sm:$0xff]
        %v2322 = vld [vmem:[#allocation7 + $0x188] sm:$0xff]
        %v2323 = vld [vmem:[#allocation7 + $0x190] sm:$0xff]
        %v2324 = vld [vmem:[#allocation7 + $0x198] sm:$0xff]
        %v2325 = vld [vmem:[#allocation7 + $0x1a0] sm:$0xff]
        %v2326 = vld [vmem:[#allocation7 + $0x1a8] sm:$0xff]
        %v2327 = vld [vmem:[#allocation7 + $0x1b0] sm:$0xff]
        %v2328 = vld [vmem:[#allocation7 + $0x1b8] sm:$0xff]
        %v2329 = vld [vmem:[#allocation7 + $0x1c0] sm:$0xff]
        %v2330 = vld [vmem:[#allocation7 + $0x1c8] sm:$0xff]
        %v2331 = vld [vmem:[#allocation7 + $0x1d0] sm:$0xff]
        %v2332 = vld [vmem:[#allocation7 + $0x1d8] sm:$0xff]
        %v2333 = vld [vmem:[#allocation7 + $0x1e0] sm:$0xff]
        %v2334 = vld [vmem:[#allocation7 + $0x1e8] sm:$0xff]
        %v2335 = vld [vmem:[#allocation7 + $0x1f0] sm:$0xff]
        %v2336 = vld [vmem:[#allocation7 + $0x1f8] sm:$0xff]
        %v2337 = vld [vmem:[#allocation7 + $0x200] sm:$0xff]
        %v2338 = vld [vmem:[#allocation7 + $0x208] sm:$0xff]
        %v2339 = vld [vmem:[#allocation7 + $0x210] sm:$0xff]
        %v2340 = vld [vmem:[#allocation7 + $0x218] sm:$0xff]
        %v2341 = vld [vmem:[#allocation7 + $0x220] sm:$0xff]
        %v2342 = vld [vmem:[#allocation7 + $0x228] sm:$0xff]
        %v2343 = vld [vmem:[#allocation7 + $0x230] sm:$0xff]
        %v2344 = vld [vmem:[#allocation7 + $0x238] sm:$0xff]
        %v2345 = vld [vmem:[#allocation7 + $0x240] sm:$0xff]
        %v2346 = vld [vmem:[#allocation7 + $0x248] sm:$0xff]
        %v2347 = vld [vmem:[#allocation7 + $0x250] sm:$0xff]
        %v2348 = vld [vmem:[#allocation7 + $0x258] sm:$0xff]
        %v2349 = vld [vmem:[#allocation7 + $0x260] sm:$0xff]
        %v2350 = vld [vmem:[#allocation7 + $0x268] sm:$0xff]
        %v2351 = vld [vmem:[#allocation7 + $0x270] sm:$0xff]
        %v2352 = vld [vmem:[#allocation7 + $0x278] sm:$0xff]
        %v2353 = vld [vmem:[#allocation7 + $0x280] sm:$0xff]
        %v2354 = vld [vmem:[#allocation7 + $0x288] sm:$0xff]
        %v2355 = vld [vmem:[#allocation7 + $0x290] sm:$0xff]
        %v2356 = vld [vmem:[#allocation7 + $0x298] sm:$0xff]
        %v2357 = vld [vmem:[#allocation7 + $0x2a0] sm:$0xff]
        %v2358 = vld [vmem:[#allocation7 + $0x2a8] sm:$0xff]
        %v2359 = vld [vmem:[#allocation7 + $0x2b0] sm:$0xff]
        %v2360 = vld [vmem:[#allocation7 + $0x2b8] sm:$0xff]
        %v2361 = vld [vmem:[#allocation7 + $0x2c0] sm:$0xff]
        %v2362 = vld [vmem:[#allocation7 + $0x2c8] sm:$0xff]
        %v2363 = vld [vmem:[#allocation7 + $0x2d0] sm:$0xff]
        %v2364 = vld [vmem:[#allocation7 + $0x2d8] sm:$0xff]
        %v2365 = vld [vmem:[#allocation7 + $0x2e0] sm:$0xff]
        %v2366 = vld [vmem:[#allocation7 + $0x2e8] sm:$0xff]
        %v2367 = vld [vmem:[#allocation7 + $0x2f0] sm:$0xff]
        %v2368 = vld [vmem:[#allocation7 + $0x2f8] sm:$0xff]
        %v2465 = vunpack.c.l.b16 %v2273
        %v2466 = vunpack.c.h.b16 %v2273
        %v2467 = vunpack.c.l.b16 %v2274
        %v2468 = vunpack.c.h.b16 %v2274
        %v2469 = vunpack.c.l.b16 %v2275
        %v2470 = vunpack.c.h.b16 %v2275
        %v2471 = vunpack.c.l.b16 %v2276
        %v2472 = vunpack.c.h.b16 %v2276
        %v2473 = vunpack.c.l.b16 %v2277
        %v2474 = vunpack.c.h.b16 %v2277
        %v2475 = vunpack.c.l.b16 %v2278
        %v2476 = vunpack.c.h.b16 %v2278
        %v2477 = vunpack.c.l.b16 %v2279
        %v2478 = vunpack.c.h.b16 %v2279
        %v2479 = vunpack.c.l.b16 %v2280
        %v2480 = vunpack.c.h.b16 %v2280
        %v2481 = vunpack.c.l.b16 %v2281
        %v2482 = vunpack.c.h.b16 %v2281
        %v2483 = vunpack.c.l.b16 %v2282
        %v2484 = vunpack.c.h.b16 %v2282
        %v2485 = vunpack.c.l.b16 %v2283
        %v2486 = vunpack.c.h.b16 %v2283
        %v2487 = vunpack.c.l.b16 %v2284
        %v2488 = vunpack.c.h.b16 %v2284
        %v2489 = vunpack.c.l.b16 %v2285
        %v2490 = vunpack.c.h.b16 %v2285
        %v2491 = vunpack.c.l.b16 %v2286
        %v2492 = vunpack.c.h.b16 %v2286
        %v2493 = vunpack.c.l.b16 %v2287
        %v2494 = vunpack.c.h.b16 %v2287
        %v2495 = vunpack.c.l.b16 %v2288
        %v2496 = vunpack.c.h.b16 %v2288
        %v2497 = vunpack.c.l.b16 %v2289
        %v2498 = vunpack.c.h.b16 %v2289
        %v2499 = vunpack.c.l.b16 %v2290
        %v2500 = vunpack.c.h.b16 %v2290
        %v2501 = vunpack.c.l.b16 %v2291
        %v2502 = vunpack.c.h.b16 %v2291
        %v2503 = vunpack.c.l.b16 %v2292
        %v2504 = vunpack.c.h.b16 %v2292
        %v2505 = vunpack.c.l.b16 %v2293
        %v2506 = vunpack.c.h.b16 %v2293
        %v2507 = vunpack.c.l.b16 %v2294
        %v2508 = vunpack.c.h.b16 %v2294
        %v2509 = vunpack.c.l.b16 %v2295
        %v2510 = vunpack.c.h.b16 %v2295
        %v2511 = vunpack.c.l.b16 %v2296
        %v2512 = vunpack.c.h.b16 %v2296
        %v2513 = vunpack.c.l.b16 %v2297
        %v2514 = vunpack.c.h.b16 %v2297
        %v2515 = vunpack.c.l.b16 %v2298
        %v2516 = vunpack.c.h.b16 %v2298
        %v2517 = vunpack.c.l.b16 %v2299
        %v2518 = vunpack.c.h.b16 %v2299
        %v2519 = vunpack.c.l.b16 %v2300
        %v2520 = vunpack.c.h.b16 %v2300
        %v2521 = vunpack.c.l.b16 %v2301
        %v2522 = vunpack.c.h.b16 %v2301
        %v2523 = vunpack.c.l.b16 %v2302
        %v2524 = vunpack.c.h.b16 %v2302
        %v2525 = vunpack.c.l.b16 %v2303
        %v2526 = vunpack.c.h.b16 %v2303
        %v2527 = vunpack.c.l.b16 %v2304
        %v2528 = vunpack.c.h.b16 %v2304
        %v2529 = vunpack.c.l.b16 %v2305
        %v2530 = vunpack.c.h.b16 %v2305
        %v2531 = vunpack.c.l.b16 %v2306
        %v2532 = vunpack.c.h.b16 %v2306
        %v2533 = vunpack.c.l.b16 %v2307
        %v2534 = vunpack.c.h.b16 %v2307
        %v2535 = vunpack.c.l.b16 %v2308
        %v2536 = vunpack.c.h.b16 %v2308
        %v2537 = vunpack.c.l.b16 %v2309
        %v2538 = vunpack.c.h.b16 %v2309
        %v2539 = vunpack.c.l.b16 %v2310
        %v2540 = vunpack.c.h.b16 %v2310
        %v2541 = vunpack.c.l.b16 %v2311
        %v2542 = vunpack.c.h.b16 %v2311
        %v2543 = vunpack.c.l.b16 %v2312
        %v2544 = vunpack.c.h.b16 %v2312
        %v2545 = vunpack.c.l.b16 %v2313
        %v2546 = vunpack.c.h.b16 %v2313
        %v2547 = vunpack.c.l.b16 %v2314
        %v2548 = vunpack.c.h.b16 %v2314
        %v2549 = vunpack.c.l.b16 %v2315
        %v2550 = vunpack.c.h.b16 %v2315
        %v2551 = vunpack.c.l.b16 %v2316
        %v2552 = vunpack.c.h.b16 %v2316
        %v2553 = vunpack.c.l.b16 %v2317
        %v2554 = vunpack.c.h.b16 %v2317
        %v2555 = vunpack.c.l.b16 %v2318
        %v2556 = vunpack.c.h.b16 %v2318
        %v2557 = vunpack.c.l.b16 %v2319
        %v2558 = vunpack.c.h.b16 %v2319
        %v2559 = vunpack.c.l.b16 %v2320
        %v2560 = vunpack.c.h.b16 %v2320
        %v2561 = vunpack.c.l.b16 %v2321
        %v2562 = vunpack.c.h.b16 %v2321
        %v2563 = vunpack.c.l.b16 %v2322
        %v2564 = vunpack.c.h.b16 %v2322
        %v2565 = vunpack.c.l.b16 %v2323
        %v2566 = vunpack.c.h.b16 %v2323
        %v2567 = vunpack.c.l.b16 %v2324
        %v2568 = vunpack.c.h.b16 %v2324
        %v2569 = vunpack.c.l.b16 %v2325
        %v2570 = vunpack.c.h.b16 %v2325
        %v2571 = vunpack.c.l.b16 %v2326
        %v2572 = vunpack.c.h.b16 %v2326
        %v2573 = vunpack.c.l.b16 %v2327
        %v2574 = vunpack.c.h.b16 %v2327
        %v2575 = vunpack.c.l.b16 %v2328
        %v2576 = vunpack.c.h.b16 %v2328
        %v2577 = vunpack.c.l.b16 %v2329
        %v2578 = vunpack.c.h.b16 %v2329
        %v2579 = vunpack.c.l.b16 %v2330
        %v2580 = vunpack.c.h.b16 %v2330
        %v2581 = vunpack.c.l.b16 %v2331
        %v2582 = vunpack.c.h.b16 %v2331
        %v2583 = vunpack.c.l.b16 %v2332
        %v2584 = vunpack.c.h.b16 %v2332
        %v2585 = vunpack.c.l.b16 %v2333
        %v2586 = vunpack.c.h.b16 %v2333
        %v2587 = vunpack.c.l.b16 %v2334
        %v2588 = vunpack.c.h.b16 %v2334
        %v2589 = vunpack.c.l.b16 %v2335
        %v2590 = vunpack.c.h.b16 %v2335
        %v2591 = vunpack.c.l.b16 %v2336
        %v2592 = vunpack.c.h.b16 %v2336
        %v2593 = vunpack.c.l.b16 %v2337
        %v2594 = vunpack.c.h.b16 %v2337
        %v2595 = vunpack.c.l.b16 %v2338
        %v2596 = vunpack.c.h.b16 %v2338
        %v2597 = vunpack.c.l.b16 %v2339
        %v2598 = vunpack.c.h.b16 %v2339
        %v2599 = vunpack.c.l.b16 %v2340
        %v2600 = vunpack.c.h.b16 %v2340
        %v2601 = vunpack.c.l.b16 %v2341
        %v2602 = vunpack.c.h.b16 %v2341
        %v2603 = vunpack.c.l.b16 %v2342
        %v2604 = vunpack.c.h.b16 %v2342
        %v2605 = vunpack.c.l.b16 %v2343
        %v2606 = vunpack.c.h.b16 %v2343
        %v2607 = vunpack.c.l.b16 %v2344
        %v2608 = vunpack.c.h.b16 %v2344
        %v2609 = vunpack.c.l.b16 %v2345
        %v2610 = vunpack.c.h.b16 %v2345
        %v2611 = vunpack.c.l.b16 %v2346
        %v2612 = vunpack.c.h.b16 %v2346
        %v2613 = vunpack.c.l.b16 %v2347
        %v2614 = vunpack.c.h.b16 %v2347
        %v2615 = vunpack.c.l.b16 %v2348
        %v2616 = vunpack.c.h.b16 %v2348
        %v2617 = vunpack.c.l.b16 %v2349
        %v2618 = vunpack.c.h.b16 %v2349
        %v2619 = vunpack.c.l.b16 %v2350
        %v2620 = vunpack.c.h.b16 %v2350
        %v2621 = vunpack.c.l.b16 %v2351
        %v2622 = vunpack.c.h.b16 %v2351
        %v2623 = vunpack.c.l.b16 %v2352
        %v2624 = vunpack.c.h.b16 %v2352
        %v2625 = vunpack.c.l.b16 %v2353
        %v2626 = vunpack.c.h.b16 %v2353
        %v2627 = vunpack.c.l.b16 %v2354
        %v2628 = vunpack.c.h.b16 %v2354
        %v2629 = vunpack.c.l.b16 %v2355
        %v2630 = vunpack.c.h.b16 %v2355
        %v2631 = vunpack.c.l.b16 %v2356
        %v2632 = vunpack.c.h.b16 %v2356
        %v2633 = vunpack.c.l.b16 %v2357
        %v2634 = vunpack.c.h.b16 %v2357
        %v2635 = vunpack.c.l.b16 %v2358
        %v2636 = vunpack.c.h.b16 %v2358
        %v2637 = vunpack.c.l.b16 %v2359
        %v2638 = vunpack.c.h.b16 %v2359
        %v2639 = vunpack.c.l.b16 %v2360
        %v2640 = vunpack.c.h.b16 %v2360
        %v2641 = vunpack.c.l.b16 %v2361
        %v2642 = vunpack.c.h.b16 %v2361
        %v2643 = vunpack.c.l.b16 %v2362
        %v2644 = vunpack.c.h.b16 %v2362
        %v2645 = vunpack.c.l.b16 %v2363
        %v2646 = vunpack.c.h.b16 %v2363
        %v2647 = vunpack.c.l.b16 %v2364
        %v2648 = vunpack.c.h.b16 %v2364
        %v2649 = vunpack.c.l.b16 %v2365
        %v2650 = vunpack.c.h.b16 %v2365
        %v2651 = vunpack.c.l.b16 %v2366
        %v2652 = vunpack.c.h.b16 %v2366
        %v2653 = vunpack.c.l.b16 %v2367
        %v2654 = vunpack.c.h.b16 %v2367
        %v2655 = vunpack.c.l.b16 %v2368
        %v2656 = vunpack.c.h.b16 %v2368
        %v2657 = vpack.c.b16 %v2471, %v2465
        %v2658 = vpack.c.b16 %v2472, %v2466
        %v2659 = vpack.c.b16 %v2473, %v2467
        %v2660 = vpack.c.b16 %v2474, %v2468
        %v2661 = vpack.c.b16 %v2475, %v2469
        %v2662 = vpack.c.b16 %v2476, %v2470
        %v2663 = vpack.c.b16 %v2483, %v2477
        %v2664 = vpack.c.b16 %v2484, %v2478
        %v2665 = vpack.c.b16 %v2485, %v2479
        %v2666 = vpack.c.b16 %v2486, %v2480
        %v2667 = vpack.c.b16 %v2487, %v2481
        %v2668 = vpack.c.b16 %v2488, %v2482
        %v2669 = vpack.c.b16 %v2495, %v2489
        %v2670 = vpack.c.b16 %v2496, %v2490
        %v2671 = vpack.c.b16 %v2497, %v2491
        %v2672 = vpack.c.b16 %v2498, %v2492
        %v2673 = vpack.c.b16 %v2499, %v2493
        %v2674 = vpack.c.b16 %v2500, %v2494
        %v2675 = vpack.c.b16 %v2507, %v2501
        %v2676 = vpack.c.b16 %v2508, %v2502
        %v2677 = vpack.c.b16 %v2509, %v2503
        %v2678 = vpack.c.b16 %v2510, %v2504
        %v2679 = vpack.c.b16 %v2511, %v2505
        %v2680 = vpack.c.b16 %v2512, %v2506
        %v2681 = vpack.c.b16 %v2519, %v2513
        %v2682 = vpack.c.b16 %v2520, %v2514
        %v2683 = vpack.c.b16 %v2521, %v2515
        %v2684 = vpack.c.b16 %v2522, %v2516
        %v2685 = vpack.c.b16 %v2523, %v2517
        %v2686 = vpack.c.b16 %v2524, %v2518
        %v2687 = vpack.c.b16 %v2531, %v2525
        %v2688 = vpack.c.b16 %v2532, %v2526
        %v2689 = vpack.c.b16 %v2533, %v2527
        %v2690 = vpack.c.b16 %v2534, %v2528
        %v2691 = vpack.c.b16 %v2535, %v2529
        %v2692 = vpack.c.b16 %v2536, %v2530
        %v2693 = vpack.c.b16 %v2543, %v2537
        %v2694 = vpack.c.b16 %v2544, %v2538
        %v2695 = vpack.c.b16 %v2545, %v2539
        %v2696 = vpack.c.b16 %v2546, %v2540
        %v2697 = vpack.c.b16 %v2547, %v2541
        %v2698 = vpack.c.b16 %v2548, %v2542
        %v2699 = vpack.c.b16 %v2555, %v2549
        %v2700 = vpack.c.b16 %v2556, %v2550
        %v2701 = vpack.c.b16 %v2557, %v2551
        %v2702 = vpack.c.b16 %v2558, %v2552
        %v2703 = vpack.c.b16 %v2559, %v2553
        %v2704 = vpack.c.b16 %v2560, %v2554
        %v2705 = vpack.c.b16 %v2567, %v2561
        %v2706 = vpack.c.b16 %v2568, %v2562
        %v2707 = vpack.c.b16 %v2569, %v2563
        %v2708 = vpack.c.b16 %v2570, %v2564
        %v2709 = vpack.c.b16 %v2571, %v2565
        %v2710 = vpack.c.b16 %v2572, %v2566
        %v2711 = vpack.c.b16 %v2579, %v2573
        %v2712 = vpack.c.b16 %v2580, %v2574
        %v2713 = vpack.c.b16 %v2581, %v2575
        %v2714 = vpack.c.b16 %v2582, %v2576
        %v2715 = vpack.c.b16 %v2583, %v2577
        %v2716 = vpack.c.b16 %v2584, %v2578
        %v2717 = vpack.c.b16 %v2591, %v2585
        %v2718 = vpack.c.b16 %v2592, %v2586
        %v2719 = vpack.c.b16 %v2593, %v2587
        %v2720 = vpack.c.b16 %v2594, %v2588
        %v2721 = vpack.c.b16 %v2595, %v2589
        %v2722 = vpack.c.b16 %v2596, %v2590
        %v2723 = vpack.c.b16 %v2603, %v2597
        %v2724 = vpack.c.b16 %v2604, %v2598
        %v2725 = vpack.c.b16 %v2605, %v2599
        %v2726 = vpack.c.b16 %v2606, %v2600
        %v2727 = vpack.c.b16 %v2607, %v2601
        %v2728 = vpack.c.b16 %v2608, %v2602
        %v2729 = vpack.c.b16 %v2615, %v2609
        %v2730 = vpack.c.b16 %v2616, %v2610
        %v2731 = vpack.c.b16 %v2617, %v2611
        %v2732 = vpack.c.b16 %v2618, %v2612
        %v2733 = vpack.c.b16 %v2619, %v2613
        %v2734 = vpack.c.b16 %v2620, %v2614
        %v2735 = vpack.c.b16 %v2627, %v2621
        %v2736 = vpack.c.b16 %v2628, %v2622
        %v2737 = vpack.c.b16 %v2629, %v2623
        %v2738 = vpack.c.b16 %v2630, %v2624
        %v2739 = vpack.c.b16 %v2631, %v2625
        %v2740 = vpack.c.b16 %v2632, %v2626
        %v2741 = vpack.c.b16 %v2639, %v2633
        %v2742 = vpack.c.b16 %v2640, %v2634
        %v2743 = vpack.c.b16 %v2641, %v2635
        %v2744 = vpack.c.b16 %v2642, %v2636
        %v2745 = vpack.c.b16 %v2643, %v2637
        %v2746 = vpack.c.b16 %v2644, %v2638
        %v2747 = vpack.c.b16 %v2651, %v2645
        %v2748 = vpack.c.b16 %v2652, %v2646
        %v2749 = vpack.c.b16 %v2653, %v2647
        %v2750 = vpack.c.b16 %v2654, %v2648
        %v2751 = vpack.c.b16 %v2655, %v2649
        %v2752 = vpack.c.b16 %v2656, %v2650
        %2849 = vmatpush.bf16.msra.mxu0 %v2699
        %2850 = vmatpush.bf16.msra.mxu0 %v2693
        %2851 = vmatpush.bf16.msra.mxu0 %v2687
        %2852 = vmatpush.bf16.msra.mxu0 %v2681
        %2853 = vmatpush.bf16.msra.mxu0 %v2675
        %2854 = vmatpush.bf16.msra.mxu0 %v2669
        %2855 = vmatpush.bf16.msra.mxu0 %v2663
        %2856 = vmatpush.bf16.msra.mxu0 %v2657
        %2857 = vmatmul.bf16.gmra.mxu0 %v2241
        %v2858 = vpop.f32.mrf.mxu0
        %v2859 = vadd.f32 0.0, %v2858
        %v2860 = vpop.f32.mrf.mxu0
        %v2861 = vadd.f32 0.0, %v2860
        %2862 = vmatmul.bf16.gmra.mxu0 %v2243
        %v2863 = vpop.f32.mrf.mxu0
        %v2864 = vadd.f32 0.0, %v2863
        %v2865 = vpop.f32.mrf.mxu0
        %v2866 = vadd.f32 0.0, %v2865
        %2867 = vmatmul.bf16.gmra.mxu0 %v2245
        %v2868 = vpop.f32.mrf.mxu0
        %v2869 = vadd.f32 0.0, %v2868
        %v2870 = vpop.f32.mrf.mxu0
        %v2871 = vadd.f32 0.0, %v2870
        %2872 = vmatmul.bf16.gmra.mxu0 %v2247
        %v2873 = vpop.f32.mrf.mxu0
        %v2874 = vadd.f32 0.0, %v2873
        %v2875 = vpop.f32.mrf.mxu0
        %v2876 = vadd.f32 0.0, %v2875
        %2877 = vmatmul.bf16.gmra.mxu0 %v2249
        %v2878 = vpop.f32.mrf.mxu0
        %v2879 = vadd.f32 0.0, %v2878
        %v2880 = vpop.f32.mrf.mxu0
        %v2881 = vadd.f32 0.0, %v2880
        %2882 = vmatmul.bf16.gmra.mxu0 %v2251
        %v2883 = vpop.f32.mrf.mxu0
        %v2884 = vadd.f32 0.0, %v2883
        %v2885 = vpop.f32.mrf.mxu0
        %v2886 = vadd.f32 0.0, %v2885
        %2887 = vmatmul.bf16.gmra.mxu0 %v2253
        %v2888 = vpop.f32.mrf.mxu0
        %v2889 = vadd.f32 0.0, %v2888
        %v2890 = vpop.f32.mrf.mxu0
        %v2891 = vadd.f32 0.0, %v2890
        %2892 = vmatmul.bf16.gmra.mxu0 %v2255
        %v2893 = vpop.f32.mrf.mxu0
        %v2894 = vadd.f32 0.0, %v2893
        %v2895 = vpop.f32.mrf.mxu0
        %v2896 = vadd.f32 0.0, %v2895
        %2897 = vmatmul.bf16.gmra.mxu0 %v2257
        %v2898 = vpop.f32.mrf.mxu0
        %v2899 = vadd.f32 0.0, %v2898
        %v2900 = vpop.f32.mrf.mxu0
        %v2901 = vadd.f32 0.0, %v2900
        %2902 = vmatmul.bf16.gmra.mxu0 %v2259
        %v2903 = vpop.f32.mrf.mxu0
        %v2904 = vadd.f32 0.0, %v2903
        %v2905 = vpop.f32.mrf.mxu0
        %v2906 = vadd.f32 0.0, %v2905
        %2907 = vmatmul.bf16.gmra.mxu0 %v2261
        %v2908 = vpop.f32.mrf.mxu0
        %v2909 = vadd.f32 0.0, %v2908
        %v2910 = vpop.f32.mrf.mxu0
        %v2911 = vadd.f32 0.0, %v2910
        %2912 = vmatmul.bf16.gmra.mxu0 %v2263
        %v2913 = vpop.f32.mrf.mxu0
        %v2914 = vadd.f32 0.0, %v2913
        %v2915 = vpop.f32.mrf.mxu0
        %v2916 = vadd.f32 0.0, %v2915
        %2917 = vmatmul.bf16.gmra.mxu0 %v2265
        %v2918 = vpop.f32.mrf.mxu0
        %v2919 = vadd.f32 0.0, %v2918
        %v2920 = vpop.f32.mrf.mxu0
        %v2921 = vadd.f32 0.0, %v2920
        %2922 = vmatmul.bf16.gmra.mxu0 %v2267
        %v2923 = vpop.f32.mrf.mxu0
        %v2924 = vadd.f32 0.0, %v2923
        %v2925 = vpop.f32.mrf.mxu0
        %v2926 = vadd.f32 0.0, %v2925
        %2927 = vmatmul.bf16.gmra.mxu0 %v2269
        %v2928 = vpop.f32.mrf.mxu0
        %v2929 = vadd.f32 0.0, %v2928
        %v2930 = vpop.f32.mrf.mxu0
        %v2931 = vadd.f32 0.0, %v2930
        %2932 = vmatmul.bf16.gmra.mxu0 %v2271
        %v2933 = vpop.f32.mrf.mxu0
        %v2934 = vadd.f32 0.0, %v2933
        %v2935 = vpop.f32.mrf.mxu0
        %v2936 = vadd.f32 0.0, %v2935
        %2937 = vdwg.mxu0
        %2938 = vmatpush.bf16.msra.mxu0 %v2747
        %2939 = vmatpush.bf16.msra.mxu0 %v2741
        %2940 = vmatpush.bf16.msra.mxu0 %v2735
        %2941 = vmatpush.bf16.msra.mxu0 %v2729
        %2942 = vmatpush.bf16.msra.mxu0 %v2723
        %2943 = vmatpush.bf16.msra.mxu0 %v2717
        %2944 = vmatpush.bf16.msra.mxu0 %v2711
        %2945 = vmatpush.bf16.msra.mxu0 %v2705
        %2946 = vmatmul.bf16.gmra.mxu0 %v2242
        %v2947 = vpop.f32.mrf.mxu0
        %v2948 = vadd.f32 %v2859, %v2947
        %v2949 = vpop.f32.mrf.mxu0
        %v2950 = vadd.f32 %v2861, %v2949
        %2951 = vmatmul.bf16.gmra.mxu0 %v2244
        %v2952 = vpop.f32.mrf.mxu0
        %v2953 = vadd.f32 %v2864, %v2952
        %v2954 = vpop.f32.mrf.mxu0
        %v2955 = vadd.f32 %v2866, %v2954
        %2956 = vmatmul.bf16.gmra.mxu0 %v2246
        %v2957 = vpop.f32.mrf.mxu0
        %v2958 = vadd.f32 %v2869, %v2957
        %v2959 = vpop.f32.mrf.mxu0
        %v2960 = vadd.f32 %v2871, %v2959
        %2961 = vmatmul.bf16.gmra.mxu0 %v2248
        %v2962 = vpop.f32.mrf.mxu0
        %v2963 = vadd.f32 %v2874, %v2962
        %v2964 = vpop.f32.mrf.mxu0
        %v2965 = vadd.f32 %v2876, %v2964
        %2966 = vmatmul.bf16.gmra.mxu0 %v2250
        %v2967 = vpop.f32.mrf.mxu0
        %v2968 = vadd.f32 %v2879, %v2967
        %v2969 = vpop.f32.mrf.mxu0
        %v2970 = vadd.f32 %v2881, %v2969
        %2971 = vmatmul.bf16.gmra.mxu0 %v2252
        %v2972 = vpop.f32.mrf.mxu0
        %v2973 = vadd.f32 %v2884, %v2972
        %v2974 = vpop.f32.mrf.mxu0
        %v2975 = vadd.f32 %v2886, %v2974
        %2976 = vmatmul.bf16.gmra.mxu0 %v2254
        %v2977 = vpop.f32.mrf.mxu0
        %v2978 = vadd.f32 %v2889, %v2977
        %v2979 = vpop.f32.mrf.mxu0
        %v2980 = vadd.f32 %v2891, %v2979
        %2981 = vmatmul.bf16.gmra.mxu0 %v2256
        %v2982 = vpop.f32.mrf.mxu0
        %v2983 = vadd.f32 %v2894, %v2982
        %v2984 = vpop.f32.mrf.mxu0
        %v2985 = vadd.f32 %v2896, %v2984
        %2986 = vmatmul.bf16.gmra.mxu0 %v2258
        %v2987 = vpop.f32.mrf.mxu0
        %v2988 = vadd.f32 %v2899, %v2987
        %v2989 = vpop.f32.mrf.mxu0
        %v2990 = vadd.f32 %v2901, %v2989
        %2991 = vmatmul.bf16.gmra.mxu0 %v2260
        %v2992 = vpop.f32.mrf.mxu0
        %v2993 = vadd.f32 %v2904, %v2992
        %v2994 = vpop.f32.mrf.mxu0
        %v2995 = vadd.f32 %v2906, %v2994
        %2996 = vmatmul.bf16.gmra.mxu0 %v2262
        %v2997 = vpop.f32.mrf.mxu0
        %v2998 = vadd.f32 %v2909, %v2997
        %v2999 = vpop.f32.mrf.mxu0
        %v3000 = vadd.f32 %v2911, %v2999
        %3001 = vmatmul.bf16.gmra.mxu0 %v2264
        %v3002 = vpop.f32.mrf.mxu0
        %v3003 = vadd.f32 %v2914, %v3002
        %v3004 = vpop.f32.mrf.mxu0
        %v3005 = vadd.f32 %v2916, %v3004
        %3006 = vmatmul.bf16.gmra.mxu0 %v2266
        %v3007 = vpop.f32.mrf.mxu0
        %v3008 = vadd.f32 %v2919, %v3007
        %v3009 = vpop.f32.mrf.mxu0
        %v3010 = vadd.f32 %v2921, %v3009
        %3011 = vmatmul.bf16.gmra.mxu0 %v2268
        %v3012 = vpop.f32.mrf.mxu0
        %v3013 = vadd.f32 %v2924, %v3012
        %v3014 = vpop.f32.mrf.mxu0
        %v3015 = vadd.f32 %v2926, %v3014
        %3016 = vmatmul.bf16.gmra.mxu0 %v2270
        %v3017 = vpop.f32.mrf.mxu0
        %v3018 = vadd.f32 %v2929, %v3017
        %v3019 = vpop.f32.mrf.mxu0
        %v3020 = vadd.f32 %v2931, %v3019
        %3021 = vmatmul.bf16.gmra.mxu0 %v2272
        %v3022 = vpop.f32.mrf.mxu0
        %v3023 = vadd.f32 %v2934, %v3022
        %v3024 = vpop.f32.mrf.mxu0
        %v3025 = vadd.f32 %v2936, %v3024
        %3026 = vdwg.mxu0
        %3027 = vmatpush.bf16.msra.mxu0 %v2700
        %3028 = vmatpush.bf16.msra.mxu0 %v2694
        %3029 = vmatpush.bf16.msra.mxu0 %v2688
        %3030 = vmatpush.bf16.msra.mxu0 %v2682
        %3031 = vmatpush.bf16.msra.mxu0 %v2676
        %3032 = vmatpush.bf16.msra.mxu0 %v2670
        %3033 = vmatpush.bf16.msra.mxu0 %v2664
        %3034 = vmatpush.bf16.msra.mxu0 %v2658
        %3035 = vmatmul.bf16.gmra.mxu0 %v2241
        %v3036 = vpop.f32.mrf.mxu0
        %v3037 = vadd.f32 0.0, %v3036
        %v3038 = vpop.f32.mrf.mxu0
        %v3039 = vadd.f32 0.0, %v3038
        %3040 = vmatmul.bf16.gmra.mxu0 %v2243
        %v3041 = vpop.f32.mrf.mxu0
        %v3042 = vadd.f32 0.0, %v3041
        %v3043 = vpop.f32.mrf.mxu0
        %v3044 = vadd.f32 0.0, %v3043
        %3045 = vmatmul.bf16.gmra.mxu0 %v2245
        %v3046 = vpop.f32.mrf.mxu0
        %v3047 = vadd.f32 0.0, %v3046
        %v3048 = vpop.f32.mrf.mxu0
        %v3049 = vadd.f32 0.0, %v3048
        %3050 = vmatmul.bf16.gmra.mxu0 %v2247
        %v3051 = vpop.f32.mrf.mxu0
        %v3052 = vadd.f32 0.0, %v3051
        %v3053 = vpop.f32.mrf.mxu0
        %v3054 = vadd.f32 0.0, %v3053
        %3055 = vmatmul.bf16.gmra.mxu0 %v2249
        %v3056 = vpop.f32.mrf.mxu0
        %v3057 = vadd.f32 0.0, %v3056
        %v3058 = vpop.f32.mrf.mxu0
        %v3059 = vadd.f32 0.0, %v3058
        %3060 = vmatmul.bf16.gmra.mxu0 %v2251
        %v3061 = vpop.f32.mrf.mxu0
        %v3062 = vadd.f32 0.0, %v3061
        %v3063 = vpop.f32.mrf.mxu0
        %v3064 = vadd.f32 0.0, %v3063
        %3065 = vmatmul.bf16.gmra.mxu0 %v2253
        %v3066 = vpop.f32.mrf.mxu0
        %v3067 = vadd.f32 0.0, %v3066
        %v3068 = vpop.f32.mrf.mxu0
        %v3069 = vadd.f32 0.0, %v3068
        %3070 = vmatmul.bf16.gmra.mxu0 %v2255
        %v3071 = vpop.f32.mrf.mxu0
        %v3072 = vadd.f32 0.0, %v3071
        %v3073 = vpop.f32.mrf.mxu0
        %v3074 = vadd.f32 0.0, %v3073
        %3075 = vmatmul.bf16.gmra.mxu0 %v2257
        %v3076 = vpop.f32.mrf.mxu0
        %v3077 = vadd.f32 0.0, %v3076
        %v3078 = vpop.f32.mrf.mxu0
        %v3079 = vadd.f32 0.0, %v3078
        %3080 = vmatmul.bf16.gmra.mxu0 %v2259
        %v3081 = vpop.f32.mrf.mxu0
        %v3082 = vadd.f32 0.0, %v3081
        %v3083 = vpop.f32.mrf.mxu0
        %v3084 = vadd.f32 0.0, %v3083
        %3085 = vmatmul.bf16.gmra.mxu0 %v2261
        %v3086 = vpop.f32.mrf.mxu0
        %v3087 = vadd.f32 0.0, %v3086
        %v3088 = vpop.f32.mrf.mxu0
        %v3089 = vadd.f32 0.0, %v3088
        %3090 = vmatmul.bf16.gmra.mxu0 %v2263
        %v3091 = vpop.f32.mrf.mxu0
        %v3092 = vadd.f32 0.0, %v3091
        %v3093 = vpop.f32.mrf.mxu0
        %v3094 = vadd.f32 0.0, %v3093
        %3095 = vmatmul.bf16.gmra.mxu0 %v2265
        %v3096 = vpop.f32.mrf.mxu0
        %v3097 = vadd.f32 0.0, %v3096
        %v3098 = vpop.f32.mrf.mxu0
        %v3099 = vadd.f32 0.0, %v3098
        %3100 = vmatmul.bf16.gmra.mxu0 %v2267
        %v3101 = vpop.f32.mrf.mxu0
        %v3102 = vadd.f32 0.0, %v3101
        %v3103 = vpop.f32.mrf.mxu0
        %v3104 = vadd.f32 0.0, %v3103
        %3105 = vmatmul.bf16.gmra.mxu0 %v2269
        %v3106 = vpop.f32.mrf.mxu0
        %v3107 = vadd.f32 0.0, %v3106
        %v3108 = vpop.f32.mrf.mxu0
        %v3109 = vadd.f32 0.0, %v3108
        %3110 = vmatmul.bf16.gmra.mxu0 %v2271
        %v3111 = vpop.f32.mrf.mxu0
        %v3112 = vadd.f32 0.0, %v3111
        %v3113 = vpop.f32.mrf.mxu0
        %v3114 = vadd.f32 0.0, %v3113
        %3115 = vdwg.mxu0
        %3116 = vmatpush.bf16.msra.mxu0 %v2748
        %3117 = vmatpush.bf16.msra.mxu0 %v2742
        %3118 = vmatpush.bf16.msra.mxu0 %v2736
        %3119 = vmatpush.bf16.msra.mxu0 %v2730
        %3120 = vmatpush.bf16.msra.mxu0 %v2724
        %3121 = vmatpush.bf16.msra.mxu0 %v2718
        %3122 = vmatpush.bf16.msra.mxu0 %v2712
        %3123 = vmatpush.bf16.msra.mxu0 %v2706
        %3124 = vmatmul.bf16.gmra.mxu0 %v2242
        %v3125 = vpop.f32.mrf.mxu0
        %v3126 = vadd.f32 %v3037, %v3125
        %v3127 = vpop.f32.mrf.mxu0
        %v3128 = vadd.f32 %v3039, %v3127
        %3129 = vmatmul.bf16.gmra.mxu0 %v2244
        %v3130 = vpop.f32.mrf.mxu0
        %v3131 = vadd.f32 %v3042, %v3130
        %v3132 = vpop.f32.mrf.mxu0
        %v3133 = vadd.f32 %v3044, %v3132
        %3134 = vmatmul.bf16.gmra.mxu0 %v2246
        %v3135 = vpop.f32.mrf.mxu0
        %v3136 = vadd.f32 %v3047, %v3135
        %v3137 = vpop.f32.mrf.mxu0
        %v3138 = vadd.f32 %v3049, %v3137
        %3139 = vmatmul.bf16.gmra.mxu0 %v2248
        %v3140 = vpop.f32.mrf.mxu0
        %v3141 = vadd.f32 %v3052, %v3140
        %v3142 = vpop.f32.mrf.mxu0
        %v3143 = vadd.f32 %v3054, %v3142
        %3144 = vmatmul.bf16.gmra.mxu0 %v2250
        %v3145 = vpop.f32.mrf.mxu0
        %v3146 = vadd.f32 %v3057, %v3145
        %v3147 = vpop.f32.mrf.mxu0
        %v3148 = vadd.f32 %v3059, %v3147
        %3149 = vmatmul.bf16.gmra.mxu0 %v2252
        %v3150 = vpop.f32.mrf.mxu0
        %v3151 = vadd.f32 %v3062, %v3150
        %v3152 = vpop.f32.mrf.mxu0
        %v3153 = vadd.f32 %v3064, %v3152
        %3154 = vmatmul.bf16.gmra.mxu0 %v2254
        %v3155 = vpop.f32.mrf.mxu0
        %v3156 = vadd.f32 %v3067, %v3155
        %v3157 = vpop.f32.mrf.mxu0
        %v3158 = vadd.f32 %v3069, %v3157
        %3159 = vmatmul.bf16.gmra.mxu0 %v2256
        %v3160 = vpop.f32.mrf.mxu0
        %v3161 = vadd.f32 %v3072, %v3160
        %v3162 = vpop.f32.mrf.mxu0
        %v3163 = vadd.f32 %v3074, %v3162
        %3164 = vmatmul.bf16.gmra.mxu0 %v2258
        %v3165 = vpop.f32.mrf.mxu0
        %v3166 = vadd.f32 %v3077, %v3165
        %v3167 = vpop.f32.mrf.mxu0
        %v3168 = vadd.f32 %v3079, %v3167
        %3169 = vmatmul.bf16.gmra.mxu0 %v2260
        %v3170 = vpop.f32.mrf.mxu0
        %v3171 = vadd.f32 %v3082, %v3170
        %v3172 = vpop.f32.mrf.mxu0
        %v3173 = vadd.f32 %v3084, %v3172
        %3174 = vmatmul.bf16.gmra.mxu0 %v2262
        %v3175 = vpop.f32.mrf.mxu0
        %v3176 = vadd.f32 %v3087, %v3175
        %v3177 = vpop.f32.mrf.mxu0
        %v3178 = vadd.f32 %v3089, %v3177
        %3179 = vmatmul.bf16.gmra.mxu0 %v2264
        %v3180 = vpop.f32.mrf.mxu0
        %v3181 = vadd.f32 %v3092, %v3180
        %v3182 = vpop.f32.mrf.mxu0
        %v3183 = vadd.f32 %v3094, %v3182
        %3184 = vmatmul.bf16.gmra.mxu0 %v2266
        %v3185 = vpop.f32.mrf.mxu0
        %v3186 = vadd.f32 %v3097, %v3185
        %v3187 = vpop.f32.mrf.mxu0
        %v3188 = vadd.f32 %v3099, %v3187
        %3189 = vmatmul.bf16.gmra.mxu0 %v2268
        %v3190 = vpop.f32.mrf.mxu0
        %v3191 = vadd.f32 %v3102, %v3190
        %v3192 = vpop.f32.mrf.mxu0
        %v3193 = vadd.f32 %v3104, %v3192
        %3194 = vmatmul.bf16.gmra.mxu0 %v2270
        %v3195 = vpop.f32.mrf.mxu0
        %v3196 = vadd.f32 %v3107, %v3195
        %v3197 = vpop.f32.mrf.mxu0
        %v3198 = vadd.f32 %v3109, %v3197
        %3199 = vmatmul.bf16.gmra.mxu0 %v2272
        %v3200 = vpop.f32.mrf.mxu0
        %v3201 = vadd.f32 %v3112, %v3200
        %v3202 = vpop.f32.mrf.mxu0
        %v3203 = vadd.f32 %v3114, %v3202
        %3204 = vdwg.mxu0
        %3205 = vmatpush.bf16.msra.mxu0 %v2701
        %3206 = vmatpush.bf16.msra.mxu0 %v2695
        %3207 = vmatpush.bf16.msra.mxu0 %v2689
        %3208 = vmatpush.bf16.msra.mxu0 %v2683
        %3209 = vmatpush.bf16.msra.mxu0 %v2677
        %3210 = vmatpush.bf16.msra.mxu0 %v2671
        %3211 = vmatpush.bf16.msra.mxu0 %v2665
        %3212 = vmatpush.bf16.msra.mxu0 %v2659
        %3213 = vmatmul.bf16.gmra.mxu0 %v2241
        %v3214 = vpop.f32.mrf.mxu0
        %v3215 = vadd.f32 0.0, %v3214
        %v3216 = vpop.f32.mrf.mxu0
        %v3217 = vadd.f32 0.0, %v3216
        %3218 = vmatmul.bf16.gmra.mxu0 %v2243
        %v3219 = vpop.f32.mrf.mxu0
        %v3220 = vadd.f32 0.0, %v3219
        %v3221 = vpop.f32.mrf.mxu0
        %v3222 = vadd.f32 0.0, %v3221
        %3223 = vmatmul.bf16.gmra.mxu0 %v2245
        %v3224 = vpop.f32.mrf.mxu0
        %v3225 = vadd.f32 0.0, %v3224
        %v3226 = vpop.f32.mrf.mxu0
        %v3227 = vadd.f32 0.0, %v3226
        %3228 = vmatmul.bf16.gmra.mxu0 %v2247
        %v3229 = vpop.f32.mrf.mxu0
        %v3230 = vadd.f32 0.0, %v3229
        %v3231 = vpop.f32.mrf.mxu0
        %v3232 = vadd.f32 0.0, %v3231
        %3233 = vmatmul.bf16.gmra.mxu0 %v2249
        %v3234 = vpop.f32.mrf.mxu0
        %v3235 = vadd.f32 0.0, %v3234
        %v3236 = vpop.f32.mrf.mxu0
        %v3237 = vadd.f32 0.0, %v3236
        %3238 = vmatmul.bf16.gmra.mxu0 %v2251
        %v3239 = vpop.f32.mrf.mxu0
        %v3240 = vadd.f32 0.0, %v3239
        %v3241 = vpop.f32.mrf.mxu0
        %v3242 = vadd.f32 0.0, %v3241
        %3243 = vmatmul.bf16.gmra.mxu0 %v2253
        %v3244 = vpop.f32.mrf.mxu0
        %v3245 = vadd.f32 0.0, %v3244
        %v3246 = vpop.f32.mrf.mxu0
        %v3247 = vadd.f32 0.0, %v3246
        %3248 = vmatmul.bf16.gmra.mxu0 %v2255
        %v3249 = vpop.f32.mrf.mxu0
        %v3250 = vadd.f32 0.0, %v3249
        %v3251 = vpop.f32.mrf.mxu0
        %v3252 = vadd.f32 0.0, %v3251
        %3253 = vmatmul.bf16.gmra.mxu0 %v2257
        %v3254 = vpop.f32.mrf.mxu0
        %v3255 = vadd.f32 0.0, %v3254
        %v3256 = vpop.f32.mrf.mxu0
        %v3257 = vadd.f32 0.0, %v3256
        %3258 = vmatmul.bf16.gmra.mxu0 %v2259
        %v3259 = vpop.f32.mrf.mxu0
        %v3260 = vadd.f32 0.0, %v3259
        %v3261 = vpop.f32.mrf.mxu0
        %v3262 = vadd.f32 0.0, %v3261
        %3263 = vmatmul.bf16.gmra.mxu0 %v2261
        %v3264 = vpop.f32.mrf.mxu0
        %v3265 = vadd.f32 0.0, %v3264
        %v3266 = vpop.f32.mrf.mxu0
        %v3267 = vadd.f32 0.0, %v3266
        %3268 = vmatmul.bf16.gmra.mxu0 %v2263
        %v3269 = vpop.f32.mrf.mxu0
        %v3270 = vadd.f32 0.0, %v3269
        %v3271 = vpop.f32.mrf.mxu0
        %v3272 = vadd.f32 0.0, %v3271
        %3273 = vmatmul.bf16.gmra.mxu0 %v2265
        %v3274 = vpop.f32.mrf.mxu0
        %v3275 = vadd.f32 0.0, %v3274
        %v3276 = vpop.f32.mrf.mxu0
        %v3277 = vadd.f32 0.0, %v3276
        %3278 = vmatmul.bf16.gmra.mxu0 %v2267
        %v3279 = vpop.f32.mrf.mxu0
        %v3280 = vadd.f32 0.0, %v3279
        %v3281 = vpop.f32.mrf.mxu0
        %v3282 = vadd.f32 0.0, %v3281
        %3283 = vmatmul.bf16.gmra.mxu0 %v2269
        %v3284 = vpop.f32.mrf.mxu0
        %v3285 = vadd.f32 0.0, %v3284
        %v3286 = vpop.f32.mrf.mxu0
        %v3287 = vadd.f32 0.0, %v3286
        %3288 = vmatmul.bf16.gmra.mxu0 %v2271
        %v3289 = vpop.f32.mrf.mxu0
        %v3290 = vadd.f32 0.0, %v3289
        %v3291 = vpop.f32.mrf.mxu0
        %v3292 = vadd.f32 0.0, %v3291
        %3293 = vdwg.mxu0
        %3294 = vmatpush.bf16.msra.mxu0 %v2749
        %3295 = vmatpush.bf16.msra.mxu0 %v2743
        %3296 = vmatpush.bf16.msra.mxu0 %v2737
        %3297 = vmatpush.bf16.msra.mxu0 %v2731
        %3298 = vmatpush.bf16.msra.mxu0 %v2725
        %3299 = vmatpush.bf16.msra.mxu0 %v2719
        %3300 = vmatpush.bf16.msra.mxu0 %v2713
        %3301 = vmatpush.bf16.msra.mxu0 %v2707
        %3302 = vmatmul.bf16.gmra.mxu0 %v2242
        %v3303 = vpop.f32.mrf.mxu0
        %v3304 = vadd.f32 %v3215, %v3303
        %v3305 = vpop.f32.mrf.mxu0
        %v3306 = vadd.f32 %v3217, %v3305
        %3307 = vmatmul.bf16.gmra.mxu0 %v2244
        %v3308 = vpop.f32.mrf.mxu0
        %v3309 = vadd.f32 %v3220, %v3308
        %v3310 = vpop.f32.mrf.mxu0
        %v3311 = vadd.f32 %v3222, %v3310
        %3312 = vmatmul.bf16.gmra.mxu0 %v2246
        %v3313 = vpop.f32.mrf.mxu0
        %v3314 = vadd.f32 %v3225, %v3313
        %v3315 = vpop.f32.mrf.mxu0
        %v3316 = vadd.f32 %v3227, %v3315
        %3317 = vmatmul.bf16.gmra.mxu0 %v2248
        %v3318 = vpop.f32.mrf.mxu0
        %v3319 = vadd.f32 %v3230, %v3318
        %v3320 = vpop.f32.mrf.mxu0
        %v3321 = vadd.f32 %v3232, %v3320
        %3322 = vmatmul.bf16.gmra.mxu0 %v2250
        %v3323 = vpop.f32.mrf.mxu0
        %v3324 = vadd.f32 %v3235, %v3323
        %v3325 = vpop.f32.mrf.mxu0
        %v3326 = vadd.f32 %v3237, %v3325
        %3327 = vmatmul.bf16.gmra.mxu0 %v2252
        %v3328 = vpop.f32.mrf.mxu0
        %v3329 = vadd.f32 %v3240, %v3328
        %v3330 = vpop.f32.mrf.mxu0
        %v3331 = vadd.f32 %v3242, %v3330
        %3332 = vmatmul.bf16.gmra.mxu0 %v2254
        %v3333 = vpop.f32.mrf.mxu0
        %v3334 = vadd.f32 %v3245, %v3333
        %v3335 = vpop.f32.mrf.mxu0
        %v3336 = vadd.f32 %v3247, %v3335
        %3337 = vmatmul.bf16.gmra.mxu0 %v2256
        %v3338 = vpop.f32.mrf.mxu0
        %v3339 = vadd.f32 %v3250, %v3338
        %v3340 = vpop.f32.mrf.mxu0
        %v3341 = vadd.f32 %v3252, %v3340
        %3342 = vmatmul.bf16.gmra.mxu0 %v2258
        %v3343 = vpop.f32.mrf.mxu0
        %v3344 = vadd.f32 %v3255, %v3343
        %v3345 = vpop.f32.mrf.mxu0
        %v3346 = vadd.f32 %v3257, %v3345
        %3347 = vmatmul.bf16.gmra.mxu0 %v2260
        %v3348 = vpop.f32.mrf.mxu0
        %v3349 = vadd.f32 %v3260, %v3348
        %v3350 = vpop.f32.mrf.mxu0
        %v3351 = vadd.f32 %v3262, %v3350
        %3352 = vmatmul.bf16.gmra.mxu0 %v2262
        %v3353 = vpop.f32.mrf.mxu0
        %v3354 = vadd.f32 %v3265, %v3353
        %v3355 = vpop.f32.mrf.mxu0
        %v3356 = vadd.f32 %v3267, %v3355
        %3357 = vmatmul.bf16.gmra.mxu0 %v2264
        %v3358 = vpop.f32.mrf.mxu0
        %v3359 = vadd.f32 %v3270, %v3358
        %v3360 = vpop.f32.mrf.mxu0
        %v3361 = vadd.f32 %v3272, %v3360
        %3362 = vmatmul.bf16.gmra.mxu0 %v2266
        %v3363 = vpop.f32.mrf.mxu0
        %v3364 = vadd.f32 %v3275, %v3363
        %v3365 = vpop.f32.mrf.mxu0
        %v3366 = vadd.f32 %v3277, %v3365
        %3367 = vmatmul.bf16.gmra.mxu0 %v2268
        %v3368 = vpop.f32.mrf.mxu0
        %v3369 = vadd.f32 %v3280, %v3368
        %v3370 = vpop.f32.mrf.mxu0
        %v3371 = vadd.f32 %v3282, %v3370
        %3372 = vmatmul.bf16.gmra.mxu0 %v2270
        %v3373 = vpop.f32.mrf.mxu0
        %v3374 = vadd.f32 %v3285, %v3373
        %v3375 = vpop.f32.mrf.mxu0
        %v3376 = vadd.f32 %v3287, %v3375
        %3377 = vmatmul.bf16.gmra.mxu0 %v2272
        %v3378 = vpop.f32.mrf.mxu0
        %v3379 = vadd.f32 %v3290, %v3378
        %v3380 = vpop.f32.mrf.mxu0
        %v3381 = vadd.f32 %v3292, %v3380
        %3382 = vdwg.mxu0
        %3383 = vmatpush.bf16.msra.mxu0 %v2702
        %3384 = vmatpush.bf16.msra.mxu0 %v2696
        %3385 = vmatpush.bf16.msra.mxu0 %v2690
        %3386 = vmatpush.bf16.msra.mxu0 %v2684
        %3387 = vmatpush.bf16.msra.mxu0 %v2678
        %3388 = vmatpush.bf16.msra.mxu0 %v2672
        %3389 = vmatpush.bf16.msra.mxu0 %v2666
        %3390 = vmatpush.bf16.msra.mxu0 %v2660
        %3391 = vmatmul.bf16.gmra.mxu0 %v2241
        %v3392 = vpop.f32.mrf.mxu0
        %v3393 = vadd.f32 0.0, %v3392
        %v3394 = vpop.f32.mrf.mxu0
        %v3395 = vadd.f32 0.0, %v3394
        %3396 = vmatmul.bf16.gmra.mxu0 %v2243
        %v3397 = vpop.f32.mrf.mxu0
        %v3398 = vadd.f32 0.0, %v3397
        %v3399 = vpop.f32.mrf.mxu0
        %v3400 = vadd.f32 0.0, %v3399
        %3401 = vmatmul.bf16.gmra.mxu0 %v2245
        %v3402 = vpop.f32.mrf.mxu0
        %v3403 = vadd.f32 0.0, %v3402
        %v3404 = vpop.f32.mrf.mxu0
        %v3405 = vadd.f32 0.0, %v3404
        %3406 = vmatmul.bf16.gmra.mxu0 %v2247
        %v3407 = vpop.f32.mrf.mxu0
        %v3408 = vadd.f32 0.0, %v3407
        %v3409 = vpop.f32.mrf.mxu0
        %v3410 = vadd.f32 0.0, %v3409
        %3411 = vmatmul.bf16.gmra.mxu0 %v2249
        %v3412 = vpop.f32.mrf.mxu0
        %v3413 = vadd.f32 0.0, %v3412
        %v3414 = vpop.f32.mrf.mxu0
        %v3415 = vadd.f32 0.0, %v3414
        %3416 = vmatmul.bf16.gmra.mxu0 %v2251
        %v3417 = vpop.f32.mrf.mxu0
        %v3418 = vadd.f32 0.0, %v3417
        %v3419 = vpop.f32.mrf.mxu0
        %v3420 = vadd.f32 0.0, %v3419
        %3421 = vmatmul.bf16.gmra.mxu0 %v2253
        %v3422 = vpop.f32.mrf.mxu0
        %v3423 = vadd.f32 0.0, %v3422
        %v3424 = vpop.f32.mrf.mxu0
        %v3425 = vadd.f32 0.0, %v3424
        %3426 = vmatmul.bf16.gmra.mxu0 %v2255
        %v3427 = vpop.f32.mrf.mxu0
        %v3428 = vadd.f32 0.0, %v3427
        %v3429 = vpop.f32.mrf.mxu0
        %v3430 = vadd.f32 0.0, %v3429
        %3431 = vmatmul.bf16.gmra.mxu0 %v2257
        %v3432 = vpop.f32.mrf.mxu0
        %v3433 = vadd.f32 0.0, %v3432
        %v3434 = vpop.f32.mrf.mxu0
        %v3435 = vadd.f32 0.0, %v3434
        %3436 = vmatmul.bf16.gmra.mxu0 %v2259
        %v3437 = vpop.f32.mrf.mxu0
        %v3438 = vadd.f32 0.0, %v3437
        %v3439 = vpop.f32.mrf.mxu0
        %v3440 = vadd.f32 0.0, %v3439
        %3441 = vmatmul.bf16.gmra.mxu0 %v2261
        %v3442 = vpop.f32.mrf.mxu0
        %v3443 = vadd.f32 0.0, %v3442
        %v3444 = vpop.f32.mrf.mxu0
        %v3445 = vadd.f32 0.0, %v3444
        %3446 = vmatmul.bf16.gmra.mxu0 %v2263
        %v3447 = vpop.f32.mrf.mxu0
        %v3448 = vadd.f32 0.0, %v3447
        %v3449 = vpop.f32.mrf.mxu0
        %v3450 = vadd.f32 0.0, %v3449
        %3451 = vmatmul.bf16.gmra.mxu0 %v2265
        %v3452 = vpop.f32.mrf.mxu0
        %v3453 = vadd.f32 0.0, %v3452
        %v3454 = vpop.f32.mrf.mxu0
        %v3455 = vadd.f32 0.0, %v3454
        %3456 = vmatmul.bf16.gmra.mxu0 %v2267
        %v3457 = vpop.f32.mrf.mxu0
        %v3458 = vadd.f32 0.0, %v3457
        %v3459 = vpop.f32.mrf.mxu0
        %v3460 = vadd.f32 0.0, %v3459
        %3461 = vmatmul.bf16.gmra.mxu0 %v2269
        %v3462 = vpop.f32.mrf.mxu0
        %v3463 = vadd.f32 0.0, %v3462
        %v3464 = vpop.f32.mrf.mxu0
        %v3465 = vadd.f32 0.0, %v3464
        %3466 = vmatmul.bf16.gmra.mxu0 %v2271
        %v3467 = vpop.f32.mrf.mxu0
        %v3468 = vadd.f32 0.0, %v3467
        %v3469 = vpop.f32.mrf.mxu0
        %v3470 = vadd.f32 0.0, %v3469
        %3471 = vdwg.mxu0
        %3472 = vmatpush.bf16.msra.mxu0 %v2750
        %3473 = vmatpush.bf16.msra.mxu0 %v2744
        %3474 = vmatpush.bf16.msra.mxu0 %v2738
        %3475 = vmatpush.bf16.msra.mxu0 %v2732
        %3476 = vmatpush.bf16.msra.mxu0 %v2726
        %3477 = vmatpush.bf16.msra.mxu0 %v2720
        %3478 = vmatpush.bf16.msra.mxu0 %v2714
        %3479 = vmatpush.bf16.msra.mxu0 %v2708
        %3480 = vmatmul.bf16.gmra.mxu0 %v2242
        %v3481 = vpop.f32.mrf.mxu0
        %v3482 = vadd.f32 %v3393, %v3481
        %v3483 = vpop.f32.mrf.mxu0
        %v3484 = vadd.f32 %v3395, %v3483
        %3485 = vmatmul.bf16.gmra.mxu0 %v2244
        %v3486 = vpop.f32.mrf.mxu0
        %v3487 = vadd.f32 %v3398, %v3486
        %v3488 = vpop.f32.mrf.mxu0
        %v3489 = vadd.f32 %v3400, %v3488
        %3490 = vmatmul.bf16.gmra.mxu0 %v2246
        %v3491 = vpop.f32.mrf.mxu0
        %v3492 = vadd.f32 %v3403, %v3491
        %v3493 = vpop.f32.mrf.mxu0
        %v3494 = vadd.f32 %v3405, %v3493
        %3495 = vmatmul.bf16.gmra.mxu0 %v2248
        %v3496 = vpop.f32.mrf.mxu0
        %v3497 = vadd.f32 %v3408, %v3496
        %v3498 = vpop.f32.mrf.mxu0
        %v3499 = vadd.f32 %v3410, %v3498
        %3500 = vmatmul.bf16.gmra.mxu0 %v2250
        %v3501 = vpop.f32.mrf.mxu0
        %v3502 = vadd.f32 %v3413, %v3501
        %v3503 = vpop.f32.mrf.mxu0
        %v3504 = vadd.f32 %v3415, %v3503
        %3505 = vmatmul.bf16.gmra.mxu0 %v2252
        %v3506 = vpop.f32.mrf.mxu0
        %v3507 = vadd.f32 %v3418, %v3506
        %v3508 = vpop.f32.mrf.mxu0
        %v3509 = vadd.f32 %v3420, %v3508
        %3510 = vmatmul.bf16.gmra.mxu0 %v2254
        %v3511 = vpop.f32.mrf.mxu0
        %v3512 = vadd.f32 %v3423, %v3511
        %v3513 = vpop.f32.mrf.mxu0
        %v3514 = vadd.f32 %v3425, %v3513
        %3515 = vmatmul.bf16.gmra.mxu0 %v2256
        %v3516 = vpop.f32.mrf.mxu0
        %v3517 = vadd.f32 %v3428, %v3516
        %v3518 = vpop.f32.mrf.mxu0
        %v3519 = vadd.f32 %v3430, %v3518
        %3520 = vmatmul.bf16.gmra.mxu0 %v2258
        %v3521 = vpop.f32.mrf.mxu0
        %v3522 = vadd.f32 %v3433, %v3521
        %v3523 = vpop.f32.mrf.mxu0
        %v3524 = vadd.f32 %v3435, %v3523
        %3525 = vmatmul.bf16.gmra.mxu0 %v2260
        %v3526 = vpop.f32.mrf.mxu0
        %v3527 = vadd.f32 %v3438, %v3526
        %v3528 = vpop.f32.mrf.mxu0
        %v3529 = vadd.f32 %v3440, %v3528
        %3530 = vmatmul.bf16.gmra.mxu0 %v2262
        %v3531 = vpop.f32.mrf.mxu0
        %v3532 = vadd.f32 %v3443, %v3531
        %v3533 = vpop.f32.mrf.mxu0
        %v3534 = vadd.f32 %v3445, %v3533
        %3535 = vmatmul.bf16.gmra.mxu0 %v2264
        %v3536 = vpop.f32.mrf.mxu0
        %v3537 = vadd.f32 %v3448, %v3536
        %v3538 = vpop.f32.mrf.mxu0
        %v3539 = vadd.f32 %v3450, %v3538
        %3540 = vmatmul.bf16.gmra.mxu0 %v2266
        %v3541 = vpop.f32.mrf.mxu0
        %v3542 = vadd.f32 %v3453, %v3541
        %v3543 = vpop.f32.mrf.mxu0
        %v3544 = vadd.f32 %v3455, %v3543
        %3545 = vmatmul.bf16.gmra.mxu0 %v2268
        %v3546 = vpop.f32.mrf.mxu0
        %v3547 = vadd.f32 %v3458, %v3546
        %v3548 = vpop.f32.mrf.mxu0
        %v3549 = vadd.f32 %v3460, %v3548
        %3550 = vmatmul.bf16.gmra.mxu0 %v2270
        %v3551 = vpop.f32.mrf.mxu0
        %v3552 = vadd.f32 %v3463, %v3551
        %v3553 = vpop.f32.mrf.mxu0
        %v3554 = vadd.f32 %v3465, %v3553
        %3555 = vmatmul.bf16.gmra.mxu0 %v2272
        %v3556 = vpop.f32.mrf.mxu0
        %v3557 = vadd.f32 %v3468, %v3556
        %v3558 = vpop.f32.mrf.mxu0
        %v3559 = vadd.f32 %v3470, %v3558
        %3560 = vdwg.mxu0
        %3561 = vmatpush.bf16.msra.mxu0 %v2703
        %3562 = vmatpush.bf16.msra.mxu0 %v2697
        %3563 = vmatpush.bf16.msra.mxu0 %v2691
        %3564 = vmatpush.bf16.msra.mxu0 %v2685
        %3565 = vmatpush.bf16.msra.mxu0 %v2679
        %3566 = vmatpush.bf16.msra.mxu0 %v2673
        %3567 = vmatpush.bf16.msra.mxu0 %v2667
        %3568 = vmatpush.bf16.msra.mxu0 %v2661
        %3569 = vmatmul.bf16.gmra.mxu0 %v2241
        %v3570 = vpop.f32.mrf.mxu0
        %v3571 = vadd.f32 0.0, %v3570
        %v3572 = vpop.f32.mrf.mxu0
        %v3573 = vadd.f32 0.0, %v3572
        %3574 = vmatmul.bf16.gmra.mxu0 %v2243
        %v3575 = vpop.f32.mrf.mxu0
        %v3576 = vadd.f32 0.0, %v3575
        %v3577 = vpop.f32.mrf.mxu0
        %v3578 = vadd.f32 0.0, %v3577
        %3579 = vmatmul.bf16.gmra.mxu0 %v2245
        %v3580 = vpop.f32.mrf.mxu0
        %v3581 = vadd.f32 0.0, %v3580
        %v3582 = vpop.f32.mrf.mxu0
        %v3583 = vadd.f32 0.0, %v3582
        %3584 = vmatmul.bf16.gmra.mxu0 %v2247
        %v3585 = vpop.f32.mrf.mxu0
        %v3586 = vadd.f32 0.0, %v3585
        %v3587 = vpop.f32.mrf.mxu0
        %v3588 = vadd.f32 0.0, %v3587
        %3589 = vmatmul.bf16.gmra.mxu0 %v2249
        %v3590 = vpop.f32.mrf.mxu0
        %v3591 = vadd.f32 0.0, %v3590
        %v3592 = vpop.f32.mrf.mxu0
        %v3593 = vadd.f32 0.0, %v3592
        %3594 = vmatmul.bf16.gmra.mxu0 %v2251
        %v3595 = vpop.f32.mrf.mxu0
        %v3596 = vadd.f32 0.0, %v3595
        %v3597 = vpop.f32.mrf.mxu0
        %v3598 = vadd.f32 0.0, %v3597
        %3599 = vmatmul.bf16.gmra.mxu0 %v2253
        %v3600 = vpop.f32.mrf.mxu0
        %v3601 = vadd.f32 0.0, %v3600
        %v3602 = vpop.f32.mrf.mxu0
        %v3603 = vadd.f32 0.0, %v3602
        %3604 = vmatmul.bf16.gmra.mxu0 %v2255
        %v3605 = vpop.f32.mrf.mxu0
        %v3606 = vadd.f32 0.0, %v3605
        %v3607 = vpop.f32.mrf.mxu0
        %v3608 = vadd.f32 0.0, %v3607
        %3609 = vmatmul.bf16.gmra.mxu0 %v2257
        %v3610 = vpop.f32.mrf.mxu0
        %v3611 = vadd.f32 0.0, %v3610
        %v3612 = vpop.f32.mrf.mxu0
        %v3613 = vadd.f32 0.0, %v3612
        %3614 = vmatmul.bf16.gmra.mxu0 %v2259
        %v3615 = vpop.f32.mrf.mxu0
        %v3616 = vadd.f32 0.0, %v3615
        %v3617 = vpop.f32.mrf.mxu0
        %v3618 = vadd.f32 0.0, %v3617
        %3619 = vmatmul.bf16.gmra.mxu0 %v2261
        %v3620 = vpop.f32.mrf.mxu0
        %v3621 = vadd.f32 0.0, %v3620
        %v3622 = vpop.f32.mrf.mxu0
        %v3623 = vadd.f32 0.0, %v3622
        %3624 = vmatmul.bf16.gmra.mxu0 %v2263
        %v3625 = vpop.f32.mrf.mxu0
        %v3626 = vadd.f32 0.0, %v3625
        %v3627 = vpop.f32.mrf.mxu0
        %v3628 = vadd.f32 0.0, %v3627
        %3629 = vmatmul.bf16.gmra.mxu0 %v2265
        %v3630 = vpop.f32.mrf.mxu0
        %v3631 = vadd.f32 0.0, %v3630
        %v3632 = vpop.f32.mrf.mxu0
        %v3633 = vadd.f32 0.0, %v3632
        %3634 = vmatmul.bf16.gmra.mxu0 %v2267
        %v3635 = vpop.f32.mrf.mxu0
        %v3636 = vadd.f32 0.0, %v3635
        %v3637 = vpop.f32.mrf.mxu0
        %v3638 = vadd.f32 0.0, %v3637
        %3639 = vmatmul.bf16.gmra.mxu0 %v2269
        %v3640 = vpop.f32.mrf.mxu0
        %v3641 = vadd.f32 0.0, %v3640
        %v3642 = vpop.f32.mrf.mxu0
        %v3643 = vadd.f32 0.0, %v3642
        %3644 = vmatmul.bf16.gmra.mxu0 %v2271
        %v3645 = vpop.f32.mrf.mxu0
        %v3646 = vadd.f32 0.0, %v3645
        %v3647 = vpop.f32.mrf.mxu0
        %v3648 = vadd.f32 0.0, %v3647
        %3649 = vdwg.mxu0
        %3650 = vmatpush.bf16.msra.mxu0 %v2751
        %3651 = vmatpush.bf16.msra.mxu0 %v2745
        %3652 = vmatpush.bf16.msra.mxu0 %v2739
        %3653 = vmatpush.bf16.msra.mxu0 %v2733
        %3654 = vmatpush.bf16.msra.mxu0 %v2727
        %3655 = vmatpush.bf16.msra.mxu0 %v2721
        %3656 = vmatpush.bf16.msra.mxu0 %v2715
        %3657 = vmatpush.bf16.msra.mxu0 %v2709
        %3658 = vmatmul.bf16.gmra.mxu0 %v2242
        %v3659 = vpop.f32.mrf.mxu0
        %v3660 = vadd.f32 %v3571, %v3659
        %v3661 = vpop.f32.mrf.mxu0
        %v3662 = vadd.f32 %v3573, %v3661
        %3663 = vmatmul.bf16.gmra.mxu0 %v2244
        %v3664 = vpop.f32.mrf.mxu0
        %v3665 = vadd.f32 %v3576, %v3664
        %v3666 = vpop.f32.mrf.mxu0
        %v3667 = vadd.f32 %v3578, %v3666
        %3668 = vmatmul.bf16.gmra.mxu0 %v2246
        %v3669 = vpop.f32.mrf.mxu0
        %v3670 = vadd.f32 %v3581, %v3669
        %v3671 = vpop.f32.mrf.mxu0
        %v3672 = vadd.f32 %v3583, %v3671
        %3673 = vmatmul.bf16.gmra.mxu0 %v2248
        %v3674 = vpop.f32.mrf.mxu0
        %v3675 = vadd.f32 %v3586, %v3674
        %v3676 = vpop.f32.mrf.mxu0
        %v3677 = vadd.f32 %v3588, %v3676
        %3678 = vmatmul.bf16.gmra.mxu0 %v2250
        %v3679 = vpop.f32.mrf.mxu0
        %v3680 = vadd.f32 %v3591, %v3679
        %v3681 = vpop.f32.mrf.mxu0
        %v3682 = vadd.f32 %v3593, %v3681
        %3683 = vmatmul.bf16.gmra.mxu0 %v2252
        %v3684 = vpop.f32.mrf.mxu0
        %v3685 = vadd.f32 %v3596, %v3684
        %v3686 = vpop.f32.mrf.mxu0
        %v3687 = vadd.f32 %v3598, %v3686
        %3688 = vmatmul.bf16.gmra.mxu0 %v2254
        %v3689 = vpop.f32.mrf.mxu0
        %v3690 = vadd.f32 %v3601, %v3689
        %v3691 = vpop.f32.mrf.mxu0
        %v3692 = vadd.f32 %v3603, %v3691
        %3693 = vmatmul.bf16.gmra.mxu0 %v2256
        %v3694 = vpop.f32.mrf.mxu0
        %v3695 = vadd.f32 %v3606, %v3694
        %v3696 = vpop.f32.mrf.mxu0
        %v3697 = vadd.f32 %v3608, %v3696
        %3698 = vmatmul.bf16.gmra.mxu0 %v2258
        %v3699 = vpop.f32.mrf.mxu0
        %v3700 = vadd.f32 %v3611, %v3699
        %v3701 = vpop.f32.mrf.mxu0
        %v3702 = vadd.f32 %v3613, %v3701
        %3703 = vmatmul.bf16.gmra.mxu0 %v2260
        %v3704 = vpop.f32.mrf.mxu0
        %v3705 = vadd.f32 %v3616, %v3704
        %v3706 = vpop.f32.mrf.mxu0
        %v3707 = vadd.f32 %v3618, %v3706
        %3708 = vmatmul.bf16.gmra.mxu0 %v2262
        %v3709 = vpop.f32.mrf.mxu0
        %v3710 = vadd.f32 %v3621, %v3709
        %v3711 = vpop.f32.mrf.mxu0
        %v3712 = vadd.f32 %v3623, %v3711
        %3713 = vmatmul.bf16.gmra.mxu0 %v2264
        %v3714 = vpop.f32.mrf.mxu0
        %v3715 = vadd.f32 %v3626, %v3714
        %v3716 = vpop.f32.mrf.mxu0
        %v3717 = vadd.f32 %v3628, %v3716
        %3718 = vmatmul.bf16.gmra.mxu0 %v2266
        %v3719 = vpop.f32.mrf.mxu0
        %v3720 = vadd.f32 %v3631, %v3719
        %v3721 = vpop.f32.mrf.mxu0
        %v3722 = vadd.f32 %v3633, %v3721
        %3723 = vmatmul.bf16.gmra.mxu0 %v2268
        %v3724 = vpop.f32.mrf.mxu0
        %v3725 = vadd.f32 %v3636, %v3724
        %v3726 = vpop.f32.mrf.mxu0
        %v3727 = vadd.f32 %v3638, %v3726
        %3728 = vmatmul.bf16.gmra.mxu0 %v2270
        %v3729 = vpop.f32.mrf.mxu0
        %v3730 = vadd.f32 %v3641, %v3729
        %v3731 = vpop.f32.mrf.mxu0
        %v3732 = vadd.f32 %v3643, %v3731
        %3733 = vmatmul.bf16.gmra.mxu0 %v2272
        %v3734 = vpop.f32.mrf.mxu0
        %v3735 = vadd.f32 %v3646, %v3734
        %v3736 = vpop.f32.mrf.mxu0
        %v3737 = vadd.f32 %v3648, %v3736
        %3738 = vdwg.mxu0
        %3739 = vmatpush.bf16.msra.mxu0 %v2704
        %3740 = vmatpush.bf16.msra.mxu0 %v2698
        %3741 = vmatpush.bf16.msra.mxu0 %v2692
        %3742 = vmatpush.bf16.msra.mxu0 %v2686
        %3743 = vmatpush.bf16.msra.mxu0 %v2680
        %3744 = vmatpush.bf16.msra.mxu0 %v2674
        %3745 = vmatpush.bf16.msra.mxu0 %v2668
        %3746 = vmatpush.bf16.msra.mxu0 %v2662
        %3747 = vmatmul.bf16.gmra.mxu0 %v2241
        %v3748 = vpop.f32.mrf.mxu0
        %v3749 = vadd.f32 0.0, %v3748
        %v3750 = vpop.f32.mrf.mxu0
        %v3751 = vadd.f32 0.0, %v3750
        %3752 = vmatmul.bf16.gmra.mxu0 %v2243
        %v3753 = vpop.f32.mrf.mxu0
        %v3754 = vadd.f32 0.0, %v3753
        %v3755 = vpop.f32.mrf.mxu0
        %v3756 = vadd.f32 0.0, %v3755
        %3757 = vmatmul.bf16.gmra.mxu0 %v2245
        %v3758 = vpop.f32.mrf.mxu0
        %v3759 = vadd.f32 0.0, %v3758
        %v3760 = vpop.f32.mrf.mxu0
        %v3761 = vadd.f32 0.0, %v3760
        %3762 = vmatmul.bf16.gmra.mxu0 %v2247
        %v3763 = vpop.f32.mrf.mxu0
        %v3764 = vadd.f32 0.0, %v3763
        %v3765 = vpop.f32.mrf.mxu0
        %v3766 = vadd.f32 0.0, %v3765
        %3767 = vmatmul.bf16.gmra.mxu0 %v2249
        %v3768 = vpop.f32.mrf.mxu0
        %v3769 = vadd.f32 0.0, %v3768
        %v3770 = vpop.f32.mrf.mxu0
        %v3771 = vadd.f32 0.0, %v3770
        %3772 = vmatmul.bf16.gmra.mxu0 %v2251
        %v3773 = vpop.f32.mrf.mxu0
        %v3774 = vadd.f32 0.0, %v3773
        %v3775 = vpop.f32.mrf.mxu0
        %v3776 = vadd.f32 0.0, %v3775
        %3777 = vmatmul.bf16.gmra.mxu0 %v2253
        %v3778 = vpop.f32.mrf.mxu0
        %v3779 = vadd.f32 0.0, %v3778
        %v3780 = vpop.f32.mrf.mxu0
        %v3781 = vadd.f32 0.0, %v3780
        %3782 = vmatmul.bf16.gmra.mxu0 %v2255
        %v3783 = vpop.f32.mrf.mxu0
        %v3784 = vadd.f32 0.0, %v3783
        %v3785 = vpop.f32.mrf.mxu0
        %v3786 = vadd.f32 0.0, %v3785
        %3787 = vmatmul.bf16.gmra.mxu0 %v2257
        %v3788 = vpop.f32.mrf.mxu0
        %v3789 = vadd.f32 0.0, %v3788
        %v3790 = vpop.f32.mrf.mxu0
        %v3791 = vadd.f32 0.0, %v3790
        %3792 = vmatmul.bf16.gmra.mxu0 %v2259
        %v3793 = vpop.f32.mrf.mxu0
        %v3794 = vadd.f32 0.0, %v3793
        %v3795 = vpop.f32.mrf.mxu0
        %v3796 = vadd.f32 0.0, %v3795
        %3797 = vmatmul.bf16.gmra.mxu0 %v2261
        %v3798 = vpop.f32.mrf.mxu0
        %v3799 = vadd.f32 0.0, %v3798
        %v3800 = vpop.f32.mrf.mxu0
        %v3801 = vadd.f32 0.0, %v3800
        %3802 = vmatmul.bf16.gmra.mxu0 %v2263
        %v3803 = vpop.f32.mrf.mxu0
        %v3804 = vadd.f32 0.0, %v3803
        %v3805 = vpop.f32.mrf.mxu0
        %v3806 = vadd.f32 0.0, %v3805
        %3807 = vmatmul.bf16.gmra.mxu0 %v2265
        %v3808 = vpop.f32.mrf.mxu0
        %v3809 = vadd.f32 0.0, %v3808
        %v3810 = vpop.f32.mrf.mxu0
        %v3811 = vadd.f32 0.0, %v3810
        %3812 = vmatmul.bf16.gmra.mxu0 %v2267
        %v3813 = vpop.f32.mrf.mxu0
        %v3814 = vadd.f32 0.0, %v3813
        %v3815 = vpop.f32.mrf.mxu0
        %v3816 = vadd.f32 0.0, %v3815
        %3817 = vmatmul.bf16.gmra.mxu0 %v2269
        %v3818 = vpop.f32.mrf.mxu0
        %v3819 = vadd.f32 0.0, %v3818
        %v3820 = vpop.f32.mrf.mxu0
        %v3821 = vadd.f32 0.0, %v3820
        %3822 = vmatmul.bf16.gmra.mxu0 %v2271
        %v3823 = vpop.f32.mrf.mxu0
        %v3824 = vadd.f32 0.0, %v3823
        %v3825 = vpop.f32.mrf.mxu0
        %v3826 = vadd.f32 0.0, %v3825
        %3827 = vdwg.mxu0
        %3828 = vmatpush.bf16.msra.mxu0 %v2752
        %3829 = vmatpush.bf16.msra.mxu0 %v2746
        %3830 = vmatpush.bf16.msra.mxu0 %v2740
        %3831 = vmatpush.bf16.msra.mxu0 %v2734
        %3832 = vmatpush.bf16.msra.mxu0 %v2728
        %3833 = vmatpush.bf16.msra.mxu0 %v2722
        %3834 = vmatpush.bf16.msra.mxu0 %v2716
        %3835 = vmatpush.bf16.msra.mxu0 %v2710
        %3836 = vmatmul.bf16.gmra.mxu0 %v2242
        %v3837 = vpop.f32.mrf.mxu0
        %v3838 = vadd.f32 %v3749, %v3837
        %v3839 = vpop.f32.mrf.mxu0
        %v3840 = vadd.f32 %v3751, %v3839
        %3841 = vmatmul.bf16.gmra.mxu0 %v2244
        %v3842 = vpop.f32.mrf.mxu0
        %v3843 = vadd.f32 %v3754, %v3842
        %v3844 = vpop.f32.mrf.mxu0
        %v3845 = vadd.f32 %v3756, %v3844
        %3846 = vmatmul.bf16.gmra.mxu0 %v2246
        %v3847 = vpop.f32.mrf.mxu0
        %v3848 = vadd.f32 %v3759, %v3847
        %v3849 = vpop.f32.mrf.mxu0
        %v3850 = vadd.f32 %v3761, %v3849
        %3851 = vmatmul.bf16.gmra.mxu0 %v2248
        %v3852 = vpop.f32.mrf.mxu0
        %v3853 = vadd.f32 %v3764, %v3852
        %v3854 = vpop.f32.mrf.mxu0
        %v3855 = vadd.f32 %v3766, %v3854
        %3856 = vmatmul.bf16.gmra.mxu0 %v2250
        %v3857 = vpop.f32.mrf.mxu0
        %v3858 = vadd.f32 %v3769, %v3857
        %v3859 = vpop.f32.mrf.mxu0
        %v3860 = vadd.f32 %v3771, %v3859
        %3861 = vmatmul.bf16.gmra.mxu0 %v2252
        %v3862 = vpop.f32.mrf.mxu0
        %v3863 = vadd.f32 %v3774, %v3862
        %v3864 = vpop.f32.mrf.mxu0
        %v3865 = vadd.f32 %v3776, %v3864
        %3866 = vmatmul.bf16.gmra.mxu0 %v2254
        %v3867 = vpop.f32.mrf.mxu0
        %v3868 = vadd.f32 %v3779, %v3867
        %v3869 = vpop.f32.mrf.mxu0
        %v3870 = vadd.f32 %v3781, %v3869
        %3871 = vmatmul.bf16.gmra.mxu0 %v2256
        %v3872 = vpop.f32.mrf.mxu0
        %v3873 = vadd.f32 %v3784, %v3872
        %v3874 = vpop.f32.mrf.mxu0
        %v3875 = vadd.f32 %v3786, %v3874
        %3876 = vmatmul.bf16.gmra.mxu0 %v2258
        %v3877 = vpop.f32.mrf.mxu0
        %v3878 = vadd.f32 %v3789, %v3877
        %v3879 = vpop.f32.mrf.mxu0
        %v3880 = vadd.f32 %v3791, %v3879
        %3881 = vmatmul.bf16.gmra.mxu0 %v2260
        %v3882 = vpop.f32.mrf.mxu0
        %v3883 = vadd.f32 %v3794, %v3882
        %v3884 = vpop.f32.mrf.mxu0
        %v3885 = vadd.f32 %v3796, %v3884
        %3886 = vmatmul.bf16.gmra.mxu0 %v2262
        %v3887 = vpop.f32.mrf.mxu0
        %v3888 = vadd.f32 %v3799, %v3887
        %v3889 = vpop.f32.mrf.mxu0
        %v3890 = vadd.f32 %v3801, %v3889
        %3891 = vmatmul.bf16.gmra.mxu0 %v2264
        %v3892 = vpop.f32.mrf.mxu0
        %v3893 = vadd.f32 %v3804, %v3892
        %v3894 = vpop.f32.mrf.mxu0
        %v3895 = vadd.f32 %v3806, %v3894
        %3896 = vmatmul.bf16.gmra.mxu0 %v2266
        %v3897 = vpop.f32.mrf.mxu0
        %v3898 = vadd.f32 %v3809, %v3897
        %v3899 = vpop.f32.mrf.mxu0
        %v3900 = vadd.f32 %v3811, %v3899
        %3901 = vmatmul.bf16.gmra.mxu0 %v2268
        %v3902 = vpop.f32.mrf.mxu0
        %v3903 = vadd.f32 %v3814, %v3902
        %v3904 = vpop.f32.mrf.mxu0
        %v3905 = vadd.f32 %v3816, %v3904
        %3906 = vmatmul.bf16.gmra.mxu0 %v2270
        %v3907 = vpop.f32.mrf.mxu0
        %v3908 = vadd.f32 %v3819, %v3907
        %v3909 = vpop.f32.mrf.mxu0
        %v3910 = vadd.f32 %v3821, %v3909
        %3911 = vmatmul.bf16.gmra.mxu0 %v2272
        %v3912 = vpop.f32.mrf.mxu0
        %v3913 = vadd.f32 %v3824, %v3912
        %v3914 = vpop.f32.mrf.mxu0
        %v3915 = vadd.f32 %v3826, %v3914
        %3916 = vdwg.mxu0
        %v3917 = vsub.f32 %v2948, %v245
        %v3918 = vsub.f32 %v3126, %v246
        %v3919 = vsub.f32 %v3304, %v247
        %v3920 = vsub.f32 %v3482, %v248
        %v3921 = vsub.f32 %v3660, %v249
        %v3922 = vsub.f32 %v3838, %v250
        %v3923 = vsub.f32 %v2950, %v251
        %v3924 = vsub.f32 %v3128, %v252
        %v3925 = vsub.f32 %v3306, %v253
        %v3926 = vsub.f32 %v3484, %v254
        %v3927 = vsub.f32 %v3662, %v255
        %v3928 = vsub.f32 %v3840, %v256
        %v3929 = vsub.f32 %v2953, %v257
        %v3930 = vsub.f32 %v3131, %v258
        %v3931 = vsub.f32 %v3309, %v259
        %v3932 = vsub.f32 %v3487, %v260
        %v3933 = vsub.f32 %v3665, %v261
        %v3934 = vsub.f32 %v3843, %v262
        %v3935 = vsub.f32 %v2955, %v263
        %v3936 = vsub.f32 %v3133, %v264
        %v3937 = vsub.f32 %v3311, %v265
        %v3938 = vsub.f32 %v3489, %v266
        %v3939 = vsub.f32 %v3667, %v267
        %v3940 = vsub.f32 %v3845, %v268
        %v3941 = vsub.f32 %v2958, %v269
        %v3942 = vsub.f32 %v3136, %v270
        %v3943 = vsub.f32 %v3314, %v271
        %v3944 = vsub.f32 %v3492, %v272
        %v3945 = vsub.f32 %v3670, %v273
        %v3946 = vsub.f32 %v3848, %v274
        %v3947 = vsub.f32 %v2960, %v275
        %v3948 = vsub.f32 %v3138, %v276
        %v3949 = vsub.f32 %v3316, %v277
        %v3950 = vsub.f32 %v3494, %v278
        %v3951 = vsub.f32 %v3672, %v279
        %v3952 = vsub.f32 %v3850, %v280
        %v3953 = vsub.f32 %v2963, %v281
        %v3954 = vsub.f32 %v3141, %v282
        %v3955 = vsub.f32 %v3319, %v283
        %v3956 = vsub.f32 %v3497, %v284
        %v3957 = vsub.f32 %v3675, %v285
        %v3958 = vsub.f32 %v3853, %v286
        %v3959 = vsub.f32 %v2965, %v287
        %v3960 = vsub.f32 %v3143, %v288
        %v3961 = vsub.f32 %v3321, %v289
        %v3962 = vsub.f32 %v3499, %v290
        %v3963 = vsub.f32 %v3677, %v291
        %v3964 = vsub.f32 %v3855, %v292
        %v3965 = vsub.f32 %v2968, %v293
        %v3966 = vsub.f32 %v3146, %v294
        %v3967 = vsub.f32 %v3324, %v295
        %v3968 = vsub.f32 %v3502, %v296
        %v3969 = vsub.f32 %v3680, %v297
        %v3970 = vsub.f32 %v3858, %v298
        %v3971 = vsub.f32 %v2970, %v299
        %v3972 = vsub.f32 %v3148, %v300
        %v3973 = vsub.f32 %v3326, %v301
        %v3974 = vsub.f32 %v3504, %v302
        %v3975 = vsub.f32 %v3682, %v303
        %v3976 = vsub.f32 %v3860, %v304
        %v3977 = vsub.f32 %v2973, %v305
        %v3978 = vsub.f32 %v3151, %v306
        %v3979 = vsub.f32 %v3329, %v307
        %v3980 = vsub.f32 %v3507, %v308
        %v3981 = vsub.f32 %v3685, %v309
        %v3982 = vsub.f32 %v3863, %v310
        %v3983 = vsub.f32 %v2975, %v311
        %v3984 = vsub.f32 %v3153, %v312
        %v3985 = vsub.f32 %v3331, %v313
        %v3986 = vsub.f32 %v3509, %v314
        %v3987 = vsub.f32 %v3687, %v315
        %v3988 = vsub.f32 %v3865, %v316
        %v3989 = vsub.f32 %v2978, %v317
        %v3990 = vsub.f32 %v3156, %v318
        %v3991 = vsub.f32 %v3334, %v319
        %v3992 = vsub.f32 %v3512, %v320
        %v3993 = vsub.f32 %v3690, %v321
        %v3994 = vsub.f32 %v3868, %v322
        %v3995 = vsub.f32 %v2980, %v323
        %v3996 = vsub.f32 %v3158, %v324
        %v3997 = vsub.f32 %v3336, %v325
        %v3998 = vsub.f32 %v3514, %v326
        %v3999 = vsub.f32 %v3692, %v327
        %v4000 = vsub.f32 %v3870, %v328
        %v4001 = vsub.f32 %v2983, %v329
        %v4002 = vsub.f32 %v3161, %v330
        %v4003 = vsub.f32 %v3339, %v331
        %v4004 = vsub.f32 %v3517, %v332
        %v4005 = vsub.f32 %v3695, %v333
        %v4006 = vsub.f32 %v3873, %v334
        %v4007 = vsub.f32 %v2985, %v335
        %v4008 = vsub.f32 %v3163, %v336
        %v4009 = vsub.f32 %v3341, %v337
        %v4010 = vsub.f32 %v3519, %v338
        %v4011 = vsub.f32 %v3697, %v339
        %v4012 = vsub.f32 %v3875, %v340
        %v4013 = vsub.f32 %v2988, %v341
        %v4014 = vsub.f32 %v3166, %v342
        %v4015 = vsub.f32 %v3344, %v343
        %v4016 = vsub.f32 %v3522, %v344
        %v4017 = vsub.f32 %v3700, %v345
        %v4018 = vsub.f32 %v3878, %v346
        %v4019 = vsub.f32 %v2990, %v347
        %v4020 = vsub.f32 %v3168, %v348
        %v4021 = vsub.f32 %v3346, %v349
        %v4022 = vsub.f32 %v3524, %v350
        %v4023 = vsub.f32 %v3702, %v351
        %v4024 = vsub.f32 %v3880, %v352
        %v4025 = vsub.f32 %v2993, %v353
        %v4026 = vsub.f32 %v3171, %v354
        %v4027 = vsub.f32 %v3349, %v355
        %v4028 = vsub.f32 %v3527, %v356
        %v4029 = vsub.f32 %v3705, %v357
        %v4030 = vsub.f32 %v3883, %v358
        %v4031 = vsub.f32 %v2995, %v359
        %v4032 = vsub.f32 %v3173, %v360
        %v4033 = vsub.f32 %v3351, %v361
        %v4034 = vsub.f32 %v3529, %v362
        %v4035 = vsub.f32 %v3707, %v363
        %v4036 = vsub.f32 %v3885, %v364
        %v4037 = vsub.f32 %v2998, %v365
        %v4038 = vsub.f32 %v3176, %v366
        %v4039 = vsub.f32 %v3354, %v367
        %v4040 = vsub.f32 %v3532, %v368
        %v4041 = vsub.f32 %v3710, %v369
        %v4042 = vsub.f32 %v3888, %v370
        %v4043 = vsub.f32 %v3000, %v371
        %v4044 = vsub.f32 %v3178, %v372
        %v4045 = vsub.f32 %v3356, %v373
        %v4046 = vsub.f32 %v3534, %v374
        %v4047 = vsub.f32 %v3712, %v375
        %v4048 = vsub.f32 %v3890, %v376
        %v4049 = vsub.f32 %v3003, %v377
        %v4050 = vsub.f32 %v3181, %v378
        %v4051 = vsub.f32 %v3359, %v379
        %v4052 = vsub.f32 %v3537, %v380
        %v4053 = vsub.f32 %v3715, %v381
        %v4054 = vsub.f32 %v3893, %v382
        %v4055 = vsub.f32 %v3005, %v383
        %v4056 = vsub.f32 %v3183, %v384
        %v4057 = vsub.f32 %v3361, %v385
        %v4058 = vsub.f32 %v3539, %v386
        %v4059 = vsub.f32 %v3717, %v387
        %v4060 = vsub.f32 %v3895, %v388
        %v4061 = vsub.f32 %v3008, %v389
        %v4062 = vsub.f32 %v3186, %v390
        %v4063 = vsub.f32 %v3364, %v391
        %v4064 = vsub.f32 %v3542, %v392
        %v4065 = vsub.f32 %v3720, %v393
        %v4066 = vsub.f32 %v3898, %v394
        %v4067 = vsub.f32 %v3010, %v395
        %v4068 = vsub.f32 %v3188, %v396
        %v4069 = vsub.f32 %v3366, %v397
        %v4070 = vsub.f32 %v3544, %v398
        %v4071 = vsub.f32 %v3722, %v399
        %v4072 = vsub.f32 %v3900, %v400
        %v4073 = vsub.f32 %v3013, %v401
        %v4074 = vsub.f32 %v3191, %v402
        %v4075 = vsub.f32 %v3369, %v403
        %v4076 = vsub.f32 %v3547, %v404
        %v4077 = vsub.f32 %v3725, %v405
        %v4078 = vsub.f32 %v3903, %v406
        %v4079 = vsub.f32 %v3015, %v407
        %v4080 = vsub.f32 %v3193, %v408
        %v4081 = vsub.f32 %v3371, %v409
        %v4082 = vsub.f32 %v3549, %v410
        %v4083 = vsub.f32 %v3727, %v411
        %v4084 = vsub.f32 %v3905, %v412
        %v4085 = vsub.f32 %v3018, %v413
        %v4086 = vsub.f32 %v3196, %v414
        %v4087 = vsub.f32 %v3374, %v415
        %v4088 = vsub.f32 %v3552, %v416
        %v4089 = vsub.f32 %v3730, %v417
        %v4090 = vsub.f32 %v3908, %v418
        %v4091 = vsub.f32 %v3020, %v419
        %v4092 = vsub.f32 %v3198, %v420
        %v4093 = vsub.f32 %v3376, %v421
        %v4094 = vsub.f32 %v3554, %v422
        %v4095 = vsub.f32 %v3732, %v423
        %v4096 = vsub.f32 %v3910, %v424
        %v4097 = vsub.f32 %v3023, %v425
        %v4098 = vsub.f32 %v3201, %v426
        %v4099 = vsub.f32 %v3379, %v427
        %v4100 = vsub.f32 %v3557, %v428
        %v4101 = vsub.f32 %v3735, %v429
        %v4102 = vsub.f32 %v3913, %v430
        %v4103 = vsub.f32 %v3025, %v431
        %v4104 = vsub.f32 %v3203, %v432
        %v4105 = vsub.f32 %v3381, %v433
        %v4106 = vsub.f32 %v3559, %v434
        %v4107 = vsub.f32 %v3737, %v435
        %v4108 = vsub.f32 %v3915, %v436
        %4109 = vst [vmem:[%s232] sm:$0xff] %v3917
        %4110 = vst [vmem:[%s232 + $0x8] sm:$0xff] %v3918
        %4111 = vst [vmem:[%s232 + $0x10] sm:$0xff] %v3919
        %4112 = vst [vmem:[%s232 + $0x18] sm:$0xff] %v3920
        %4113 = vst [vmem:[%s232 + $0x20] sm:$0xff] %v3921
        %4114 = vst [vmem:[%s232 + $0x28] sm:$0xff] %v3922
        %4115 = vst [vmem:[%s232 + $0x30] sm:$0xff] %v3923
        %4116 = vst [vmem:[%s232 + $0x38] sm:$0xff] %v3924
        %4117 = vst [vmem:[%s232 + $0x40] sm:$0xff] %v3925
        %4118 = vst [vmem:[%s232 + $0x48] sm:$0xff] %v3926
        %4119 = vst [vmem:[%s232 + $0x50] sm:$0xff] %v3927
        %4120 = vst [vmem:[%s232 + $0x58] sm:$0xff] %v3928
        %4121 = vst [vmem:[%s232 + $0x60] sm:$0xff] %v3929
        %4122 = vst [vmem:[%s232 + $0x68] sm:$0xff] %v3930
        %4123 = vst [vmem:[%s232 + $0x70] sm:$0xff] %v3931
        %4124 = vst [vmem:[%s232 + $0x78] sm:$0xff] %v3932
        %4125 = vst [vmem:[%s232 + $0x80] sm:$0xff] %v3933
        %4126 = vst [vmem:[%s232 + $0x88] sm:$0xff] %v3934
        %4127 = vst [vmem:[%s232 + $0x90] sm:$0xff] %v3935
        %4128 = vst [vmem:[%s232 + $0x98] sm:$0xff] %v3936
        %4129 = vst [vmem:[%s232 + $0xa0] sm:$0xff] %v3937
        %4130 = vst [vmem:[%s232 + $0xa8] sm:$0xff] %v3938
        %4131 = vst [vmem:[%s232 + $0xb0] sm:$0xff] %v3939
        %4132 = vst [vmem:[%s232 + $0xb8] sm:$0xff] %v3940
        %4133 = vst [vmem:[%s232 + $0xc0] sm:$0xff] %v3941
        %4134 = vst [vmem:[%s232 + $0xc8] sm:$0xff] %v3942
        %4135 = vst [vmem:[%s232 + $0xd0] sm:$0xff] %v3943
        %4136 = vst [vmem:[%s232 + $0xd8] sm:$0xff] %v3944
        %4137 = vst [vmem:[%s232 + $0xe0] sm:$0xff] %v3945
        %4138 = vst [vmem:[%s232 + $0xe8] sm:$0xff] %v3946
        %4139 = vst [vmem:[%s232 + $0xf0] sm:$0xff] %v3947
        %4140 = vst [vmem:[%s232 + $0xf8] sm:$0xff] %v3948
        %4141 = vst [vmem:[%s232 + $0x100] sm:$0xff] %v3949
        %4142 = vst [vmem:[%s232 + $0x108] sm:$0xff] %v3950
        %4143 = vst [vmem:[%s232 + $0x110] sm:$0xff] %v3951
        %4144 = vst [vmem:[%s232 + $0x118] sm:$0xff] %v3952
        %4145 = vst [vmem:[%s232 + $0x120] sm:$0xff] %v3953
        %4146 = vst [vmem:[%s232 + $0x128] sm:$0xff] %v3954
        %4147 = vst [vmem:[%s232 + $0x130] sm:$0xff] %v3955
        %4148 = vst [vmem:[%s232 + $0x138] sm:$0xff] %v3956
        %4149 = vst [vmem:[%s232 + $0x140] sm:$0xff] %v3957
        %4150 = vst [vmem:[%s232 + $0x148] sm:$0xff] %v3958
        %4151 = vst [vmem:[%s232 + $0x150] sm:$0xff] %v3959
        %4152 = vst [vmem:[%s232 + $0x158] sm:$0xff] %v3960
        %4153 = vst [vmem:[%s232 + $0x160] sm:$0xff] %v3961
        %4154 = vst [vmem:[%s232 + $0x168] sm:$0xff] %v3962
        %4155 = vst [vmem:[%s232 + $0x170] sm:$0xff] %v3963
        %4156 = vst [vmem:[%s232 + $0x178] sm:$0xff] %v3964
        %4157 = vst [vmem:[%s232 + $0x180] sm:$0xff] %v3965
        %4158 = vst [vmem:[%s232 + $0x188] sm:$0xff] %v3966
        %4159 = vst [vmem:[%s232 + $0x190] sm:$0xff] %v3967
        %4160 = vst [vmem:[%s232 + $0x198] sm:$0xff] %v3968
        %4161 = vst [vmem:[%s232 + $0x1a0] sm:$0xff] %v3969
        %4162 = vst [vmem:[%s232 + $0x1a8] sm:$0xff] %v3970
        %4163 = vst [vmem:[%s232 + $0x1b0] sm:$0xff] %v3971
        %4164 = vst [vmem:[%s232 + $0x1b8] sm:$0xff] %v3972
        %4165 = vst [vmem:[%s232 + $0x1c0] sm:$0xff] %v3973
        %4166 = vst [vmem:[%s232 + $0x1c8] sm:$0xff] %v3974
        %4167 = vst [vmem:[%s232 + $0x1d0] sm:$0xff] %v3975
        %4168 = vst [vmem:[%s232 + $0x1d8] sm:$0xff] %v3976
        %4169 = vst [vmem:[%s232 + $0x1e0] sm:$0xff] %v3977
        %4170 = vst [vmem:[%s232 + $0x1e8] sm:$0xff] %v3978
        %4171 = vst [vmem:[%s232 + $0x1f0] sm:$0xff] %v3979
        %4172 = vst [vmem:[%s232 + $0x1f8] sm:$0xff] %v3980
        %4173 = vst [vmem:[%s232 + $0x200] sm:$0xff] %v3981
        %4174 = vst [vmem:[%s232 + $0x208] sm:$0xff] %v3982
        %4175 = vst [vmem:[%s232 + $0x210] sm:$0xff] %v3983
        %4176 = vst [vmem:[%s232 + $0x218] sm:$0xff] %v3984
        %4177 = vst [vmem:[%s232 + $0x220] sm:$0xff] %v3985
        %4178 = vst [vmem:[%s232 + $0x228] sm:$0xff] %v3986
        %4179 = vst [vmem:[%s232 + $0x230] sm:$0xff] %v3987
        %4180 = vst [vmem:[%s232 + $0x238] sm:$0xff] %v3988
        %4181 = vst [vmem:[%s232 + $0x240] sm:$0xff] %v3989
        %4182 = vst [vmem:[%s232 + $0x248] sm:$0xff] %v3990
        %4183 = vst [vmem:[%s232 + $0x250] sm:$0xff] %v3991
        %4184 = vst [vmem:[%s232 + $0x258] sm:$0xff] %v3992
        %4185 = vst [vmem:[%s232 + $0x260] sm:$0xff] %v3993
        %4186 = vst [vmem:[%s232 + $0x268] sm:$0xff] %v3994
        %4187 = vst [vmem:[%s232 + $0x270] sm:$0xff] %v3995
        %4188 = vst [vmem:[%s232 + $0x278] sm:$0xff] %v3996
        %4189 = vst [vmem:[%s232 + $0x280] sm:$0xff] %v3997
        %4190 = vst [vmem:[%s232 + $0x288] sm:$0xff] %v3998
        %4191 = vst [vmem:[%s232 + $0x290] sm:$0xff] %v3999
        %4192 = vst [vmem:[%s232 + $0x298] sm:$0xff] %v4000
        %4193 = vst [vmem:[%s232 + $0x2a0] sm:$0xff] %v4001
        %4194 = vst [vmem:[%s232 + $0x2a8] sm:$0xff] %v4002
        %4195 = vst [vmem:[%s232 + $0x2b0] sm:$0xff] %v4003
        %4196 = vst [vmem:[%s232 + $0x2b8] sm:$0xff] %v4004
        %4197 = vst [vmem:[%s232 + $0x2c0] sm:$0xff] %v4005
        %4198 = vst [vmem:[%s232 + $0x2c8] sm:$0xff] %v4006
        %4199 = vst [vmem:[%s232 + $0x2d0] sm:$0xff] %v4007
        %4200 = vst [vmem:[%s232 + $0x2d8] sm:$0xff] %v4008
        %4201 = vst [vmem:[%s232 + $0x2e0] sm:$0xff] %v4009
        %4202 = vst [vmem:[%s232 + $0x2e8] sm:$0xff] %v4010
        %4203 = vst [vmem:[%s232 + $0x2f0] sm:$0xff] %v4011
        %4204 = vst [vmem:[%s232 + $0x2f8] sm:$0xff] %v4012
        %4205 = vst [vmem:[%s232 + $0x300] sm:$0xff] %v4013
        %4206 = vst [vmem:[%s232 + $0x308] sm:$0xff] %v4014
        %4207 = vst [vmem:[%s232 + $0x310] sm:$0xff] %v4015
        %4208 = vst [vmem:[%s232 + $0x318] sm:$0xff] %v4016
        %4209 = vst [vmem:[%s232 + $0x320] sm:$0xff] %v4017
        %4210 = vst [vmem:[%s232 + $0x328] sm:$0xff] %v4018
        %4211 = vst [vmem:[%s232 + $0x330] sm:$0xff] %v4019
        %4212 = vst [vmem:[%s232 + $0x338] sm:$0xff] %v4020
        %4213 = vst [vmem:[%s232 + $0x340] sm:$0xff] %v4021
        %4214 = vst [vmem:[%s232 + $0x348] sm:$0xff] %v4022
        %4215 = vst [vmem:[%s232 + $0x350] sm:$0xff] %v4023
        %4216 = vst [vmem:[%s232 + $0x358] sm:$0xff] %v4024
        %4217 = vst [vmem:[%s232 + $0x360] sm:$0xff] %v4025
        %4218 = vst [vmem:[%s232 + $0x368] sm:$0xff] %v4026
        %4219 = vst [vmem:[%s232 + $0x370] sm:$0xff] %v4027
        %4220 = vst [vmem:[%s232 + $0x378] sm:$0xff] %v4028
        %4221 = vst [vmem:[%s232 + $0x380] sm:$0xff] %v4029
        %4222 = vst [vmem:[%s232 + $0x388] sm:$0xff] %v4030
        %4223 = vst [vmem:[%s232 + $0x390] sm:$0xff] %v4031
        %4224 = vst [vmem:[%s232 + $0x398] sm:$0xff] %v4032
        %4225 = vst [vmem:[%s232 + $0x3a0] sm:$0xff] %v4033
        %4226 = vst [vmem:[%s232 + $0x3a8] sm:$0xff] %v4034
        %4227 = vst [vmem:[%s232 + $0x3b0] sm:$0xff] %v4035
        %4228 = vst [vmem:[%s232 + $0x3b8] sm:$0xff] %v4036
        %4229 = vst [vmem:[%s232 + $0x3c0] sm:$0xff] %v4037
        %4230 = vst [vmem:[%s232 + $0x3c8] sm:$0xff] %v4038
        %4231 = vst [vmem:[%s232 + $0x3d0] sm:$0xff] %v4039
        %4232 = vst [vmem:[%s232 + $0x3d8] sm:$0xff] %v4040
        %4233 = vst [vmem:[%s232 + $0x3e0] sm:$0xff] %v4041
        %4234 = vst [vmem:[%s232 + $0x3e8] sm:$0xff] %v4042
        %4235 = vst [vmem:[%s232 + $0x3f0] sm:$0xff] %v4043
        %4236 = vst [vmem:[%s232 + $0x3f8] sm:$0xff] %v4044
        %4237 = vst [vmem:[%s232 + $0x400] sm:$0xff] %v4045
        %4238 = vst [vmem:[%s232 + $0x408] sm:$0xff] %v4046
        %4239 = vst [vmem:[%s232 + $0x410] sm:$0xff] %v4047
        %4240 = vst [vmem:[%s232 + $0x418] sm:$0xff] %v4048
        %4241 = vst [vmem:[%s232 + $0x420] sm:$0xff] %v4049
        %4242 = vst [vmem:[%s232 + $0x428] sm:$0xff] %v4050
        %4243 = vst [vmem:[%s232 + $0x430] sm:$0xff] %v4051
        %4244 = vst [vmem:[%s232 + $0x438] sm:$0xff] %v4052
        %4245 = vst [vmem:[%s232 + $0x440] sm:$0xff] %v4053
        %4246 = vst [vmem:[%s232 + $0x448] sm:$0xff] %v4054
        %4247 = vst [vmem:[%s232 + $0x450] sm:$0xff] %v4055
        %4248 = vst [vmem:[%s232 + $0x458] sm:$0xff] %v4056
        %4249 = vst [vmem:[%s232 + $0x460] sm:$0xff] %v4057
        %4250 = vst [vmem:[%s232 + $0x468] sm:$0xff] %v4058
        %4251 = vst [vmem:[%s232 + $0x470] sm:$0xff] %v4059
        %4252 = vst [vmem:[%s232 + $0x478] sm:$0xff] %v4060
        %4253 = vst [vmem:[%s232 + $0x480] sm:$0xff] %v4061
        %4254 = vst [vmem:[%s232 + $0x488] sm:$0xff] %v4062
        %4255 = vst [vmem:[%s232 + $0x490] sm:$0xff] %v4063
        %4256 = vst [vmem:[%s232 + $0x498] sm:$0xff] %v4064
        %4257 = vst [vmem:[%s232 + $0x4a0] sm:$0xff] %v4065
        %4258 = vst [vmem:[%s232 + $0x4a8] sm:$0xff] %v4066
        %4259 = vst [vmem:[%s232 + $0x4b0] sm:$0xff] %v4067
        %4260 = vst [vmem:[%s232 + $0x4b8] sm:$0xff] %v4068
        %4261 = vst [vmem:[%s232 + $0x4c0] sm:$0xff] %v4069
        %4262 = vst [vmem:[%s232 + $0x4c8] sm:$0xff] %v4070
        %4263 = vst [vmem:[%s232 + $0x4d0] sm:$0xff] %v4071
        %4264 = vst [vmem:[%s232 + $0x4d8] sm:$0xff] %v4072
        %4265 = vst [vmem:[%s232 + $0x4e0] sm:$0xff] %v4073
        %4266 = vst [vmem:[%s232 + $0x4e8] sm:$0xff] %v4074
        %4267 = vst [vmem:[%s232 + $0x4f0] sm:$0xff] %v4075
        %4268 = vst [vmem:[%s232 + $0x4f8] sm:$0xff] %v4076
        %4269 = vst [vmem:[%s232 + $0x500] sm:$0xff] %v4077
        %4270 = vst [vmem:[%s232 + $0x508] sm:$0xff] %v4078
        %4271 = vst [vmem:[%s232 + $0x510] sm:$0xff] %v4079
        %4272 = vst [vmem:[%s232 + $0x518] sm:$0xff] %v4080
        %4273 = vst [vmem:[%s232 + $0x520] sm:$0xff] %v4081
        %4274 = vst [vmem:[%s232 + $0x528] sm:$0xff] %v4082
        %4275 = vst [vmem:[%s232 + $0x530] sm:$0xff] %v4083
        %4276 = vst [vmem:[%s232 + $0x538] sm:$0xff] %v4084
        %4277 = vst [vmem:[%s232 + $0x540] sm:$0xff] %v4085
        %4278 = vst [vmem:[%s232 + $0x548] sm:$0xff] %v4086
        %4279 = vst [vmem:[%s232 + $0x550] sm:$0xff] %v4087
        %4280 = vst [vmem:[%s232 + $0x558] sm:$0xff] %v4088
        %4281 = vst [vmem:[%s232 + $0x560] sm:$0xff] %v4089
        %4282 = vst [vmem:[%s232 + $0x568] sm:$0xff] %v4090
        %4283 = vst [vmem:[%s232 + $0x570] sm:$0xff] %v4091
        %4284 = vst [vmem:[%s232 + $0x578] sm:$0xff] %v4092
        %4285 = vst [vmem:[%s232 + $0x580] sm:$0xff] %v4093
        %4286 = vst [vmem:[%s232 + $0x588] sm:$0xff] %v4094
        %4287 = vst [vmem:[%s232 + $0x590] sm:$0xff] %v4095
        %4288 = vst [vmem:[%s232 + $0x598] sm:$0xff] %v4096
        %4289 = vst [vmem:[%s232 + $0x5a0] sm:$0xff] %v4097
        %4290 = vst [vmem:[%s232 + $0x5a8] sm:$0xff] %v4098
        %4291 = vst [vmem:[%s232 + $0x5b0] sm:$0xff] %v4099
        %4292 = vst [vmem:[%s232 + $0x5b8] sm:$0xff] %v4100
        %4293 = vst [vmem:[%s232 + $0x5c0] sm:$0xff] %v4101
        %4294 = vst [vmem:[%s232 + $0x5c8] sm:$0xff] %v4102
        %4295 = vst [vmem:[%s232 + $0x5d0] sm:$0xff] %v4103
        %4296 = vst [vmem:[%s232 + $0x5d8] sm:$0xff] %v4104
        %4297 = vst [vmem:[%s232 + $0x5e0] sm:$0xff] %v4105
        %4298 = vst [vmem:[%s232 + $0x5e8] sm:$0xff] %v4106
        %4299 = vst [vmem:[%s232 + $0x5f0] sm:$0xff] %v4107
        %4300 = vst [vmem:[%s232 + $0x5f8] sm:$0xff] %v4108
        %s4301 = sand.u32 %s97, 1
        %s4302 = scalar_lea.sflag [#allocation4], %s4301
        %s4303 = sand.u32 %s97, 1
        %s4304 = smul.addr %s4303, 1536
        %s4305 = scalar_lea.vmem [#allocation8], %s4304
        // Predicated region
        $region45: #{tpu_custom_call.1} parent=31 // pred_check
          %p4306 = pneg %p107
        $region46: #{tpu_custom_call.1} parent=31 // pred_check_branch
          %4308 = sbr.rel (%p4306) target = $region48
        $region47: #{tpu_custom_call.1} parent=31 // pred_region
          %s4309 = smul.u32 32, %s21
          %s4310 = ssub.s32 49, %s4309
          %p4311 = scmp.lt.s32.totalorder %s4310, 32
          %s4312 = scalar_select %p4311, %s4310, 32
          %s4313 = smul.u32 8, %s4312
          %s4314 = smul.u32 %s4313, 6
          %s4315 = ssub.s32 1536, %s4314
          %s4316 = sshll.u32 %s4315, 4
          %4317 = vsyncadd %s4302, %s4316
          %p4318 = scmp.ne.s32.totalorder 0, %s4314
          %s4319 = smul.addr %s4309, 6
          %s4320 = smul.addr %s4319, 8
          %s4321 = scalar_lea.hbm %s3, %s4320
          %s4322 = smul.u32 48, %s4312
          %s4323 = sshll.u32 %s4305, 4
          %s4324 = int_to_ptr.vmem [resolvable:$true] %s4323
          %s4325 = sshll.u32 %s4321, 4
          %s4326 = int_to_ptr.hbm [resolvable:$true] %s4325
          %s4327 = sshll.u32 %s4322, 4
          %4331 = dma.vmem_to_hbm [thread:$0]  (%p4318), %s4324, %s4327, %s4326, %s4302, 768, 768, 48
        $region48: #{tpu_custom_call.1} parent=31 // pred_fallthru
          _
      $region32: #{tpu_custom_call.1} parent=5 // pred_fallthru
        _
      %p4332 = scmp.le.s32.totalorder 2, %s16
      // Predicated region
      $region49: #{tpu_custom_call.1} parent=5 // pred_check
        %p4333 = pneg %p4332
      $region50: #{tpu_custom_call.1} parent=5 // pred_check_branch
        %4335 = sbr.rel (%p4333) target = $region52
      $region51: #{tpu_custom_call.1} parent=5 // pred_region
        %s4336 = ssub.s32 %s16, 2
        // Predicated region
        $region53: #{tpu_custom_call.1} parent=51 // pred_check
          %p4337 = pneg %p113
        $region54: #{tpu_custom_call.1} parent=51 // pred_check_branch
          %4339 = sbr.rel (%p4337) target = $region56
        $region55: #{tpu_custom_call.1} parent=51 // pred_region
          %s4340 = sand.u32 %s98, 1
          %s4341 = scalar_lea.sflag [#allocation4], %s4340
          %s4342 = sand.u32 %s98, 1
          %s4343 = smul.addr %s4342, 1536
          %s4344 = scalar_lea.vmem [#allocation8], %s4343
          %4346 = dma.done %s4341, 24576
        $region56: #{tpu_custom_call.1} parent=51 // pred_fallthru
          _
      $region52: #{tpu_custom_call.1} parent=5 // pred_fallthru
        _
    $region6: #{tpu_custom_call.1} parent=1 // loop_footer
      %s20 = sadd.s32 1, %s16
    $region7: #{tpu_custom_call.1} parent=1 // loop_footer_branch
      %15 = sbr.rel target = $region3
    $region8: #{tpu_custom_call.1} parent=1 // loop_exit
      _
    %4347 = vsyncpa [#allocation3], 1
    %s4348 = scalar_lea.sflag [#allocation3], 1
    %4349 = vsyncpa %s4348, 1
    %4350 = vsyncpa [#allocation6], 1
    %4351 = vsyncpa [#allocation4], 1
    %s4352 = scalar_lea.sflag [#allocation4], 1
    %4353 = vsyncpa %s4352, 1

</llo_original>
